<compile_context>
chip_gen: v5e
topology: v5e:2x2
jax: 0.10.0
libtpu: 0.0.40
codegen_flags: <defaults>
</compile_context>

<pallas_src>
import jax
import jax.numpy as jnp
from jax.experimental import pallas as pl
from jax.experimental.pallas import tpu as pltpu

_BN_EPS = 1e-5


# ----------------------------------------------------------------------------
# Parameter init (matches the PyTorch module structure: per branch per layer
# W (in,out), bias (1,out), BN scale (1,out), BN shift (1,out)).
# ----------------------------------------------------------------------------
def init_params(key, in_features, unit_lists):
    params = []
    layer_counts = []
    for ul in unit_lists:
        dims = (in_features,) + tuple(ul)
        layer_counts.append(len(dims) - 1)
        for li in range(len(dims) - 1):
            key, k1, k2 = jax.random.split(key, 3)
            fan_in, fan_out = dims[li], dims[li + 1]
            w = jax.random.normal(k1, (fan_in, fan_out), jnp.float32) / jnp.sqrt(
                jnp.float32(fan_in))
            b = jax.random.normal(k2, (1, fan_out), jnp.float32) * 0.1
            gamma = jnp.ones((1, fan_out), jnp.float32)
            beta = jnp.zeros((1, fan_out), jnp.float32)
            mean = jnp.zeros((1, fan_out), jnp.float32)
            var = jnp.ones((1, fan_out), jnp.float32)
            scale = gamma / jnp.sqrt(var + _BN_EPS)
            shift = beta - mean * scale
            params += [w, b, scale, shift]
    return params, tuple(layer_counts)


# ----------------------------------------------------------------------------
# Fold BN/bias/reg into the weights, fuse branches depth-wise (concat first
# layer, block-diagonal deeper layers), build kron expanders, and pack every
# constant into two arrays (wpack, bpack) with static slice metadata.
# ----------------------------------------------------------------------------
def _fold_and_pack(params, layer_counts, unit_lists, reg):
    fold_reg = reg > 0.0
    folded = []
    idx = 0
    for nl in layer_counts:
        layers = []
        for _ in range(nl):
            w, b, sc, sh = params[idx:idx + 4]
            idx += 4
            layers.append([w * sc, b * sc + sh])        # fold eval-mode BN
        if fold_reg:                                    # fold reg into last layer
            layers[-1][0] = layers[-1][0] * reg
            layers[-1][1] = layers[-1][1] * reg
        folded.append(layers)

    max_l = max(layer_counts)
    out_widths = tuple(int(ul[-1]) for ul in unit_lists)

    fused_ws = [jnp.concatenate([br[0][0] for br in folded], axis=1)]
    fused_bs = [jnp.concatenate([br[0][1] for br in folded], axis=1)]
    cur_widths = [int(br[0][0].shape[1]) for br in folded]

    for d in range(1, max_l):
        blocks, biases, new_widths = [], [], []
        for bi, br in enumerate(folded):
            if d < layer_counts[bi]:
                wf, bf = br[d]
                blocks.append(wf)
                biases.append(bf)
                new_widths.append(int(wf.shape[1]))
            else:  # branch already finished -> identity pass-through block
                wdt = cur_widths[bi]
                blocks.append(jnp.eye(wdt, dtype=jnp.float32))
                biases.append(jnp.zeros((1, wdt), jnp.float32))
                new_widths.append(wdt)
        tin, tout = sum(cur_widths), sum(new_widths)
        m = jnp.zeros((tin, tout), jnp.float32)
        ro = co = 0
        for blk in blocks:
            m = m.at[ro:ro + blk.shape[0], co:co + blk.shape[1]].set(blk)
            ro += blk.shape[0]
            co += blk.shape[1]
        fused_ws.append(m)
        fused_bs.append(jnp.concatenate(biases, axis=1))
        cur_widths = new_widths

    # Lane offsets of each branch's final output inside the fused h.
    branch_offsets = []
    off = 0
    for w in cur_widths:
        branch_offsets.append(off)
        off += w

    # Constant repeat/tile expanders for the row-wise Kronecker chain.
    expanders = []
    c = out_widths[0]
    for o in out_widths[1:]:
        mcols = c * o
        cols = jnp.arange(mcols, dtype=jnp.int32)
        rep = (cols[None, :] // o ==
               jnp.arange(c, dtype=jnp.int32)[:, None]).astype(jnp.float32)
        til = (cols[None, :] % o ==
               jnp.arange(o, dtype=jnp.int32)[:, None]).astype(jnp.float32)
        expanders += [rep, til]
        c = mcols

    # Pack all weight-like matrices (fused layers + expanders) row-wise with
    # 8-aligned row offsets and zero-padded columns -> one VMEM operand.
    mats = fused_ws + expanders
    max_cols = max(int(m.shape[1]) for m in mats)
    meta, rows, r = [], [], 0
    for m in mats:
        nr, nc = int(m.shape[0]), int(m.shape[1])
        meta.append((r, nr, nc))
        pad_r = (-nr) % 8
        rows.append(jnp.pad(m, ((0, pad_r), (0, max_cols - nc))))
        r += nr + pad_r
    wpack = jnp.concatenate(rows, axis=0)

    # Pack all biases: one row per fused depth.
    b_widths = tuple(int(b.shape[1]) for b in fused_bs)
    bpack = jnp.concatenate(
        [jnp.pad(b, ((0, 0), (0, max_cols - int(b.shape[1])))) for b in fused_bs],
        axis=0)

    meta_dict = dict(
        w_meta=tuple(meta[:max_l]),
        exp_meta=tuple(meta[max_l:]),
        b_widths=b_widths,
        branch_offsets=tuple(branch_offsets),
        branch_widths=tuple(cur_widths),
        max_l=max_l,
        reg_folded=fold_reg,
    )
    return wpack, bpack, meta_dict


# ----------------------------------------------------------------------------
# Kernel
# ----------------------------------------------------------------------------
def _make_kernel(meta, reg):
    w_meta = meta["w_meta"]
    exp_meta = meta["exp_meta"]
    b_widths = meta["b_widths"]
    br_off = meta["branch_offsets"]
    br_w = meta["branch_widths"]
    max_l = meta["max_l"]
    reg_folded = meta["reg_folded"]

    def kernel(x_ref, wpack_ref, bpack_ref, out_ref):
        n, tb, f = x_ref.shape
        # Set-major flatten: row s*tb + t  ->  (set element s, batch t).
        x2 = x_ref[...].reshape(n * tb, f)

        # Fused MLP stack: concat first layer, block-diagonal deeper layers.
        h = x2
        for d in range(max_l):
            r0, nr, nc = w_meta[d]
            wd = wpack_ref[r0:r0 + nr, 0:nc]
            bd = bpack_ref[d:d + 1, 0:b_widths[d]]
            src = h if d == 0 else jnp.maximum(h, 0.0)
            h = jnp.dot(src, wd, preferred_element_type=jnp.float32) + bd

        # Branch activation ('relu'); reg already folded into the last layer
        # weights when reg > 0, otherwise applied here.
        h = jnp.maximum(h, 0.0)
        if not reg_folded:
            h = h * reg

        # Row-wise Kronecker product across branches via constant expander
        # matmuls:  res_new[r, c*O+o] = res[r, c] * a[r, o].
        res = h[:, br_off[0]:br_off[0] + br_w[0]]
        for k in range(len(br_w) - 1):
            a = h[:, br_off[k + 1]:br_off[k + 1] + br_w[k + 1]]
            r0, nr, nc = exp_meta[2 * k]
            rep = wpack_ref[r0:r0 + nr, 0:nc]
            r0, nr, nc = exp_meta[2 * k + 1]
            til = wpack_ref[r0:r0 + nr, 0:nc]
            res = (jnp.dot(res, rep, preferred_element_type=jnp.float32) *
                   jnp.dot(a, til, preferred_element_type=jnp.float32))

        # Sum over the set dim N: N-1 sublane-aligned VPU adds (set-major
        # rows), no MXU contraction, output already (TB, OUT) batch-major.
        acc = res[0:tb, :]
        for s in range(1, n):
            acc = acc + res[s * tb:(s + 1) * tb, :]
        out_ref[...] = acc

    return kernel


# ----------------------------------------------------------------------------
# Wrapper
# ----------------------------------------------------------------------------
def aggregation_block_n(x, params, layer_counts, unit_lists, reg=1.0,
                        batch_tile=128):
    """Pallas implementation of AggregationBlockN.forward.  x: (B, N, F)."""
    B, N, F = x.shape
    out_widths = tuple(int(ul[-1]) for ul in unit_lists)
    out_features = 1
    for o in out_widths:
        out_features *= o

    wpack, bpack, meta = _fold_and_pack(params, layer_counts, unit_lists,
                                        float(reg))

    # TB batches per grid step (multiple of 8 for sublane alignment).
    # Default 128 keeps the grid a multiple of 2 for v7x megacore at B=256;
    # raise batch_tile freely on single-core v5e/v6e (constants are tiny).
    TB = max(8, (min(B, batch_tile) // 8) * 8)
    B_pad = -(-B // TB) * TB

    # Set-major layout (N, B_pad, F): the set dim becomes the leading block
    # dim so the in-kernel set reduction is aligned slab adds.
    xt = jnp.transpose(x, (1, 0, 2))
    if B_pad != B:
        xt = jnp.pad(xt, ((0, 0), (0, B_pad - B), (0, 0)))

    kernel = _make_kernel(meta, float(reg))

    out = pl.pallas_call(
        kernel,
        out_shape=jax.ShapeDtypeStruct((B_pad, out_features), jnp.float32),
        grid=(B_pad // TB,),
        in_specs=[
            pl.BlockSpec((N, TB, F), lambda g: (0, g, 0)),
            pl.BlockSpec(wpack.shape, lambda g: (0, 0)),
            pl.BlockSpec(bpack.shape, lambda g: (0, 0)),
        ],
        out_specs=pl.BlockSpec((TB, out_features), lambda g: (g, 0)),
        compiler_params=pltpu.CompilerParams(
            dimension_semantics=("parallel",)),
    )(xt, wpack, bpack)

    # Padded batch rows produce nonzero garbage (bias + ReLU); slice them off.
    return out[:B]


# ----------------------------------------------------------------------------
# Plain-JAX reference mirroring the PyTorch forward (BN in eval mode).
# ----------------------------------------------------------------------------
def reference(x, params, layer_counts, unit_lists, reg):
    B, N, F = x.shape
    idx = 0
    branch_outs = []
    for nl in layer_counts:
        h = x.reshape(B * N, F)
        for li in range(nl):
            w, b, sc, sh = params[idx:idx + 4]
            idx += 4
            h = h @ w + b
            h = h * sc + sh
            if li < nl - 1:
                h = jnp.maximum(h, 0.0)
        branch_outs.append(jnp.maximum(h, 0.0) * reg)
    res = branch_outs[0][:, :, None]
    for a in branch_outs[1:]:
        res = (res * a[:, None, :]).reshape(B * N, -1, 1)
    return res.reshape(B, N, -1).sum(axis=1)


if __name__ == "__main__":
    # Shapes consistent with the module: x is (B, N, in_features).
    B, N, F = 256, 8, 16
    unit_lists = ((32, 8), (32, 4))     # -> out_features = 8 * 4 = 32
    reg = 0.5

    key = jax.random.PRNGKey(0)
    kx, kp = jax.random.split(key)
    x = jax.random.normal(kx, (B, N, F), jnp.float32)
    params, layer_counts = init_params(kp, F, unit_lists)

    out = aggregation_block_n(x, params, layer_counts, unit_lists, reg)
    out = jax.block_until_ready(out)

    ref = reference(x, params, layer_counts, unit_lists, reg)
    assert out.shape == (B, 8 * 4), out.shape
    assert jnp.allclose(out, ref, atol=1e-4, rtol=1e-3), float(
        jnp.max(jnp.abs(out - ref)))
    print("KERNEL_OK")
</pallas_src>

<mosaic_0001>
module attributes {stable_mosaic.version = 11 : i64} {
  func.func @kernel(%arg0: i32, %arg1: memref<8x128x16xf32, #tpu.memory_space<vmem>>, %arg2: memref<96x64xf32, #tpu.memory_space<vmem>>, %arg3: memref<2x64xf32, #tpu.memory_space<vmem>>, %arg4: memref<128x32xf32, #tpu.memory_space<vmem>>) attributes {dimension_semantics = [#tpu.dimension_semantics<parallel>], iteration_bounds = array<i64: 2>, scalar_prefetch = 0 : i64, scratch_operands = 0 : i64, tpu.core_type = #tpu.core_type<tc>, window_params = [{transform_indices = @transform_0, window_bounds = array<i64: 8, 128, 16>}, {pipeline_mode = #tpu.pipeline_mode<synchronous>, transform_indices = @transform_1, window_bounds = array<i64: 96, 64>}, {pipeline_mode = #tpu.pipeline_mode<synchronous>, transform_indices = @transform_2, window_bounds = array<i64: 2, 64>}, {transform_indices = @transform_3, window_bounds = array<i64: 128, 32>}]} {
    %c0 = arith.constant 0 : index
    %c0_0 = arith.constant 0 : index
    %c0_1 = arith.constant 0 : index
    %0 = vector.load %arg1[%c0, %c0_0, %c0_1] : memref<8x128x16xf32, #tpu.memory_space<vmem>>, vector<8x128x16xf32>
    %1 = vector.shape_cast %0 : vector<8x128x16xf32> to vector<1024x16xf32>
    %c0_2 = arith.constant 0 : index
    %c0_3 = arith.constant 0 : index
    %2 = vector.load %arg2[%c0_2, %c0_3] : memref<96x64xf32, #tpu.memory_space<vmem>>, vector<16x64xf32>
    %c0_4 = arith.constant 0 : index
    %c0_5 = arith.constant 0 : index
    %3 = vector.load %arg3[%c0_4, %c0_5] : memref<2x64xf32, #tpu.memory_space<vmem>>, vector<1x64xf32>
    %cst = arith.constant dense<0.000000e+00> : vector<1024x64xf32>
    %4 = tpu.matmul %1, %2, %cst {dimension_numbers = #tpu.dot_dimension_numbers<[1], [0], [0], [1], [0, 0, 1, 1], [], []>} : vector<1024x16xf32>, vector<16x64xf32>, vector<1024x64xf32> -> vector<1024x64xf32>
    %5 = vector.broadcast %3 : vector<1x64xf32> to vector<1024x64xf32>
    %6 = arith.addf %4, %5 : vector<1024x64xf32>
    %c16 = arith.constant 16 : index
    %c0_6 = arith.constant 0 : index
    %7 = vector.load %arg2[%c16, %c0_6] : memref<96x64xf32, #tpu.memory_space<vmem>>, vector<64x12xf32>
    %c1 = arith.constant 1 : index
    %c0_7 = arith.constant 0 : index
    %8 = vector.load %arg3[%c1, %c0_7] : memref<2x64xf32, #tpu.memory_space<vmem>>, vector<1x12xf32>
    %cst_8 = arith.constant 0.000000e+00 : f32
    %9 = vector.broadcast %cst_8 : f32 to vector<1024x64xf32>
    %10 = arith.maximumf %6, %9 : vector<1024x64xf32>
    %cst_9 = arith.constant dense<0.000000e+00> : vector<1024x12xf32>
    %11 = tpu.matmul %10, %7, %cst_9 {dimension_numbers = #tpu.dot_dimension_numbers<[1], [0], [0], [1], [0, 0, 1, 1], [], []>} : vector<1024x64xf32>, vector<64x12xf32>, vector<1024x12xf32> -> vector<1024x12xf32>
    %12 = vector.broadcast %8 : vector<1x12xf32> to vector<1024x12xf32>
    %13 = arith.addf %11, %12 : vector<1024x12xf32>
    %cst_10 = arith.constant 0.000000e+00 : f32
    %14 = vector.broadcast %cst_10 : f32 to vector<1024x12xf32>
    %15 = arith.maximumf %13, %14 : vector<1024x12xf32>
    %16 = vector.extract_strided_slice %15 {offsets = [0, 0], sizes = [1024, 8], strides = [1, 1]} : vector<1024x12xf32> to vector<1024x8xf32>
    %17 = vector.extract_strided_slice %15 {offsets = [0, 8], sizes = [1024, 4], strides = [1, 1]} : vector<1024x12xf32> to vector<1024x4xf32>
    %c80 = arith.constant 80 : index
    %c0_11 = arith.constant 0 : index
    %18 = vector.load %arg2[%c80, %c0_11] : memref<96x64xf32, #tpu.memory_space<vmem>>, vector<8x32xf32>
    %c88 = arith.constant 88 : index
    %c0_12 = arith.constant 0 : index
    %19 = vector.load %arg2[%c88, %c0_12] : memref<96x64xf32, #tpu.memory_space<vmem>>, vector<4x32xf32>
    %cst_13 = arith.constant dense<0.000000e+00> : vector<1024x32xf32>
    %20 = tpu.matmul %16, %18, %cst_13 {dimension_numbers = #tpu.dot_dimension_numbers<[1], [0], [0], [1], [0, 0, 1, 1], [], []>} : vector<1024x8xf32>, vector<8x32xf32>, vector<1024x32xf32> -> vector<1024x32xf32>
    %cst_14 = arith.constant dense<0.000000e+00> : vector<1024x32xf32>
    %21 = tpu.matmul %17, %19, %cst_14 {dimension_numbers = #tpu.dot_dimension_numbers<[1], [0], [0], [1], [0, 0, 1, 1], [], []>} : vector<1024x4xf32>, vector<4x32xf32>, vector<1024x32xf32> -> vector<1024x32xf32>
    %22 = arith.mulf %20, %21 : vector<1024x32xf32>
    %23 = vector.extract_strided_slice %22 {offsets = [0, 0], sizes = [128, 32], strides = [1, 1]} : vector<1024x32xf32> to vector<128x32xf32>
    %24 = vector.extract_strided_slice %22 {offsets = [128, 0], sizes = [128, 32], strides = [1, 1]} : vector<1024x32xf32> to vector<128x32xf32>
    %25 = arith.addf %23, %24 : vector<128x32xf32>
    %26 = vector.extract_strided_slice %22 {offsets = [256, 0], sizes = [128, 32], strides = [1, 1]} : vector<1024x32xf32> to vector<128x32xf32>
    %27 = arith.addf %25, %26 : vector<128x32xf32>
    %28 = vector.extract_strided_slice %22 {offsets = [384, 0], sizes = [128, 32], strides = [1, 1]} : vector<1024x32xf32> to vector<128x32xf32>
    %29 = arith.addf %27, %28 : vector<128x32xf32>
    %30 = vector.extract_strided_slice %22 {offsets = [512, 0], sizes = [128, 32], strides = [1, 1]} : vector<1024x32xf32> to vector<128x32xf32>
    %31 = arith.addf %29, %30 : vector<128x32xf32>
    %32 = vector.extract_strided_slice %22 {offsets = [640, 0], sizes = [128, 32], strides = [1, 1]} : vector<1024x32xf32> to vector<128x32xf32>
    %33 = arith.addf %31, %32 : vector<128x32xf32>
    %34 = vector.extract_strided_slice %22 {offsets = [768, 0], sizes = [128, 32], strides = [1, 1]} : vector<1024x32xf32> to vector<128x32xf32>
    %35 = arith.addf %33, %34 : vector<128x32xf32>
    %36 = vector.extract_strided_slice %22 {offsets = [896, 0], sizes = [128, 32], strides = [1, 1]} : vector<1024x32xf32> to vector<128x32xf32>
    %37 = arith.addf %35, %36 : vector<128x32xf32>
    %c0_15 = arith.constant 0 : index
    %c0_16 = arith.constant 0 : index
    %38 = vector.load %arg4[%c0_15, %c0_16] : memref<128x32xf32, #tpu.memory_space<vmem>>, vector<128x32xf32>
    tpu.vector_store %arg4[%c0_15, %c0_16], %37 {strides = array<i32>} : memref<128x32xf32, #tpu.memory_space<vmem>>, vector<128x32xf32>,
    return
  }
  func.func @transform_0(%arg0: i32) -> (i32, i32, i32) {
    %c0_i32 = arith.constant 0 : i32
    %c0_i32_0 = arith.constant 0 : i32
    %c0_i32_1 = arith.constant 0 : i32
    return %c0_i32, %arg0, %c0_i32_0 : i32, i32, i32
  }
  func.func @transform_1(%arg0: i32) -> (i32, i32) {
    %c0_i32 = arith.constant 0 : i32
    %c0_i32_0 = arith.constant 0 : i32
    %c0_i32_1 = arith.constant 0 : i32
    return %c0_i32, %c0_i32_0 : i32, i32
  }
  func.func @transform_2(%arg0: i32) -> (i32, i32) {
    %c0_i32 = arith.constant 0 : i32
    %c0_i32_0 = arith.constant 0 : i32
    %c0_i32_1 = arith.constant 0 : i32
    return %c0_i32, %c0_i32_0 : i32, i32
  }
  func.func @transform_3(%arg0: i32) -> (i32, i32) {
    %c0_i32 = arith.constant 0 : i32
    %c0_i32_0 = arith.constant 0 : i32
    return %arg0, %c0_i32 : i32, i32
  }
}

</mosaic_0001>

<llo_original>
// kernel: tpu_custom_call.1
$region0: #{tpu_custom_call.1}
  #allocation0 [shape = 'u32[]', space=smem, size = 0x4, offset = 0x4, fixed_abs, tag = 'smem constant byte address 0x4 - core index']
  #allocation1 [shape = 'u32[72,128]{1,0:T(1,128)}', space=vmem, size = 0x9000, scoped, tag = 'internal scratch']
  %s0 = inlined_call_operand.vmem [shape: f32[8,256,16], index: 0, kind: input, shape index: {}]
  %s1 = inlined_call_operand.vmem [shape: f32[96,64], index: 1, kind: input, shape index: {}]
  %s2 = inlined_call_operand.vmem [shape: f32[2,64], index: 2, kind: input, shape index: {}]
  %s3 = inlined_call_operand.vmem [shape: f32[256,32], index: 3, kind: output, shape index: {}]
  %s4 = sld [smem:[#allocation0]]
  $region83: #{tpu_custom_call.1} parent=0
    _
  %s6 = ssub.s32 1, %s4
  %s7 = scalar_select 0, %s6, %s4
  $region1: #{tpu_custom_call.1} parent=0
    #allocation2 [shape = 'u8[1048576]{0}', space=vmem, size = 0x100000, scoped, tag = 'input window, operand 0']
    loop: start=0, step=1, limit=4
    $region2: #{tpu_custom_call.1} parent=1 // loop_pre_header
      _
    $region3: #{tpu_custom_call.1} parent=1 // loop_header
      %s9 = sphi 0, %s13
      %p10 = scmp.ge.s32.totalorder %s9, 4
      %s19 = sphi 0, %s21
      %s22 = sphi 0, %s19
      %s23 = sphi 0, %s22
      %s39 = sphi 0, %s23
      %s43 = sphi 0, %s43
      %s45 = sphi 0, %s43
      %s46 = sphi 0, %s45
      %s60 = sphi 0, %s46
      %s64 = sphi 0, %s64
      %s66 = sphi 0, %s64
      %s67 = sphi 0, %s66
      %s81 = sphi 0, %s67
      %s87 = sphi 0, %s89
      %s90 = sphi 0, %s87
      %s91 = sphi 0, %s90
      %s107 = sphi 0, %s91
    $region4: #{tpu_custom_call.1} parent=1 // loop_header_branch
      %12 = sbr.rel (%p10) target = $region8
    $region5: #{tpu_custom_call.1} parent=1 // loop_body
      %s14 = ssub.s32 %s9, 1
      %s15 = ssub.s32 %s9, 2
      %s16 = sadd.s32 %s9, 1
      %s17 = ssub.s32 %s9, %s16
      %p18 = scmp.eq.s32.totalorder %s17, 0
      %s20 = sadd.s32 %s19, 1
      %s21 = scalar_select %p18, %s19, %s20
      %p24 = pneg %p18
      %p25 = scmp.eq.s32.totalorder %s9, 1
      %p26 = por %p24, %p25
      %p27 = scmp.ne.s32.totalorder %s19, %s22
      %p28 = scmp.eq.s32.totalorder %s9, 0
      %p29 = por %p27, %p28
      %p30 = scmp.ne.s32.totalorder %s19, %s22
      %p31 = scmp.eq.s32.totalorder %s14, 1
      %p32 = por %p30, %p31
      %p33 = scmp.ne.s32.totalorder %s22, %s23
      %p34 = scmp.eq.s32.totalorder %s14, 0
      %p35 = por %p33, %p34
      %p36 = scmp.ne.s32.totalorder %s22, %s23
      %p37 = scmp.eq.s32.totalorder %s15, 1
      %p38 = por %p36, %p37
      %p40 = scmp.ne.s32.totalorder %s23, %s39
      %p41 = scmp.eq.s32.totalorder %s15, 0
      %p42 = por %p40, %p41
      %s44 = sadd.s32 %s43, 1
      %p47 = scmp.eq.s32.totalorder %s9, 1
      %p48 = scmp.ne.s32.totalorder %s43, %s45
      %p49 = scmp.eq.s32.totalorder %s9, 0
      %p50 = por %p48, %p49
      %p51 = scmp.ne.s32.totalorder %s43, %s45
      %p52 = scmp.eq.s32.totalorder %s14, 1
      %p53 = por %p51, %p52
      %p54 = scmp.ne.s32.totalorder %s45, %s46
      %p55 = scmp.eq.s32.totalorder %s14, 0
      %p56 = por %p54, %p55
      %p57 = scmp.ne.s32.totalorder %s45, %s46
      %p58 = scmp.eq.s32.totalorder %s15, 1
      %p59 = por %p57, %p58
      %p61 = scmp.ne.s32.totalorder %s46, %s60
      %p62 = scmp.eq.s32.totalorder %s15, 0
      %p63 = por %p61, %p62
      %s65 = sadd.s32 %s64, 1
      %p68 = scmp.eq.s32.totalorder %s9, 1
      %p69 = scmp.ne.s32.totalorder %s64, %s66
      %p70 = scmp.eq.s32.totalorder %s9, 0
      %p71 = por %p69, %p70
      %p72 = scmp.ne.s32.totalorder %s64, %s66
      %p73 = scmp.eq.s32.totalorder %s14, 1
      %p74 = por %p72, %p73
      %p75 = scmp.ne.s32.totalorder %s66, %s67
      %p76 = scmp.eq.s32.totalorder %s14, 0
      %p77 = por %p75, %p76
      %p78 = scmp.ne.s32.totalorder %s66, %s67
      %p79 = scmp.eq.s32.totalorder %s15, 1
      %p80 = por %p78, %p79
      %p82 = scmp.ne.s32.totalorder %s67, %s81
      %p83 = scmp.eq.s32.totalorder %s15, 0
      %p84 = por %p82, %p83
      %s85 = ssub.s32 %s9, %s16
      %p86 = scmp.eq.s32.totalorder %s85, 0
      %s88 = sadd.s32 %s87, 1
      %s89 = scalar_select %p86, %s87, %s88
      %p92 = pneg %p86
      %p93 = scmp.eq.s32.totalorder %s9, 1
      %p94 = por %p92, %p93
      %p95 = scmp.ne.s32.totalorder %s87, %s90
      %p96 = scmp.eq.s32.totalorder %s9, 0
      %p97 = por %p95, %p96
      %p98 = scmp.ne.s32.totalorder %s87, %s90
      %p99 = scmp.eq.s32.totalorder %s14, 1
      %p100 = por %p98, %p99
      %p101 = scmp.ne.s32.totalorder %s90, %s91
      %p102 = scmp.eq.s32.totalorder %s14, 0
      %p103 = por %p101, %p102
      %p104 = scmp.ne.s32.totalorder %s90, %s91
      %p105 = scmp.eq.s32.totalorder %s15, 1
      %p106 = por %p104, %p105
      %p108 = scmp.ne.s32.totalorder %s91, %s107
      %p109 = scmp.eq.s32.totalorder %s15, 0
      %p110 = por %p108, %p109
      %p111 = scmp.le.s32.totalorder 1, %s9
      %p112 = scmp.lt.s32.totalorder %s9, 3
      %p113 = pnand %p111, %p112
      %p114 = pneg %p113
      // Predicated region
      $region9: #{tpu_custom_call.1} parent=5 // pred_check
        _
      $region10: #{tpu_custom_call.1} parent=5 // pred_check_branch
        %116 = sbr.rel (%p113) target = $region12
      $region11: #{tpu_custom_call.1} parent=5 // pred_region
        %s117 = ssub.s32 %s9, 1
        // Predicated region
        $region13: #{tpu_custom_call.1} parent=11 // pred_check
          %p118 = pneg %p56
        $region14: #{tpu_custom_call.1} parent=11 // pred_check_branch
          %120 = sbr.rel (%p118) target = $region16
        $region15: #{tpu_custom_call.1} parent=11 // pred_region
          _
        $region16: #{tpu_custom_call.1} parent=11 // pred_fallthru
          _
        // Predicated region
        $region17: #{tpu_custom_call.1} parent=11 // pred_check
          %p121 = pneg %p77
        $region18: #{tpu_custom_call.1} parent=11 // pred_check_branch
          %123 = sbr.rel (%p121) target = $region20
        $region19: #{tpu_custom_call.1} parent=11 // pred_region
          _
        $region20: #{tpu_custom_call.1} parent=11 // pred_fallthru
          _
      $region12: #{tpu_custom_call.1} parent=5 // pred_fallthru
        _
      %p124 = scmp.lt.s32.totalorder %s9, 2
      // Predicated region
      $region21: #{tpu_custom_call.1} parent=5 // pred_check
        %p125 = pneg %p124
      $region22: #{tpu_custom_call.1} parent=5 // pred_check_branch
        %127 = sbr.rel (%p125) target = $region24
      $region23: #{tpu_custom_call.1} parent=5 // pred_region
        // Predicated region
        $region25: #{tpu_custom_call.1} parent=23 // pred_check
          %p128 = pneg %p29
        $region26: #{tpu_custom_call.1} parent=23 // pred_check_branch
          %130 = sbr.rel (%p128) target = $region28
        $region27: #{tpu_custom_call.1} parent=23 // pred_region
          %s131 = sand.u32 %s19, 1
          %s132 = sand.u32 %s19, 1
          %s133 = smul.addr %s132, 1024
          %s134 = scalar_lea.vmem [#allocation2], %s133
          %s135 = smul.u32 16, %s9
          %s136 = smul.addr %s135, 8
          %s137 = scalar_lea.vmem %s0, %s136
          // Predicated region
          $region29: #{tpu_custom_call.1} parent=27 // pred_check
            _
          $region30: #{tpu_custom_call.1} parent=27 // pred_check_branch
            %139 = sbr.rel (0) target = $region32
          $region31: #{tpu_custom_call.1} parent=27 // pred_region
            // Predicated region
            $region33: #{tpu_custom_call.1} parent=31 // pred_check
              _
            $region34: #{tpu_custom_call.1} parent=31 // pred_check_branch
              %141 = sbr.rel (0) target = $region36
            $region35: #{tpu_custom_call.1} parent=31 // pred_region
              // Predicated region
              $region48: #{tpu_custom_call.1} parent=35 // pred_check
                _
              $region49: #{tpu_custom_call.1} parent=35 // pred_check_branch
                %411 = sbr.rel (0) target = $region51
              $region50: #{tpu_custom_call.1} parent=35 // pred_region
                loop: start=0, step=1, limit=1
                $region52: #{tpu_custom_call.1} parent=50 // loop_pre_header
                  _
                $region53: #{tpu_custom_call.1} parent=50 // loop_header
                  %s413 = sphi 0, %s417
                  %p414 = scmp.ge.s32.totalorder %s413, 1
                  %s418 = sphi %s137, %s137
                  %s419 = sphi %s134, %s134
                $region54: #{tpu_custom_call.1} parent=50 // loop_header_branch
                  %416 = sbr.rel (%p414) target = $region58
                $region55: #{tpu_custom_call.1} parent=50 // loop_body
                  %v420 = vld [vmem:[%s418] sm:$0xff]
                  %421 = vst [vmem:[%s419] sm:$0xff] %v420
                  %v422 = vld [vmem:[%s418 + $0x8] sm:$0xff]
                  %423 = vst [vmem:[%s419 + $0x8] sm:$0xff] %v422
                  %v424 = vld [vmem:[%s418 + $0x10] sm:$0xff]
                  %425 = vst [vmem:[%s419 + $0x10] sm:$0xff] %v424
                  %v426 = vld [vmem:[%s418 + $0x18] sm:$0xff]
                  %427 = vst [vmem:[%s419 + $0x18] sm:$0xff] %v426
                  %v428 = vld [vmem:[%s418 + $0x20] sm:$0xff]
                  %429 = vst [vmem:[%s419 + $0x20] sm:$0xff] %v428
                  %v430 = vld [vmem:[%s418 + $0x28] sm:$0xff]
                  %431 = vst [vmem:[%s419 + $0x28] sm:$0xff] %v430
                  %v432 = vld [vmem:[%s418 + $0x30] sm:$0xff]
                  %433 = vst [vmem:[%s419 + $0x30] sm:$0xff] %v432
                  %v434 = vld [vmem:[%s418 + $0x38] sm:$0xff]
                  %435 = vst [vmem:[%s419 + $0x38] sm:$0xff] %v434
                  %v436 = vld [vmem:[%s418 + $0x40] sm:$0xff]
                  %437 = vst [vmem:[%s419 + $0x40] sm:$0xff] %v436
                  %v438 = vld [vmem:[%s418 + $0x48] sm:$0xff]
                  %439 = vst [vmem:[%s419 + $0x48] sm:$0xff] %v438
                  %v440 = vld [vmem:[%s418 + $0x50] sm:$0xff]
                  %441 = vst [vmem:[%s419 + $0x50] sm:$0xff] %v440
                  %v442 = vld [vmem:[%s418 + $0x58] sm:$0xff]
                  %443 = vst [vmem:[%s419 + $0x58] sm:$0xff] %v442
                  %v444 = vld [vmem:[%s418 + $0x60] sm:$0xff]
                  %445 = vst [vmem:[%s419 + $0x60] sm:$0xff] %v444
                  %v446 = vld [vmem:[%s418 + $0x68] sm:$0xff]
                  %447 = vst [vmem:[%s419 + $0x68] sm:$0xff] %v446
                  %v448 = vld [vmem:[%s418 + $0x70] sm:$0xff]
                  %449 = vst [vmem:[%s419 + $0x70] sm:$0xff] %v448
                  %v450 = vld [vmem:[%s418 + $0x78] sm:$0xff]
                  %451 = vst [vmem:[%s419 + $0x78] sm:$0xff] %v450
                  %v452 = vld [vmem:[%s418 + $0x100] sm:$0xff]
                  %453 = vst [vmem:[%s419 + $0x80] sm:$0xff] %v452
                  %v454 = vld [vmem:[%s418 + $0x108] sm:$0xff]
                  %455 = vst [vmem:[%s419 + $0x88] sm:$0xff] %v454
                  %v456 = vld [vmem:[%s418 + $0x110] sm:$0xff]
                  %457 = vst [vmem:[%s419 + $0x90] sm:$0xff] %v456
                  %v458 = vld [vmem:[%s418 + $0x118] sm:$0xff]
                  %459 = vst [vmem:[%s419 + $0x98] sm:$0xff] %v458
                  %v460 = vld [vmem:[%s418 + $0x120] sm:$0xff]
                  %461 = vst [vmem:[%s419 + $0xa0] sm:$0xff] %v460
                  %v462 = vld [vmem:[%s418 + $0x128] sm:$0xff]
                  %463 = vst [vmem:[%s419 + $0xa8] sm:$0xff] %v462
                  %v464 = vld [vmem:[%s418 + $0x130] sm:$0xff]
                  %465 = vst [vmem:[%s419 + $0xb0] sm:$0xff] %v464
                  %v466 = vld [vmem:[%s418 + $0x138] sm:$0xff]
                  %467 = vst [vmem:[%s419 + $0xb8] sm:$0xff] %v466
                  %v468 = vld [vmem:[%s418 + $0x140] sm:$0xff]
                  %469 = vst [vmem:[%s419 + $0xc0] sm:$0xff] %v468
                  %v470 = vld [vmem:[%s418 + $0x148] sm:$0xff]
                  %471 = vst [vmem:[%s419 + $0xc8] sm:$0xff] %v470
                  %v472 = vld [vmem:[%s418 + $0x150] sm:$0xff]
                  %473 = vst [vmem:[%s419 + $0xd0] sm:$0xff] %v472
                  %v474 = vld [vmem:[%s418 + $0x158] sm:$0xff]
                  %475 = vst [vmem:[%s419 + $0xd8] sm:$0xff] %v474
                  %v476 = vld [vmem:[%s418 + $0x160] sm:$0xff]
                  %477 = vst [vmem:[%s419 + $0xe0] sm:$0xff] %v476
                  %v478 = vld [vmem:[%s418 + $0x168] sm:$0xff]
                  %479 = vst [vmem:[%s419 + $0xe8] sm:$0xff] %v478
                  %v480 = vld [vmem:[%s418 + $0x170] sm:$0xff]
                  %481 = vst [vmem:[%s419 + $0xf0] sm:$0xff] %v480
                  %v482 = vld [vmem:[%s418 + $0x178] sm:$0xff]
                  %483 = vst [vmem:[%s419 + $0xf8] sm:$0xff] %v482
                  %v484 = vld [vmem:[%s418 + $0x200] sm:$0xff]
                  %485 = vst [vmem:[%s419 + $0x100] sm:$0xff] %v484
                  %v486 = vld [vmem:[%s418 + $0x208] sm:$0xff]
                  %487 = vst [vmem:[%s419 + $0x108] sm:$0xff] %v486
                  %v488 = vld [vmem:[%s418 + $0x210] sm:$0xff]
                  %489 = vst [vmem:[%s419 + $0x110] sm:$0xff] %v488
                  %v490 = vld [vmem:[%s418 + $0x218] sm:$0xff]
                  %491 = vst [vmem:[%s419 + $0x118] sm:$0xff] %v490
                  %v492 = vld [vmem:[%s418 + $0x220] sm:$0xff]
                  %493 = vst [vmem:[%s419 + $0x120] sm:$0xff] %v492
                  %v494 = vld [vmem:[%s418 + $0x228] sm:$0xff]
                  %495 = vst [vmem:[%s419 + $0x128] sm:$0xff] %v494
                  %v496 = vld [vmem:[%s418 + $0x230] sm:$0xff]
                  %497 = vst [vmem:[%s419 + $0x130] sm:$0xff] %v496
                  %v498 = vld [vmem:[%s418 + $0x238] sm:$0xff]
                  %499 = vst [vmem:[%s419 + $0x138] sm:$0xff] %v498
                  %v500 = vld [vmem:[%s418 + $0x240] sm:$0xff]
                  %501 = vst [vmem:[%s419 + $0x140] sm:$0xff] %v500
                  %v502 = vld [vmem:[%s418 + $0x248] sm:$0xff]
                  %503 = vst [vmem:[%s419 + $0x148] sm:$0xff] %v502
                  %v504 = vld [vmem:[%s418 + $0x250] sm:$0xff]
                  %505 = vst [vmem:[%s419 + $0x150] sm:$0xff] %v504
                  %v506 = vld [vmem:[%s418 + $0x258] sm:$0xff]
                  %507 = vst [vmem:[%s419 + $0x158] sm:$0xff] %v506
                  %v508 = vld [vmem:[%s418 + $0x260] sm:$0xff]
                  %509 = vst [vmem:[%s419 + $0x160] sm:$0xff] %v508
                  %v510 = vld [vmem:[%s418 + $0x268] sm:$0xff]
                  %511 = vst [vmem:[%s419 + $0x168] sm:$0xff] %v510
                  %v512 = vld [vmem:[%s418 + $0x270] sm:$0xff]
                  %513 = vst [vmem:[%s419 + $0x170] sm:$0xff] %v512
                  %v514 = vld [vmem:[%s418 + $0x278] sm:$0xff]
                  %515 = vst [vmem:[%s419 + $0x178] sm:$0xff] %v514
                  %v516 = vld [vmem:[%s418 + $0x300] sm:$0xff]
                  %517 = vst [vmem:[%s419 + $0x180] sm:$0xff] %v516
                  %v518 = vld [vmem:[%s418 + $0x308] sm:$0xff]
                  %519 = vst [vmem:[%s419 + $0x188] sm:$0xff] %v518
                  %v520 = vld [vmem:[%s418 + $0x310] sm:$0xff]
                  %521 = vst [vmem:[%s419 + $0x190] sm:$0xff] %v520
                  %v522 = vld [vmem:[%s418 + $0x318] sm:$0xff]
                  %523 = vst [vmem:[%s419 + $0x198] sm:$0xff] %v522
                  %v524 = vld [vmem:[%s418 + $0x320] sm:$0xff]
                  %525 = vst [vmem:[%s419 + $0x1a0] sm:$0xff] %v524
                  %v526 = vld [vmem:[%s418 + $0x328] sm:$0xff]
                  %527 = vst [vmem:[%s419 + $0x1a8] sm:$0xff] %v526
                  %v528 = vld [vmem:[%s418 + $0x330] sm:$0xff]
                  %529 = vst [vmem:[%s419 + $0x1b0] sm:$0xff] %v528
                  %v530 = vld [vmem:[%s418 + $0x338] sm:$0xff]
                  %531 = vst [vmem:[%s419 + $0x1b8] sm:$0xff] %v530
                  %v532 = vld [vmem:[%s418 + $0x340] sm:$0xff]
                  %533 = vst [vmem:[%s419 + $0x1c0] sm:$0xff] %v532
                  %v534 = vld [vmem:[%s418 + $0x348] sm:$0xff]
                  %535 = vst [vmem:[%s419 + $0x1c8] sm:$0xff] %v534
                  %v536 = vld [vmem:[%s418 + $0x350] sm:$0xff]
                  %537 = vst [vmem:[%s419 + $0x1d0] sm:$0xff] %v536
                  %v538 = vld [vmem:[%s418 + $0x358] sm:$0xff]
                  %539 = vst [vmem:[%s419 + $0x1d8] sm:$0xff] %v538
                  %v540 = vld [vmem:[%s418 + $0x360] sm:$0xff]
                  %541 = vst [vmem:[%s419 + $0x1e0] sm:$0xff] %v540
                  %v542 = vld [vmem:[%s418 + $0x368] sm:$0xff]
                  %543 = vst [vmem:[%s419 + $0x1e8] sm:$0xff] %v542
                  %v544 = vld [vmem:[%s418 + $0x370] sm:$0xff]
                  %545 = vst [vmem:[%s419 + $0x1f0] sm:$0xff] %v544
                  %v546 = vld [vmem:[%s418 + $0x378] sm:$0xff]
                  %547 = vst [vmem:[%s419 + $0x1f8] sm:$0xff] %v546
                  %v548 = vld [vmem:[%s418 + $0x400] sm:$0xff]
                  %549 = vst [vmem:[%s419 + $0x200] sm:$0xff] %v548
                  %v550 = vld [vmem:[%s418 + $0x408] sm:$0xff]
                  %551 = vst [vmem:[%s419 + $0x208] sm:$0xff] %v550
                  %v552 = vld [vmem:[%s418 + $0x410] sm:$0xff]
                  %553 = vst [vmem:[%s419 + $0x210] sm:$0xff] %v552
                  %v554 = vld [vmem:[%s418 + $0x418] sm:$0xff]
                  %555 = vst [vmem:[%s419 + $0x218] sm:$0xff] %v554
                  %v556 = vld [vmem:[%s418 + $0x420] sm:$0xff]
                  %557 = vst [vmem:[%s419 + $0x220] sm:$0xff] %v556
                  %v558 = vld [vmem:[%s418 + $0x428] sm:$0xff]
                  %559 = vst [vmem:[%s419 + $0x228] sm:$0xff] %v558
                  %v560 = vld [vmem:[%s418 + $0x430] sm:$0xff]
                  %561 = vst [vmem:[%s419 + $0x230] sm:$0xff] %v560
                  %v562 = vld [vmem:[%s418 + $0x438] sm:$0xff]
                  %563 = vst [vmem:[%s419 + $0x238] sm:$0xff] %v562
                  %v564 = vld [vmem:[%s418 + $0x440] sm:$0xff]
                  %565 = vst [vmem:[%s419 + $0x240] sm:$0xff] %v564
                  %v566 = vld [vmem:[%s418 + $0x448] sm:$0xff]
                  %567 = vst [vmem:[%s419 + $0x248] sm:$0xff] %v566
                  %v568 = vld [vmem:[%s418 + $0x450] sm:$0xff]
                  %569 = vst [vmem:[%s419 + $0x250] sm:$0xff] %v568
                  %v570 = vld [vmem:[%s418 + $0x458] sm:$0xff]
                  %571 = vst [vmem:[%s419 + $0x258] sm:$0xff] %v570
                  %v572 = vld [vmem:[%s418 + $0x460] sm:$0xff]
                  %573 = vst [vmem:[%s419 + $0x260] sm:$0xff] %v572
                  %v574 = vld [vmem:[%s418 + $0x468] sm:$0xff]
                  %575 = vst [vmem:[%s419 + $0x268] sm:$0xff] %v574
                  %v576 = vld [vmem:[%s418 + $0x470] sm:$0xff]
                  %577 = vst [vmem:[%s419 + $0x270] sm:$0xff] %v576
                  %v578 = vld [vmem:[%s418 + $0x478] sm:$0xff]
                  %579 = vst [vmem:[%s419 + $0x278] sm:$0xff] %v578
                  %v580 = vld [vmem:[%s418 + $0x500] sm:$0xff]
                  %581 = vst [vmem:[%s419 + $0x280] sm:$0xff] %v580
                  %v582 = vld [vmem:[%s418 + $0x508] sm:$0xff]
                  %583 = vst [vmem:[%s419 + $0x288] sm:$0xff] %v582
                  %v584 = vld [vmem:[%s418 + $0x510] sm:$0xff]
                  %585 = vst [vmem:[%s419 + $0x290] sm:$0xff] %v584
                  %v586 = vld [vmem:[%s418 + $0x518] sm:$0xff]
                  %587 = vst [vmem:[%s419 + $0x298] sm:$0xff] %v586
                  %v588 = vld [vmem:[%s418 + $0x520] sm:$0xff]
                  %589 = vst [vmem:[%s419 + $0x2a0] sm:$0xff] %v588
                  %v590 = vld [vmem:[%s418 + $0x528] sm:$0xff]
                  %591 = vst [vmem:[%s419 + $0x2a8] sm:$0xff] %v590
                  %v592 = vld [vmem:[%s418 + $0x530] sm:$0xff]
                  %593 = vst [vmem:[%s419 + $0x2b0] sm:$0xff] %v592
                  %v594 = vld [vmem:[%s418 + $0x538] sm:$0xff]
                  %595 = vst [vmem:[%s419 + $0x2b8] sm:$0xff] %v594
                  %v596 = vld [vmem:[%s418 + $0x540] sm:$0xff]
                  %597 = vst [vmem:[%s419 + $0x2c0] sm:$0xff] %v596
                  %v598 = vld [vmem:[%s418 + $0x548] sm:$0xff]
                  %599 = vst [vmem:[%s419 + $0x2c8] sm:$0xff] %v598
                  %v600 = vld [vmem:[%s418 + $0x550] sm:$0xff]
                  %601 = vst [vmem:[%s419 + $0x2d0] sm:$0xff] %v600
                  %v602 = vld [vmem:[%s418 + $0x558] sm:$0xff]
                  %603 = vst [vmem:[%s419 + $0x2d8] sm:$0xff] %v602
                  %v604 = vld [vmem:[%s418 + $0x560] sm:$0xff]
                  %605 = vst [vmem:[%s419 + $0x2e0] sm:$0xff] %v604
                  %v606 = vld [vmem:[%s418 + $0x568] sm:$0xff]
                  %607 = vst [vmem:[%s419 + $0x2e8] sm:$0xff] %v606
                  %v608 = vld [vmem:[%s418 + $0x570] sm:$0xff]
                  %609 = vst [vmem:[%s419 + $0x2f0] sm:$0xff] %v608
                  %v610 = vld [vmem:[%s418 + $0x578] sm:$0xff]
                  %611 = vst [vmem:[%s419 + $0x2f8] sm:$0xff] %v610
                  %v612 = vld [vmem:[%s418 + $0x600] sm:$0xff]
                  %613 = vst [vmem:[%s419 + $0x300] sm:$0xff] %v612
                  %v614 = vld [vmem:[%s418 + $0x608] sm:$0xff]
                  %615 = vst [vmem:[%s419 + $0x308] sm:$0xff] %v614
                  %v616 = vld [vmem:[%s418 + $0x610] sm:$0xff]
                  %617 = vst [vmem:[%s419 + $0x310] sm:$0xff] %v616
                  %v618 = vld [vmem:[%s418 + $0x618] sm:$0xff]
                  %619 = vst [vmem:[%s419 + $0x318] sm:$0xff] %v618
                  %v620 = vld [vmem:[%s418 + $0x620] sm:$0xff]
                  %621 = vst [vmem:[%s419 + $0x320] sm:$0xff] %v620
                  %v622 = vld [vmem:[%s418 + $0x628] sm:$0xff]
                  %623 = vst [vmem:[%s419 + $0x328] sm:$0xff] %v622
                  %v624 = vld [vmem:[%s418 + $0x630] sm:$0xff]
                  %625 = vst [vmem:[%s419 + $0x330] sm:$0xff] %v624
                  %v626 = vld [vmem:[%s418 + $0x638] sm:$0xff]
                  %627 = vst [vmem:[%s419 + $0x338] sm:$0xff] %v626
                  %v628 = vld [vmem:[%s418 + $0x640] sm:$0xff]
                  %629 = vst [vmem:[%s419 + $0x340] sm:$0xff] %v628
                  %v630 = vld [vmem:[%s418 + $0x648] sm:$0xff]
                  %631 = vst [vmem:[%s419 + $0x348] sm:$0xff] %v630
                  %v632 = vld [vmem:[%s418 + $0x650] sm:$0xff]
                  %633 = vst [vmem:[%s419 + $0x350] sm:$0xff] %v632
                  %v634 = vld [vmem:[%s418 + $0x658] sm:$0xff]
                  %635 = vst [vmem:[%s419 + $0x358] sm:$0xff] %v634
                  %v636 = vld [vmem:[%s418 + $0x660] sm:$0xff]
                  %637 = vst [vmem:[%s419 + $0x360] sm:$0xff] %v636
                  %v638 = vld [vmem:[%s418 + $0x668] sm:$0xff]
                  %639 = vst [vmem:[%s419 + $0x368] sm:$0xff] %v638
                  %v640 = vld [vmem:[%s418 + $0x670] sm:$0xff]
                  %641 = vst [vmem:[%s419 + $0x370] sm:$0xff] %v640
                  %v642 = vld [vmem:[%s418 + $0x678] sm:$0xff]
                  %643 = vst [vmem:[%s419 + $0x378] sm:$0xff] %v642
                  %v644 = vld [vmem:[%s418 + $0x700] sm:$0xff]
                  %645 = vst [vmem:[%s419 + $0x380] sm:$0xff] %v644
                  %v646 = vld [vmem:[%s418 + $0x708] sm:$0xff]
                  %647 = vst [vmem:[%s419 + $0x388] sm:$0xff] %v646
                  %v648 = vld [vmem:[%s418 + $0x710] sm:$0xff]
                  %649 = vst [vmem:[%s419 + $0x390] sm:$0xff] %v648
                  %v650 = vld [vmem:[%s418 + $0x718] sm:$0xff]
                  %651 = vst [vmem:[%s419 + $0x398] sm:$0xff] %v650
                  %v652 = vld [vmem:[%s418 + $0x720] sm:$0xff]
                  %653 = vst [vmem:[%s419 + $0x3a0] sm:$0xff] %v652
                  %v654 = vld [vmem:[%s418 + $0x728] sm:$0xff]
                  %655 = vst [vmem:[%s419 + $0x3a8] sm:$0xff] %v654
                  %v656 = vld [vmem:[%s418 + $0x730] sm:$0xff]
                  %657 = vst [vmem:[%s419 + $0x3b0] sm:$0xff] %v656
                  %v658 = vld [vmem:[%s418 + $0x738] sm:$0xff]
                  %659 = vst [vmem:[%s419 + $0x3b8] sm:$0xff] %v658
                  %v660 = vld [vmem:[%s418 + $0x740] sm:$0xff]
                  %661 = vst [vmem:[%s419 + $0x3c0] sm:$0xff] %v660
                  %v662 = vld [vmem:[%s418 + $0x748] sm:$0xff]
                  %663 = vst [vmem:[%s419 + $0x3c8] sm:$0xff] %v662
                  %v664 = vld [vmem:[%s418 + $0x750] sm:$0xff]
                  %665 = vst [vmem:[%s419 + $0x3d0] sm:$0xff] %v664
                  %v666 = vld [vmem:[%s418 + $0x758] sm:$0xff]
                  %667 = vst [vmem:[%s419 + $0x3d8] sm:$0xff] %v666
                  %v668 = vld [vmem:[%s418 + $0x760] sm:$0xff]
                  %669 = vst [vmem:[%s419 + $0x3e0] sm:$0xff] %v668
                  %v670 = vld [vmem:[%s418 + $0x768] sm:$0xff]
                  %671 = vst [vmem:[%s419 + $0x3e8] sm:$0xff] %v670
                  %v672 = vld [vmem:[%s418 + $0x770] sm:$0xff]
                  %673 = vst [vmem:[%s419 + $0x3f0] sm:$0xff] %v672
                  %v674 = vld [vmem:[%s418 + $0x778] sm:$0xff]
                  %675 = vst [vmem:[%s419 + $0x3f8] sm:$0xff] %v674
                $region56: #{tpu_custom_call.1} parent=50 // loop_footer
                  %s417 = sadd.s32 1, %s413
                $region57: #{tpu_custom_call.1} parent=50 // loop_footer_branch
                  %412 = sbr.rel target = $region53
                $region58: #{tpu_custom_call.1} parent=50 // loop_exit
                  _
              $region51: #{tpu_custom_call.1} parent=35 // pred_fallthru
                _
              // Predicated region
              $region59: #{tpu_custom_call.1} parent=35 // pred_check
                _
              $region60: #{tpu_custom_call.1} parent=35 // pred_check_branch
                %677 = sbr.rel target = $region62
              $region61: #{tpu_custom_call.1} parent=35 // pred_region
                _
              $region62: #{tpu_custom_call.1} parent=35 // pred_fallthru
                _
            $region36: #{tpu_custom_call.1} parent=31 // pred_fallthru
              _
            // Predicated region
            $region37: #{tpu_custom_call.1} parent=31 // pred_check
              _
            $region38: #{tpu_custom_call.1} parent=31 // pred_check_branch
              %143 = sbr.rel target = $region40
            $region39: #{tpu_custom_call.1} parent=31 // pred_region
              %s145 = ssub.s32 256, 1
              loop: start=0, step=1, limit=1
              $region41: #{tpu_custom_call.1} parent=39 // loop_pre_header
                _
              $region42: #{tpu_custom_call.1} parent=39 // loop_header
                %s147 = sphi 0, %s151
                %p148 = scmp.ge.s32.totalorder %s147, 1
                %s152 = sphi %s137, %s137
                %s153 = sphi %s134, %s134
              $region43: #{tpu_custom_call.1} parent=39 // loop_header_branch
                %150 = sbr.rel (%p148) target = $region47
              $region44: #{tpu_custom_call.1} parent=39 // loop_body
                %v154 = vld [vmem:[%s152] sm:%s145]
                %155 = vst [vmem:[%s153] sm:%s145] %v154
                %v156 = vld [vmem:[%s152 + $0x8] sm:%s145]
                %157 = vst [vmem:[%s153 + $0x8] sm:%s145] %v156
                %v158 = vld [vmem:[%s152 + $0x10] sm:%s145]
                %159 = vst [vmem:[%s153 + $0x10] sm:%s145] %v158
                %v160 = vld [vmem:[%s152 + $0x18] sm:%s145]
                %161 = vst [vmem:[%s153 + $0x18] sm:%s145] %v160
                %v162 = vld [vmem:[%s152 + $0x20] sm:%s145]
                %163 = vst [vmem:[%s153 + $0x20] sm:%s145] %v162
                %v164 = vld [vmem:[%s152 + $0x28] sm:%s145]
                %165 = vst [vmem:[%s153 + $0x28] sm:%s145] %v164
                %v166 = vld [vmem:[%s152 + $0x30] sm:%s145]
                %167 = vst [vmem:[%s153 + $0x30] sm:%s145] %v166
                %v168 = vld [vmem:[%s152 + $0x38] sm:%s145]
                %169 = vst [vmem:[%s153 + $0x38] sm:%s145] %v168
                %v170 = vld [vmem:[%s152 + $0x40] sm:%s145]
                %171 = vst [vmem:[%s153 + $0x40] sm:%s145] %v170
                %v172 = vld [vmem:[%s152 + $0x48] sm:%s145]
                %173 = vst [vmem:[%s153 + $0x48] sm:%s145] %v172
                %v174 = vld [vmem:[%s152 + $0x50] sm:%s145]
                %175 = vst [vmem:[%s153 + $0x50] sm:%s145] %v174
                %v176 = vld [vmem:[%s152 + $0x58] sm:%s145]
                %177 = vst [vmem:[%s153 + $0x58] sm:%s145] %v176
                %v178 = vld [vmem:[%s152 + $0x60] sm:%s145]
                %179 = vst [vmem:[%s153 + $0x60] sm:%s145] %v178
                %v180 = vld [vmem:[%s152 + $0x68] sm:%s145]
                %181 = vst [vmem:[%s153 + $0x68] sm:%s145] %v180
                %v182 = vld [vmem:[%s152 + $0x70] sm:%s145]
                %183 = vst [vmem:[%s153 + $0x70] sm:%s145] %v182
                %v184 = vld [vmem:[%s152 + $0x78] sm:%s145]
                %185 = vst [vmem:[%s153 + $0x78] sm:%s145] %v184
                %v186 = vld [vmem:[%s152 + $0x100] sm:%s145]
                %187 = vst [vmem:[%s153 + $0x80] sm:%s145] %v186
                %v188 = vld [vmem:[%s152 + $0x108] sm:%s145]
                %189 = vst [vmem:[%s153 + $0x88] sm:%s145] %v188
                %v190 = vld [vmem:[%s152 + $0x110] sm:%s145]
                %191 = vst [vmem:[%s153 + $0x90] sm:%s145] %v190
                %v192 = vld [vmem:[%s152 + $0x118] sm:%s145]
                %193 = vst [vmem:[%s153 + $0x98] sm:%s145] %v192
                %v194 = vld [vmem:[%s152 + $0x120] sm:%s145]
                %195 = vst [vmem:[%s153 + $0xa0] sm:%s145] %v194
                %v196 = vld [vmem:[%s152 + $0x128] sm:%s145]
                %197 = vst [vmem:[%s153 + $0xa8] sm:%s145] %v196
                %v198 = vld [vmem:[%s152 + $0x130] sm:%s145]
                %199 = vst [vmem:[%s153 + $0xb0] sm:%s145] %v198
                %v200 = vld [vmem:[%s152 + $0x138] sm:%s145]
                %201 = vst [vmem:[%s153 + $0xb8] sm:%s145] %v200
                %v202 = vld [vmem:[%s152 + $0x140] sm:%s145]
                %203 = vst [vmem:[%s153 + $0xc0] sm:%s145] %v202
                %v204 = vld [vmem:[%s152 + $0x148] sm:%s145]
                %205 = vst [vmem:[%s153 + $0xc8] sm:%s145] %v204
                %v206 = vld [vmem:[%s152 + $0x150] sm:%s145]
                %207 = vst [vmem:[%s153 + $0xd0] sm:%s145] %v206
                %v208 = vld [vmem:[%s152 + $0x158] sm:%s145]
                %209 = vst [vmem:[%s153 + $0xd8] sm:%s145] %v208
                %v210 = vld [vmem:[%s152 + $0x160] sm:%s145]
                %211 = vst [vmem:[%s153 + $0xe0] sm:%s145] %v210
                %v212 = vld [vmem:[%s152 + $0x168] sm:%s145]
                %213 = vst [vmem:[%s153 + $0xe8] sm:%s145] %v212
                %v214 = vld [vmem:[%s152 + $0x170] sm:%s145]
                %215 = vst [vmem:[%s153 + $0xf0] sm:%s145] %v214
                %v216 = vld [vmem:[%s152 + $0x178] sm:%s145]
                %217 = vst [vmem:[%s153 + $0xf8] sm:%s145] %v216
                %v218 = vld [vmem:[%s152 + $0x200] sm:%s145]
                %219 = vst [vmem:[%s153 + $0x100] sm:%s145] %v218
                %v220 = vld [vmem:[%s152 + $0x208] sm:%s145]
                %221 = vst [vmem:[%s153 + $0x108] sm:%s145] %v220
                %v222 = vld [vmem:[%s152 + $0x210] sm:%s145]
                %223 = vst [vmem:[%s153 + $0x110] sm:%s145] %v222
                %v224 = vld [vmem:[%s152 + $0x218] sm:%s145]
                %225 = vst [vmem:[%s153 + $0x118] sm:%s145] %v224
                %v226 = vld [vmem:[%s152 + $0x220] sm:%s145]
                %227 = vst [vmem:[%s153 + $0x120] sm:%s145] %v226
                %v228 = vld [vmem:[%s152 + $0x228] sm:%s145]
                %229 = vst [vmem:[%s153 + $0x128] sm:%s145] %v228
                %v230 = vld [vmem:[%s152 + $0x230] sm:%s145]
                %231 = vst [vmem:[%s153 + $0x130] sm:%s145] %v230
                %v232 = vld [vmem:[%s152 + $0x238] sm:%s145]
                %233 = vst [vmem:[%s153 + $0x138] sm:%s145] %v232
                %v234 = vld [vmem:[%s152 + $0x240] sm:%s145]
                %235 = vst [vmem:[%s153 + $0x140] sm:%s145] %v234
                %v236 = vld [vmem:[%s152 + $0x248] sm:%s145]
                %237 = vst [vmem:[%s153 + $0x148] sm:%s145] %v236
                %v238 = vld [vmem:[%s152 + $0x250] sm:%s145]
                %239 = vst [vmem:[%s153 + $0x150] sm:%s145] %v238
                %v240 = vld [vmem:[%s152 + $0x258] sm:%s145]
                %241 = vst [vmem:[%s153 + $0x158] sm:%s145] %v240
                %v242 = vld [vmem:[%s152 + $0x260] sm:%s145]
                %243 = vst [vmem:[%s153 + $0x160] sm:%s145] %v242
                %v244 = vld [vmem:[%s152 + $0x268] sm:%s145]
                %245 = vst [vmem:[%s153 + $0x168] sm:%s145] %v244
                %v246 = vld [vmem:[%s152 + $0x270] sm:%s145]
                %247 = vst [vmem:[%s153 + $0x170] sm:%s145] %v246
                %v248 = vld [vmem:[%s152 + $0x278] sm:%s145]
                %249 = vst [vmem:[%s153 + $0x178] sm:%s145] %v248
                %v250 = vld [vmem:[%s152 + $0x300] sm:%s145]
                %251 = vst [vmem:[%s153 + $0x180] sm:%s145] %v250
                %v252 = vld [vmem:[%s152 + $0x308] sm:%s145]
                %253 = vst [vmem:[%s153 + $0x188] sm:%s145] %v252
                %v254 = vld [vmem:[%s152 + $0x310] sm:%s145]
                %255 = vst [vmem:[%s153 + $0x190] sm:%s145] %v254
                %v256 = vld [vmem:[%s152 + $0x318] sm:%s145]
                %257 = vst [vmem:[%s153 + $0x198] sm:%s145] %v256
                %v258 = vld [vmem:[%s152 + $0x320] sm:%s145]
                %259 = vst [vmem:[%s153 + $0x1a0] sm:%s145] %v258
                %v260 = vld [vmem:[%s152 + $0x328] sm:%s145]
                %261 = vst [vmem:[%s153 + $0x1a8] sm:%s145] %v260
                %v262 = vld [vmem:[%s152 + $0x330] sm:%s145]
                %263 = vst [vmem:[%s153 + $0x1b0] sm:%s145] %v262
                %v264 = vld [vmem:[%s152 + $0x338] sm:%s145]
                %265 = vst [vmem:[%s153 + $0x1b8] sm:%s145] %v264
                %v266 = vld [vmem:[%s152 + $0x340] sm:%s145]
                %267 = vst [vmem:[%s153 + $0x1c0] sm:%s145] %v266
                %v268 = vld [vmem:[%s152 + $0x348] sm:%s145]
                %269 = vst [vmem:[%s153 + $0x1c8] sm:%s145] %v268
                %v270 = vld [vmem:[%s152 + $0x350] sm:%s145]
                %271 = vst [vmem:[%s153 + $0x1d0] sm:%s145] %v270
                %v272 = vld [vmem:[%s152 + $0x358] sm:%s145]
                %273 = vst [vmem:[%s153 + $0x1d8] sm:%s145] %v272
                %v274 = vld [vmem:[%s152 + $0x360] sm:%s145]
                %275 = vst [vmem:[%s153 + $0x1e0] sm:%s145] %v274
                %v276 = vld [vmem:[%s152 + $0x368] sm:%s145]
                %277 = vst [vmem:[%s153 + $0x1e8] sm:%s145] %v276
                %v278 = vld [vmem:[%s152 + $0x370] sm:%s145]
                %279 = vst [vmem:[%s153 + $0x1f0] sm:%s145] %v278
                %v280 = vld [vmem:[%s152 + $0x378] sm:%s145]
                %281 = vst [vmem:[%s153 + $0x1f8] sm:%s145] %v280
                %v282 = vld [vmem:[%s152 + $0x400] sm:%s145]
                %283 = vst [vmem:[%s153 + $0x200] sm:%s145] %v282
                %v284 = vld [vmem:[%s152 + $0x408] sm:%s145]
                %285 = vst [vmem:[%s153 + $0x208] sm:%s145] %v284
                %v286 = vld [vmem:[%s152 + $0x410] sm:%s145]
                %287 = vst [vmem:[%s153 + $0x210] sm:%s145] %v286
                %v288 = vld [vmem:[%s152 + $0x418] sm:%s145]
                %289 = vst [vmem:[%s153 + $0x218] sm:%s145] %v288
                %v290 = vld [vmem:[%s152 + $0x420] sm:%s145]
                %291 = vst [vmem:[%s153 + $0x220] sm:%s145] %v290
                %v292 = vld [vmem:[%s152 + $0x428] sm:%s145]
                %293 = vst [vmem:[%s153 + $0x228] sm:%s145] %v292
                %v294 = vld [vmem:[%s152 + $0x430] sm:%s145]
                %295 = vst [vmem:[%s153 + $0x230] sm:%s145] %v294
                %v296 = vld [vmem:[%s152 + $0x438] sm:%s145]
                %297 = vst [vmem:[%s153 + $0x238] sm:%s145] %v296
                %v298 = vld [vmem:[%s152 + $0x440] sm:%s145]
                %299 = vst [vmem:[%s153 + $0x240] sm:%s145] %v298
                %v300 = vld [vmem:[%s152 + $0x448] sm:%s145]
                %301 = vst [vmem:[%s153 + $0x248] sm:%s145] %v300
                %v302 = vld [vmem:[%s152 + $0x450] sm:%s145]
                %303 = vst [vmem:[%s153 + $0x250] sm:%s145] %v302
                %v304 = vld [vmem:[%s152 + $0x458] sm:%s145]
                %305 = vst [vmem:[%s153 + $0x258] sm:%s145] %v304
                %v306 = vld [vmem:[%s152 + $0x460] sm:%s145]
                %307 = vst [vmem:[%s153 + $0x260] sm:%s145] %v306
                %v308 = vld [vmem:[%s152 + $0x468] sm:%s145]
                %309 = vst [vmem:[%s153 + $0x268] sm:%s145] %v308
                %v310 = vld [vmem:[%s152 + $0x470] sm:%s145]
                %311 = vst [vmem:[%s153 + $0x270] sm:%s145] %v310
                %v312 = vld [vmem:[%s152 + $0x478] sm:%s145]
                %313 = vst [vmem:[%s153 + $0x278] sm:%s145] %v312
                %v314 = vld [vmem:[%s152 + $0x500] sm:%s145]
                %315 = vst [vmem:[%s153 + $0x280] sm:%s145] %v314
                %v316 = vld [vmem:[%s152 + $0x508] sm:%s145]
                %317 = vst [vmem:[%s153 + $0x288] sm:%s145] %v316
                %v318 = vld [vmem:[%s152 + $0x510] sm:%s145]
                %319 = vst [vmem:[%s153 + $0x290] sm:%s145] %v318
                %v320 = vld [vmem:[%s152 + $0x518] sm:%s145]
                %321 = vst [vmem:[%s153 + $0x298] sm:%s145] %v320
                %v322 = vld [vmem:[%s152 + $0x520] sm:%s145]
                %323 = vst [vmem:[%s153 + $0x2a0] sm:%s145] %v322
                %v324 = vld [vmem:[%s152 + $0x528] sm:%s145]
                %325 = vst [vmem:[%s153 + $0x2a8] sm:%s145] %v324
                %v326 = vld [vmem:[%s152 + $0x530] sm:%s145]
                %327 = vst [vmem:[%s153 + $0x2b0] sm:%s145] %v326
                %v328 = vld [vmem:[%s152 + $0x538] sm:%s145]
                %329 = vst [vmem:[%s153 + $0x2b8] sm:%s145] %v328
                %v330 = vld [vmem:[%s152 + $0x540] sm:%s145]
                %331 = vst [vmem:[%s153 + $0x2c0] sm:%s145] %v330
                %v332 = vld [vmem:[%s152 + $0x548] sm:%s145]
                %333 = vst [vmem:[%s153 + $0x2c8] sm:%s145] %v332
                %v334 = vld [vmem:[%s152 + $0x550] sm:%s145]
                %335 = vst [vmem:[%s153 + $0x2d0] sm:%s145] %v334
                %v336 = vld [vmem:[%s152 + $0x558] sm:%s145]
                %337 = vst [vmem:[%s153 + $0x2d8] sm:%s145] %v336
                %v338 = vld [vmem:[%s152 + $0x560] sm:%s145]
                %339 = vst [vmem:[%s153 + $0x2e0] sm:%s145] %v338
                %v340 = vld [vmem:[%s152 + $0x568] sm:%s145]
                %341 = vst [vmem:[%s153 + $0x2e8] sm:%s145] %v340
                %v342 = vld [vmem:[%s152 + $0x570] sm:%s145]
                %343 = vst [vmem:[%s153 + $0x2f0] sm:%s145] %v342
                %v344 = vld [vmem:[%s152 + $0x578] sm:%s145]
                %345 = vst [vmem:[%s153 + $0x2f8] sm:%s145] %v344
                %v346 = vld [vmem:[%s152 + $0x600] sm:%s145]
                %347 = vst [vmem:[%s153 + $0x300] sm:%s145] %v346
                %v348 = vld [vmem:[%s152 + $0x608] sm:%s145]
                %349 = vst [vmem:[%s153 + $0x308] sm:%s145] %v348
                %v350 = vld [vmem:[%s152 + $0x610] sm:%s145]
                %351 = vst [vmem:[%s153 + $0x310] sm:%s145] %v350
                %v352 = vld [vmem:[%s152 + $0x618] sm:%s145]
                %353 = vst [vmem:[%s153 + $0x318] sm:%s145] %v352
                %v354 = vld [vmem:[%s152 + $0x620] sm:%s145]
                %355 = vst [vmem:[%s153 + $0x320] sm:%s145] %v354
                %v356 = vld [vmem:[%s152 + $0x628] sm:%s145]
                %357 = vst [vmem:[%s153 + $0x328] sm:%s145] %v356
                %v358 = vld [vmem:[%s152 + $0x630] sm:%s145]
                %359 = vst [vmem:[%s153 + $0x330] sm:%s145] %v358
                %v360 = vld [vmem:[%s152 + $0x638] sm:%s145]
                %361 = vst [vmem:[%s153 + $0x338] sm:%s145] %v360
                %v362 = vld [vmem:[%s152 + $0x640] sm:%s145]
                %363 = vst [vmem:[%s153 + $0x340] sm:%s145] %v362
                %v364 = vld [vmem:[%s152 + $0x648] sm:%s145]
                %365 = vst [vmem:[%s153 + $0x348] sm:%s145] %v364
                %v366 = vld [vmem:[%s152 + $0x650] sm:%s145]
                %367 = vst [vmem:[%s153 + $0x350] sm:%s145] %v366
                %v368 = vld [vmem:[%s152 + $0x658] sm:%s145]
                %369 = vst [vmem:[%s153 + $0x358] sm:%s145] %v368
                %v370 = vld [vmem:[%s152 + $0x660] sm:%s145]
                %371 = vst [vmem:[%s153 + $0x360] sm:%s145] %v370
                %v372 = vld [vmem:[%s152 + $0x668] sm:%s145]
                %373 = vst [vmem:[%s153 + $0x368] sm:%s145] %v372
                %v374 = vld [vmem:[%s152 + $0x670] sm:%s145]
                %375 = vst [vmem:[%s153 + $0x370] sm:%s145] %v374
                %v376 = vld [vmem:[%s152 + $0x678] sm:%s145]
                %377 = vst [vmem:[%s153 + $0x378] sm:%s145] %v376
                %v378 = vld [vmem:[%s152 + $0x700] sm:%s145]
                %379 = vst [vmem:[%s153 + $0x380] sm:%s145] %v378
                %v380 = vld [vmem:[%s152 + $0x708] sm:%s145]
                %381 = vst [vmem:[%s153 + $0x388] sm:%s145] %v380
                %v382 = vld [vmem:[%s152 + $0x710] sm:%s145]
                %383 = vst [vmem:[%s153 + $0x390] sm:%s145] %v382
                %v384 = vld [vmem:[%s152 + $0x718] sm:%s145]
                %385 = vst [vmem:[%s153 + $0x398] sm:%s145] %v384
                %v386 = vld [vmem:[%s152 + $0x720] sm:%s145]
                %387 = vst [vmem:[%s153 + $0x3a0] sm:%s145] %v386
                %v388 = vld [vmem:[%s152 + $0x728] sm:%s145]
                %389 = vst [vmem:[%s153 + $0x3a8] sm:%s145] %v388
                %v390 = vld [vmem:[%s152 + $0x730] sm:%s145]
                %391 = vst [vmem:[%s153 + $0x3b0] sm:%s145] %v390
                %v392 = vld [vmem:[%s152 + $0x738] sm:%s145]
                %393 = vst [vmem:[%s153 + $0x3b8] sm:%s145] %v392
                %v394 = vld [vmem:[%s152 + $0x740] sm:%s145]
                %395 = vst [vmem:[%s153 + $0x3c0] sm:%s145] %v394
                %v396 = vld [vmem:[%s152 + $0x748] sm:%s145]
                %397 = vst [vmem:[%s153 + $0x3c8] sm:%s145] %v396
                %v398 = vld [vmem:[%s152 + $0x750] sm:%s145]
                %399 = vst [vmem:[%s153 + $0x3d0] sm:%s145] %v398
                %v400 = vld [vmem:[%s152 + $0x758] sm:%s145]
                %401 = vst [vmem:[%s153 + $0x3d8] sm:%s145] %v400
                %v402 = vld [vmem:[%s152 + $0x760] sm:%s145]
                %403 = vst [vmem:[%s153 + $0x3e0] sm:%s145] %v402
                %v404 = vld [vmem:[%s152 + $0x768] sm:%s145]
                %405 = vst [vmem:[%s153 + $0x3e8] sm:%s145] %v404
                %v406 = vld [vmem:[%s152 + $0x770] sm:%s145]
                %407 = vst [vmem:[%s153 + $0x3f0] sm:%s145] %v406
                %v408 = vld [vmem:[%s152 + $0x778] sm:%s145]
                %409 = vst [vmem:[%s153 + $0x3f8] sm:%s145] %v408
              $region45: #{tpu_custom_call.1} parent=39 // loop_footer
                %s151 = sadd.s32 1, %s147
              $region46: #{tpu_custom_call.1} parent=39 // loop_footer_branch
                %146 = sbr.rel target = $region42
              $region47: #{tpu_custom_call.1} parent=39 // loop_exit
                _
            $region40: #{tpu_custom_call.1} parent=31 // pred_fallthru
              _
          $region32: #{tpu_custom_call.1} parent=27 // pred_fallthru
            _
          %678 = vnop
        $region28: #{tpu_custom_call.1} parent=23 // pred_fallthru
          _
      $region24: #{tpu_custom_call.1} parent=5 // pred_fallthru
        _
      %p679 = scmp.le.s32.totalorder 1, %s9
      %p680 = scmp.lt.s32.totalorder %s9, 3
      %p681 = pnand %p679, %p680
      %p682 = pneg %p681
      // Predicated region
      $region63: #{tpu_custom_call.1} parent=5 // pred_check
        _
      $region64: #{tpu_custom_call.1} parent=5 // pred_check_branch
        %684 = sbr.rel (%p681) target = $region66
      $region65: #{tpu_custom_call.1} parent=5 // pred_region
        %s685 = ssub.s32 %s9, 1
        %s686 = sand.u32 %s22, 1
        %s687 = sand.u32 %s22, 1
        %s688 = smul.addr %s687, 1024
        %s689 = scalar_lea.vmem [#allocation2], %s688
        // Predicated region
        $region67: #{tpu_custom_call.1} parent=65 // pred_check
          %p690 = pneg %p35
        $region68: #{tpu_custom_call.1} parent=65 // pred_check_branch
          %692 = sbr.rel (%p690) target = $region70
        $region69: #{tpu_custom_call.1} parent=65 // pred_region
          _
        $region70: #{tpu_custom_call.1} parent=65 // pred_fallthru
          _
        %s693 = sand.u32 %s22, 1
        %s694 = sand.u32 %s22, 1
        %s695 = smul.addr %s694, 1024
        %s696 = scalar_lea.vmem [#allocation2], %s695
        %p697 = pneg %p35
        %p698 = pneg %p32
        %p699 = pneg %p56
        %p700 = pneg %p53
        %p701 = pneg %p77
        %p702 = pneg %p74
        %p703 = pneg %p103
        %p704 = pneg %p100
        %s705 = smul.u32 16, %s14
        %p706 = scmp.lt.s32.totalorder %s705, 31
        %s707 = scalar_select %p706, %s705, 31
        %s708 = smul.addr %s707, 8
        %s709 = scalar_lea.vmem %s3, %s708
        %s710 = smul.u32 16, %s14
        %s711 = smul.u32 16, %s14
        %p712 = scmp.lt.s32.totalorder %s711, 31
        %s713 = scalar_select %p712, %s711, 31
        %s714 = smul.addr %s713, 8
        %s715 = scalar_lea.vmem %s3, %s714
        %s716 = smul.u32 16, %s14
        %v717 = vld [vmem:[%s689] sm:$0xff]
        %v718 = vld [vmem:[%s689 + $0x8] sm:$0xff]
        %v719 = vld [vmem:[%s689 + $0x10] sm:$0xff]
        %v720 = vld [vmem:[%s689 + $0x18] sm:$0xff]
        %v721 = vld [vmem:[%s689 + $0x20] sm:$0xff]
        %v722 = vld [vmem:[%s689 + $0x28] sm:$0xff]
        %v723 = vld [vmem:[%s689 + $0x30] sm:$0xff]
        %v724 = vld [vmem:[%s689 + $0x38] sm:$0xff]
        %v725 = vld [vmem:[%s689 + $0x40] sm:$0xff]
        %v726 = vld [vmem:[%s689 + $0x48] sm:$0xff]
        %v727 = vld [vmem:[%s689 + $0x50] sm:$0xff]
        %v728 = vld [vmem:[%s689 + $0x58] sm:$0xff]
        %v729 = vld [vmem:[%s689 + $0x60] sm:$0xff]
        %v730 = vld [vmem:[%s689 + $0x68] sm:$0xff]
        %v731 = vld [vmem:[%s689 + $0x70] sm:$0xff]
        %v732 = vld [vmem:[%s689 + $0x78] sm:$0xff]
        %v733 = vld [vmem:[%s689 + $0x80] sm:$0xff]
        %v734 = vld [vmem:[%s689 + $0x88] sm:$0xff]
        %v735 = vld [vmem:[%s689 + $0x90] sm:$0xff]
        %v736 = vld [vmem:[%s689 + $0x98] sm:$0xff]
        %v737 = vld [vmem:[%s689 + $0xa0] sm:$0xff]
        %v738 = vld [vmem:[%s689 + $0xa8] sm:$0xff]
        %v739 = vld [vmem:[%s689 + $0xb0] sm:$0xff]
        %v740 = vld [vmem:[%s689 + $0xb8] sm:$0xff]
        %v741 = vld [vmem:[%s689 + $0xc0] sm:$0xff]
        %v742 = vld [vmem:[%s689 + $0xc8] sm:$0xff]
        %v743 = vld [vmem:[%s689 + $0xd0] sm:$0xff]
        %v744 = vld [vmem:[%s689 + $0xd8] sm:$0xff]
        %v745 = vld [vmem:[%s689 + $0xe0] sm:$0xff]
        %v746 = vld [vmem:[%s689 + $0xe8] sm:$0xff]
        %v747 = vld [vmem:[%s689 + $0xf0] sm:$0xff]
        %v748 = vld [vmem:[%s689 + $0xf8] sm:$0xff]
        %v749 = vld [vmem:[%s689 + $0x100] sm:$0xff]
        %v750 = vld [vmem:[%s689 + $0x108] sm:$0xff]
        %v751 = vld [vmem:[%s689 + $0x110] sm:$0xff]
        %v752 = vld [vmem:[%s689 + $0x118] sm:$0xff]
        %v753 = vld [vmem:[%s689 + $0x120] sm:$0xff]
        %v754 = vld [vmem:[%s689 + $0x128] sm:$0xff]
        %v755 = vld [vmem:[%s689 + $0x130] sm:$0xff]
        %v756 = vld [vmem:[%s689 + $0x138] sm:$0xff]
        %v757 = vld [vmem:[%s689 + $0x140] sm:$0xff]
        %v758 = vld [vmem:[%s689 + $0x148] sm:$0xff]
        %v759 = vld [vmem:[%s689 + $0x150] sm:$0xff]
        %v760 = vld [vmem:[%s689 + $0x158] sm:$0xff]
        %v761 = vld [vmem:[%s689 + $0x160] sm:$0xff]
        %v762 = vld [vmem:[%s689 + $0x168] sm:$0xff]
        %v763 = vld [vmem:[%s689 + $0x170] sm:$0xff]
        %v764 = vld [vmem:[%s689 + $0x178] sm:$0xff]
        %v765 = vld [vmem:[%s689 + $0x180] sm:$0xff]
        %v766 = vld [vmem:[%s689 + $0x188] sm:$0xff]
        %v767 = vld [vmem:[%s689 + $0x190] sm:$0xff]
        %v768 = vld [vmem:[%s689 + $0x198] sm:$0xff]
        %v769 = vld [vmem:[%s689 + $0x1a0] sm:$0xff]
        %v770 = vld [vmem:[%s689 + $0x1a8] sm:$0xff]
        %v771 = vld [vmem:[%s689 + $0x1b0] sm:$0xff]
        %v772 = vld [vmem:[%s689 + $0x1b8] sm:$0xff]
        %v773 = vld [vmem:[%s689 + $0x1c0] sm:$0xff]
        %v774 = vld [vmem:[%s689 + $0x1c8] sm:$0xff]
        %v775 = vld [vmem:[%s689 + $0x1d0] sm:$0xff]
        %v776 = vld [vmem:[%s689 + $0x1d8] sm:$0xff]
        %v777 = vld [vmem:[%s689 + $0x1e0] sm:$0xff]
        %v778 = vld [vmem:[%s689 + $0x1e8] sm:$0xff]
        %v779 = vld [vmem:[%s689 + $0x1f0] sm:$0xff]
        %v780 = vld [vmem:[%s689 + $0x1f8] sm:$0xff]
        %v781 = vld [vmem:[%s689 + $0x200] sm:$0xff]
        %v782 = vld [vmem:[%s689 + $0x208] sm:$0xff]
        %v783 = vld [vmem:[%s689 + $0x210] sm:$0xff]
        %v784 = vld [vmem:[%s689 + $0x218] sm:$0xff]
        %v785 = vld [vmem:[%s689 + $0x220] sm:$0xff]
        %v786 = vld [vmem:[%s689 + $0x228] sm:$0xff]
        %v787 = vld [vmem:[%s689 + $0x230] sm:$0xff]
        %v788 = vld [vmem:[%s689 + $0x238] sm:$0xff]
        %v789 = vld [vmem:[%s689 + $0x240] sm:$0xff]
        %v790 = vld [vmem:[%s689 + $0x248] sm:$0xff]
        %v791 = vld [vmem:[%s689 + $0x250] sm:$0xff]
        %v792 = vld [vmem:[%s689 + $0x258] sm:$0xff]
        %v793 = vld [vmem:[%s689 + $0x260] sm:$0xff]
        %v794 = vld [vmem:[%s689 + $0x268] sm:$0xff]
        %v795 = vld [vmem:[%s689 + $0x270] sm:$0xff]
        %v796 = vld [vmem:[%s689 + $0x278] sm:$0xff]
        %v797 = vld [vmem:[%s689 + $0x280] sm:$0xff]
        %v798 = vld [vmem:[%s689 + $0x288] sm:$0xff]
        %v799 = vld [vmem:[%s689 + $0x290] sm:$0xff]
        %v800 = vld [vmem:[%s689 + $0x298] sm:$0xff]
        %v801 = vld [vmem:[%s689 + $0x2a0] sm:$0xff]
        %v802 = vld [vmem:[%s689 + $0x2a8] sm:$0xff]
        %v803 = vld [vmem:[%s689 + $0x2b0] sm:$0xff]
        %v804 = vld [vmem:[%s689 + $0x2b8] sm:$0xff]
        %v805 = vld [vmem:[%s689 + $0x2c0] sm:$0xff]
        %v806 = vld [vmem:[%s689 + $0x2c8] sm:$0xff]
        %v807 = vld [vmem:[%s689 + $0x2d0] sm:$0xff]
        %v808 = vld [vmem:[%s689 + $0x2d8] sm:$0xff]
        %v809 = vld [vmem:[%s689 + $0x2e0] sm:$0xff]
        %v810 = vld [vmem:[%s689 + $0x2e8] sm:$0xff]
        %v811 = vld [vmem:[%s689 + $0x2f0] sm:$0xff]
        %v812 = vld [vmem:[%s689 + $0x2f8] sm:$0xff]
        %v813 = vld [vmem:[%s689 + $0x300] sm:$0xff]
        %v814 = vld [vmem:[%s689 + $0x308] sm:$0xff]
        %v815 = vld [vmem:[%s689 + $0x310] sm:$0xff]
        %v816 = vld [vmem:[%s689 + $0x318] sm:$0xff]
        %v817 = vld [vmem:[%s689 + $0x320] sm:$0xff]
        %v818 = vld [vmem:[%s689 + $0x328] sm:$0xff]
        %v819 = vld [vmem:[%s689 + $0x330] sm:$0xff]
        %v820 = vld [vmem:[%s689 + $0x338] sm:$0xff]
        %v821 = vld [vmem:[%s689 + $0x340] sm:$0xff]
        %v822 = vld [vmem:[%s689 + $0x348] sm:$0xff]
        %v823 = vld [vmem:[%s689 + $0x350] sm:$0xff]
        %v824 = vld [vmem:[%s689 + $0x358] sm:$0xff]
        %v825 = vld [vmem:[%s689 + $0x360] sm:$0xff]
        %v826 = vld [vmem:[%s689 + $0x368] sm:$0xff]
        %v827 = vld [vmem:[%s689 + $0x370] sm:$0xff]
        %v828 = vld [vmem:[%s689 + $0x378] sm:$0xff]
        %v829 = vld [vmem:[%s689 + $0x380] sm:$0xff]
        %v830 = vld [vmem:[%s689 + $0x388] sm:$0xff]
        %v831 = vld [vmem:[%s689 + $0x390] sm:$0xff]
        %v832 = vld [vmem:[%s689 + $0x398] sm:$0xff]
        %v833 = vld [vmem:[%s689 + $0x3a0] sm:$0xff]
        %v834 = vld [vmem:[%s689 + $0x3a8] sm:$0xff]
        %v835 = vld [vmem:[%s689 + $0x3b0] sm:$0xff]
        %v836 = vld [vmem:[%s689 + $0x3b8] sm:$0xff]
        %v837 = vld [vmem:[%s689 + $0x3c0] sm:$0xff]
        %v838 = vld [vmem:[%s689 + $0x3c8] sm:$0xff]
        %v839 = vld [vmem:[%s689 + $0x3d0] sm:$0xff]
        %v840 = vld [vmem:[%s689 + $0x3d8] sm:$0xff]
        %v841 = vld [vmem:[%s689 + $0x3e0] sm:$0xff]
        %v842 = vld [vmem:[%s689 + $0x3e8] sm:$0xff]
        %v843 = vld [vmem:[%s689 + $0x3f0] sm:$0xff]
        %v844 = vld [vmem:[%s689 + $0x3f8] sm:$0xff]
        %v845 = vld [vmem:[%s1] sm:$0xff]
        %v846 = vld [vmem:[%s1 + $0x8] sm:$0xff]
        %v847 = vld [vmem:[%s2] sm:$0x1]
        %v848 = vperm.slane %v847, 0
        %vm849 = vcmask 130048
        %v851 = vsel %vm849, %v717, 0
        %v854 = vsel %vm849, %v718, 0
        %v857 = vsel %vm849, %v719, 0
        %v860 = vsel %vm849, %v720, 0
        %v863 = vsel %vm849, %v721, 0
        %v866 = vsel %vm849, %v722, 0
        %v869 = vsel %vm849, %v723, 0
        %v872 = vsel %vm849, %v724, 0
        %v875 = vsel %vm849, %v725, 0
        %v878 = vsel %vm849, %v726, 0
        %v881 = vsel %vm849, %v727, 0
        %v884 = vsel %vm849, %v728, 0
        %v887 = vsel %vm849, %v729, 0
        %v890 = vsel %vm849, %v730, 0
        %v893 = vsel %vm849, %v731, 0
        %v896 = vsel %vm849, %v732, 0
        %v899 = vsel %vm849, %v733, 0
        %v902 = vsel %vm849, %v734, 0
        %v905 = vsel %vm849, %v735, 0
        %v908 = vsel %vm849, %v736, 0
        %v911 = vsel %vm849, %v737, 0
        %v914 = vsel %vm849, %v738, 0
        %v917 = vsel %vm849, %v739, 0
        %v920 = vsel %vm849, %v740, 0
        %v923 = vsel %vm849, %v741, 0
        %v926 = vsel %vm849, %v742, 0
        %v929 = vsel %vm849, %v743, 0
        %v932 = vsel %vm849, %v744, 0
        %v935 = vsel %vm849, %v745, 0
        %v938 = vsel %vm849, %v746, 0
        %v941 = vsel %vm849, %v747, 0
        %v944 = vsel %vm849, %v748, 0
        %v947 = vsel %vm849, %v749, 0
        %v950 = vsel %vm849, %v750, 0
        %v953 = vsel %vm849, %v751, 0
        %v956 = vsel %vm849, %v752, 0
        %v959 = vsel %vm849, %v753, 0
        %v962 = vsel %vm849, %v754, 0
        %v965 = vsel %vm849, %v755, 0
        %v968 = vsel %vm849, %v756, 0
        %v971 = vsel %vm849, %v757, 0
        %v974 = vsel %vm849, %v758, 0
        %v977 = vsel %vm849, %v759, 0
        %v980 = vsel %vm849, %v760, 0
        %v983 = vsel %vm849, %v761, 0
        %v986 = vsel %vm849, %v762, 0
        %v989 = vsel %vm849, %v763, 0
        %v992 = vsel %vm849, %v764, 0
        %v995 = vsel %vm849, %v765, 0
        %v998 = vsel %vm849, %v766, 0
        %v1001 = vsel %vm849, %v767, 0
        %v1004 = vsel %vm849, %v768, 0
        %v1007 = vsel %vm849, %v769, 0
        %v1010 = vsel %vm849, %v770, 0
        %v1013 = vsel %vm849, %v771, 0
        %v1016 = vsel %vm849, %v772, 0
        %v1019 = vsel %vm849, %v773, 0
        %v1022 = vsel %vm849, %v774, 0
        %v1025 = vsel %vm849, %v775, 0
        %v1028 = vsel %vm849, %v776, 0
        %v1031 = vsel %vm849, %v777, 0
        %v1034 = vsel %vm849, %v778, 0
        %v1037 = vsel %vm849, %v779, 0
        %v1040 = vsel %vm849, %v780, 0
        %v1043 = vsel %vm849, %v781, 0
        %v1046 = vsel %vm849, %v782, 0
        %v1049 = vsel %vm849, %v783, 0
        %v1052 = vsel %vm849, %v784, 0
        %v1055 = vsel %vm849, %v785, 0
        %v1058 = vsel %vm849, %v786, 0
        %v1061 = vsel %vm849, %v787, 0
        %v1064 = vsel %vm849, %v788, 0
        %v1067 = vsel %vm849, %v789, 0
        %v1070 = vsel %vm849, %v790, 0
        %v1073 = vsel %vm849, %v791, 0
        %v1076 = vsel %vm849, %v792, 0
        %v1079 = vsel %vm849, %v793, 0
        %v1082 = vsel %vm849, %v794, 0
        %v1085 = vsel %vm849, %v795, 0
        %v1088 = vsel %vm849, %v796, 0
        %v1091 = vsel %vm849, %v797, 0
        %v1094 = vsel %vm849, %v798, 0
        %v1097 = vsel %vm849, %v799, 0
        %v1100 = vsel %vm849, %v800, 0
        %v1103 = vsel %vm849, %v801, 0
        %v1106 = vsel %vm849, %v802, 0
        %v1109 = vsel %vm849, %v803, 0
        %v1112 = vsel %vm849, %v804, 0
        %v1115 = vsel %vm849, %v805, 0
        %v1118 = vsel %vm849, %v806, 0
        %v1121 = vsel %vm849, %v807, 0
        %v1124 = vsel %vm849, %v808, 0
        %v1127 = vsel %vm849, %v809, 0
        %v1130 = vsel %vm849, %v810, 0
        %v1133 = vsel %vm849, %v811, 0
        %v1136 = vsel %vm849, %v812, 0
        %v1139 = vsel %vm849, %v813, 0
        %v1142 = vsel %vm849, %v814, 0
        %v1145 = vsel %vm849, %v815, 0
        %v1148 = vsel %vm849, %v816, 0
        %v1151 = vsel %vm849, %v817, 0
        %v1154 = vsel %vm849, %v818, 0
        %v1157 = vsel %vm849, %v819, 0
        %v1160 = vsel %vm849, %v820, 0
        %v1163 = vsel %vm849, %v821, 0
        %v1166 = vsel %vm849, %v822, 0
        %v1169 = vsel %vm849, %v823, 0
        %v1172 = vsel %vm849, %v824, 0
        %v1175 = vsel %vm849, %v825, 0
        %v1178 = vsel %vm849, %v826, 0
        %v1181 = vsel %vm849, %v827, 0
        %v1184 = vsel %vm849, %v828, 0
        %v1187 = vsel %vm849, %v829, 0
        %v1190 = vsel %vm849, %v830, 0
        %v1193 = vsel %vm849, %v831, 0
        %v1196 = vsel %vm849, %v832, 0
        %v1199 = vsel %vm849, %v833, 0
        %v1202 = vsel %vm849, %v834, 0
        %v1205 = vsel %vm849, %v835, 0
        %v1208 = vsel %vm849, %v836, 0
        %v1211 = vsel %vm849, %v837, 0
        %v1214 = vsel %vm849, %v838, 0
        %v1217 = vsel %vm849, %v839, 0
        %v1220 = vsel %vm849, %v840, 0
        %v1223 = vsel %vm849, %v841, 0
        %v1226 = vsel %vm849, %v842, 0
        %v1229 = vsel %vm849, %v843, 0
        %v1232 = vsel %vm849, %v844, 0
        %1234 = vmatpush.msra.mxu0 0.0
        %1235 = vmatpush.msra.mxu0 0.0
        %1236 = vmatpush.msra.mxu0 0.0
        %1237 = vmatpush.msra.mxu0 0.0
        %1238 = vmatpush.msra.mxu0 0.0
        %1239 = vmatpush.msra.mxu0 0.0
        %1240 = vmatpush.msra.mxu0 0.0
        %1241 = vmatpush.msra.mxu0 0.0
        %1242 = vmatpush.msra.mxu0 0.0
        %1243 = vmatpush.msra.mxu0 0.0
        %1244 = vmatpush.msra.mxu0 0.0
        %1245 = vmatpush.msra.mxu0 0.0
        %1246 = vmatpush.msra.mxu0 0.0
        %1247 = vmatpush.msra.mxu0 0.0
        %1248 = vmatpush.msra.mxu0 %v846
        %1249 = vmatpush.msra.mxu0 %v845
        %1250 = vmatmul.f32.gmra.mxu0 %v851
        %v1251 = vpop.f32.mrf.mxu0
        %v1252 = vadd.f32 %v848, %v1251
        %1253 = vmatmul.f32.gmra.mxu0 %v854
        %v1254 = vpop.f32.mrf.mxu0
        %v1255 = vadd.f32 %v848, %v1254
        %1256 = vmatmul.f32.gmra.mxu0 %v857
        %v1257 = vpop.f32.mrf.mxu0
        %v1258 = vadd.f32 %v848, %v1257
        %1259 = vmatmul.f32.gmra.mxu0 %v860
        %v1260 = vpop.f32.mrf.mxu0
        %v1261 = vadd.f32 %v848, %v1260
        %1262 = vmatmul.f32.gmra.mxu0 %v863
        %v1263 = vpop.f32.mrf.mxu0
        %v1264 = vadd.f32 %v848, %v1263
        %1265 = vmatmul.f32.gmra.mxu0 %v866
        %v1266 = vpop.f32.mrf.mxu0
        %v1267 = vadd.f32 %v848, %v1266
        %1268 = vmatmul.f32.gmra.mxu0 %v869
        %v1269 = vpop.f32.mrf.mxu0
        %v1270 = vadd.f32 %v848, %v1269
        %1271 = vmatmul.f32.gmra.mxu0 %v872
        %v1272 = vpop.f32.mrf.mxu0
        %v1273 = vadd.f32 %v848, %v1272
        %1274 = vmatmul.f32.gmra.mxu0 %v875
        %v1275 = vpop.f32.mrf.mxu0
        %v1276 = vadd.f32 %v848, %v1275
        %1277 = vmatmul.f32.gmra.mxu0 %v878
        %v1278 = vpop.f32.mrf.mxu0
        %v1279 = vadd.f32 %v848, %v1278
        %1280 = vmatmul.f32.gmra.mxu0 %v881
        %v1281 = vpop.f32.mrf.mxu0
        %v1282 = vadd.f32 %v848, %v1281
        %1283 = vmatmul.f32.gmra.mxu0 %v884
        %v1284 = vpop.f32.mrf.mxu0
        %v1285 = vadd.f32 %v848, %v1284
        %1286 = vmatmul.f32.gmra.mxu0 %v887
        %v1287 = vpop.f32.mrf.mxu0
        %v1288 = vadd.f32 %v848, %v1287
        %1289 = vmatmul.f32.gmra.mxu0 %v890
        %v1290 = vpop.f32.mrf.mxu0
        %v1291 = vadd.f32 %v848, %v1290
        %1292 = vmatmul.f32.gmra.mxu0 %v893
        %v1293 = vpop.f32.mrf.mxu0
        %v1294 = vadd.f32 %v848, %v1293
        %1295 = vmatmul.f32.gmra.mxu0 %v896
        %v1296 = vpop.f32.mrf.mxu0
        %v1297 = vadd.f32 %v848, %v1296
        %1298 = vmatmul.f32.gmra.mxu0 %v899
        %v1299 = vpop.f32.mrf.mxu0
        %v1300 = vadd.f32 %v848, %v1299
        %1301 = vmatmul.f32.gmra.mxu0 %v902
        %v1302 = vpop.f32.mrf.mxu0
        %v1303 = vadd.f32 %v848, %v1302
        %1304 = vmatmul.f32.gmra.mxu0 %v905
        %v1305 = vpop.f32.mrf.mxu0
        %v1306 = vadd.f32 %v848, %v1305
        %1307 = vmatmul.f32.gmra.mxu0 %v908
        %v1308 = vpop.f32.mrf.mxu0
        %v1309 = vadd.f32 %v848, %v1308
        %1310 = vmatmul.f32.gmra.mxu0 %v911
        %v1311 = vpop.f32.mrf.mxu0
        %v1312 = vadd.f32 %v848, %v1311
        %1313 = vmatmul.f32.gmra.mxu0 %v914
        %v1314 = vpop.f32.mrf.mxu0
        %v1315 = vadd.f32 %v848, %v1314
        %1316 = vmatmul.f32.gmra.mxu0 %v917
        %v1317 = vpop.f32.mrf.mxu0
        %v1318 = vadd.f32 %v848, %v1317
        %1319 = vmatmul.f32.gmra.mxu0 %v920
        %v1320 = vpop.f32.mrf.mxu0
        %v1321 = vadd.f32 %v848, %v1320
        %1322 = vmatmul.f32.gmra.mxu0 %v923
        %v1323 = vpop.f32.mrf.mxu0
        %v1324 = vadd.f32 %v848, %v1323
        %1325 = vmatmul.f32.gmra.mxu0 %v926
        %v1326 = vpop.f32.mrf.mxu0
        %v1327 = vadd.f32 %v848, %v1326
        %1328 = vmatmul.f32.gmra.mxu0 %v929
        %v1329 = vpop.f32.mrf.mxu0
        %v1330 = vadd.f32 %v848, %v1329
        %1331 = vmatmul.f32.gmra.mxu0 %v932
        %v1332 = vpop.f32.mrf.mxu0
        %v1333 = vadd.f32 %v848, %v1332
        %1334 = vmatmul.f32.gmra.mxu0 %v935
        %v1335 = vpop.f32.mrf.mxu0
        %v1336 = vadd.f32 %v848, %v1335
        %1337 = vmatmul.f32.gmra.mxu0 %v938
        %v1338 = vpop.f32.mrf.mxu0
        %v1339 = vadd.f32 %v848, %v1338
        %1340 = vmatmul.f32.gmra.mxu0 %v941
        %v1341 = vpop.f32.mrf.mxu0
        %v1342 = vadd.f32 %v848, %v1341
        %1343 = vmatmul.f32.gmra.mxu0 %v944
        %v1344 = vpop.f32.mrf.mxu0
        %v1345 = vadd.f32 %v848, %v1344
        %1346 = vmatmul.f32.gmra.mxu0 %v947
        %v1347 = vpop.f32.mrf.mxu0
        %v1348 = vadd.f32 %v848, %v1347
        %1349 = vmatmul.f32.gmra.mxu0 %v950
        %v1350 = vpop.f32.mrf.mxu0
        %v1351 = vadd.f32 %v848, %v1350
        %1352 = vmatmul.f32.gmra.mxu0 %v953
        %v1353 = vpop.f32.mrf.mxu0
        %v1354 = vadd.f32 %v848, %v1353
        %1355 = vmatmul.f32.gmra.mxu0 %v956
        %v1356 = vpop.f32.mrf.mxu0
        %v1357 = vadd.f32 %v848, %v1356
        %1358 = vmatmul.f32.gmra.mxu0 %v959
        %v1359 = vpop.f32.mrf.mxu0
        %v1360 = vadd.f32 %v848, %v1359
        %1361 = vmatmul.f32.gmra.mxu0 %v962
        %v1362 = vpop.f32.mrf.mxu0
        %v1363 = vadd.f32 %v848, %v1362
        %1364 = vmatmul.f32.gmra.mxu0 %v965
        %v1365 = vpop.f32.mrf.mxu0
        %v1366 = vadd.f32 %v848, %v1365
        %1367 = vmatmul.f32.gmra.mxu0 %v968
        %v1368 = vpop.f32.mrf.mxu0
        %v1369 = vadd.f32 %v848, %v1368
        %1370 = vmatmul.f32.gmra.mxu0 %v971
        %v1371 = vpop.f32.mrf.mxu0
        %v1372 = vadd.f32 %v848, %v1371
        %1373 = vmatmul.f32.gmra.mxu0 %v974
        %v1374 = vpop.f32.mrf.mxu0
        %v1375 = vadd.f32 %v848, %v1374
        %1376 = vmatmul.f32.gmra.mxu0 %v977
        %v1377 = vpop.f32.mrf.mxu0
        %v1378 = vadd.f32 %v848, %v1377
        %1379 = vmatmul.f32.gmra.mxu0 %v980
        %v1380 = vpop.f32.mrf.mxu0
        %v1381 = vadd.f32 %v848, %v1380
        %1382 = vmatmul.f32.gmra.mxu0 %v983
        %v1383 = vpop.f32.mrf.mxu0
        %v1384 = vadd.f32 %v848, %v1383
        %1385 = vmatmul.f32.gmra.mxu0 %v986
        %v1386 = vpop.f32.mrf.mxu0
        %v1387 = vadd.f32 %v848, %v1386
        %1388 = vmatmul.f32.gmra.mxu0 %v989
        %v1389 = vpop.f32.mrf.mxu0
        %v1390 = vadd.f32 %v848, %v1389
        %1391 = vmatmul.f32.gmra.mxu0 %v992
        %v1392 = vpop.f32.mrf.mxu0
        %v1393 = vadd.f32 %v848, %v1392
        %1394 = vmatmul.f32.gmra.mxu0 %v995
        %v1395 = vpop.f32.mrf.mxu0
        %v1396 = vadd.f32 %v848, %v1395
        %1397 = vmatmul.f32.gmra.mxu0 %v998
        %v1398 = vpop.f32.mrf.mxu0
        %v1399 = vadd.f32 %v848, %v1398
        %1400 = vmatmul.f32.gmra.mxu0 %v1001
        %v1401 = vpop.f32.mrf.mxu0
        %v1402 = vadd.f32 %v848, %v1401
        %1403 = vmatmul.f32.gmra.mxu0 %v1004
        %v1404 = vpop.f32.mrf.mxu0
        %v1405 = vadd.f32 %v848, %v1404
        %1406 = vmatmul.f32.gmra.mxu0 %v1007
        %v1407 = vpop.f32.mrf.mxu0
        %v1408 = vadd.f32 %v848, %v1407
        %1409 = vmatmul.f32.gmra.mxu0 %v1010
        %v1410 = vpop.f32.mrf.mxu0
        %v1411 = vadd.f32 %v848, %v1410
        %1412 = vmatmul.f32.gmra.mxu0 %v1013
        %v1413 = vpop.f32.mrf.mxu0
        %v1414 = vadd.f32 %v848, %v1413
        %1415 = vmatmul.f32.gmra.mxu0 %v1016
        %v1416 = vpop.f32.mrf.mxu0
        %v1417 = vadd.f32 %v848, %v1416
        %1418 = vmatmul.f32.gmra.mxu0 %v1019
        %v1419 = vpop.f32.mrf.mxu0
        %v1420 = vadd.f32 %v848, %v1419
        %1421 = vmatmul.f32.gmra.mxu0 %v1022
        %v1422 = vpop.f32.mrf.mxu0
        %v1423 = vadd.f32 %v848, %v1422
        %1424 = vmatmul.f32.gmra.mxu0 %v1025
        %v1425 = vpop.f32.mrf.mxu0
        %v1426 = vadd.f32 %v848, %v1425
        %1427 = vmatmul.f32.gmra.mxu0 %v1028
        %v1428 = vpop.f32.mrf.mxu0
        %v1429 = vadd.f32 %v848, %v1428
        %1430 = vmatmul.f32.gmra.mxu0 %v1031
        %v1431 = vpop.f32.mrf.mxu0
        %v1432 = vadd.f32 %v848, %v1431
        %1433 = vmatmul.f32.gmra.mxu0 %v1034
        %v1434 = vpop.f32.mrf.mxu0
        %v1435 = vadd.f32 %v848, %v1434
        %1436 = vmatmul.f32.gmra.mxu0 %v1037
        %v1437 = vpop.f32.mrf.mxu0
        %v1438 = vadd.f32 %v848, %v1437
        %1439 = vmatmul.f32.gmra.mxu0 %v1040
        %v1440 = vpop.f32.mrf.mxu0
        %v1441 = vadd.f32 %v848, %v1440
        %1442 = vmatmul.f32.gmra.mxu0 %v1043
        %v1443 = vpop.f32.mrf.mxu0
        %v1444 = vadd.f32 %v848, %v1443
        %1445 = vmatmul.f32.gmra.mxu0 %v1046
        %v1446 = vpop.f32.mrf.mxu0
        %v1447 = vadd.f32 %v848, %v1446
        %1448 = vmatmul.f32.gmra.mxu0 %v1049
        %v1449 = vpop.f32.mrf.mxu0
        %v1450 = vadd.f32 %v848, %v1449
        %1451 = vmatmul.f32.gmra.mxu0 %v1052
        %v1452 = vpop.f32.mrf.mxu0
        %v1453 = vadd.f32 %v848, %v1452
        %1454 = vmatmul.f32.gmra.mxu0 %v1055
        %v1455 = vpop.f32.mrf.mxu0
        %v1456 = vadd.f32 %v848, %v1455
        %1457 = vmatmul.f32.gmra.mxu0 %v1058
        %v1458 = vpop.f32.mrf.mxu0
        %v1459 = vadd.f32 %v848, %v1458
        %1460 = vmatmul.f32.gmra.mxu0 %v1061
        %v1461 = vpop.f32.mrf.mxu0
        %v1462 = vadd.f32 %v848, %v1461
        %1463 = vmatmul.f32.gmra.mxu0 %v1064
        %v1464 = vpop.f32.mrf.mxu0
        %v1465 = vadd.f32 %v848, %v1464
        %1466 = vmatmul.f32.gmra.mxu0 %v1067
        %v1467 = vpop.f32.mrf.mxu0
        %v1468 = vadd.f32 %v848, %v1467
        %1469 = vmatmul.f32.gmra.mxu0 %v1070
        %v1470 = vpop.f32.mrf.mxu0
        %v1471 = vadd.f32 %v848, %v1470
        %1472 = vmatmul.f32.gmra.mxu0 %v1073
        %v1473 = vpop.f32.mrf.mxu0
        %v1474 = vadd.f32 %v848, %v1473
        %1475 = vmatmul.f32.gmra.mxu0 %v1076
        %v1476 = vpop.f32.mrf.mxu0
        %v1477 = vadd.f32 %v848, %v1476
        %1478 = vmatmul.f32.gmra.mxu0 %v1079
        %v1479 = vpop.f32.mrf.mxu0
        %v1480 = vadd.f32 %v848, %v1479
        %1481 = vmatmul.f32.gmra.mxu0 %v1082
        %v1482 = vpop.f32.mrf.mxu0
        %v1483 = vadd.f32 %v848, %v1482
        %1484 = vmatmul.f32.gmra.mxu0 %v1085
        %v1485 = vpop.f32.mrf.mxu0
        %v1486 = vadd.f32 %v848, %v1485
        %1487 = vmatmul.f32.gmra.mxu0 %v1088
        %v1488 = vpop.f32.mrf.mxu0
        %v1489 = vadd.f32 %v848, %v1488
        %1490 = vmatmul.f32.gmra.mxu0 %v1091
        %v1491 = vpop.f32.mrf.mxu0
        %v1492 = vadd.f32 %v848, %v1491
        %1493 = vmatmul.f32.gmra.mxu0 %v1094
        %v1494 = vpop.f32.mrf.mxu0
        %v1495 = vadd.f32 %v848, %v1494
        %1496 = vmatmul.f32.gmra.mxu0 %v1097
        %v1497 = vpop.f32.mrf.mxu0
        %v1498 = vadd.f32 %v848, %v1497
        %1499 = vmatmul.f32.gmra.mxu0 %v1100
        %v1500 = vpop.f32.mrf.mxu0
        %v1501 = vadd.f32 %v848, %v1500
        %1502 = vmatmul.f32.gmra.mxu0 %v1103
        %v1503 = vpop.f32.mrf.mxu0
        %v1504 = vadd.f32 %v848, %v1503
        %1505 = vmatmul.f32.gmra.mxu0 %v1106
        %v1506 = vpop.f32.mrf.mxu0
        %v1507 = vadd.f32 %v848, %v1506
        %1508 = vmatmul.f32.gmra.mxu0 %v1109
        %v1509 = vpop.f32.mrf.mxu0
        %v1510 = vadd.f32 %v848, %v1509
        %1511 = vmatmul.f32.gmra.mxu0 %v1112
        %v1512 = vpop.f32.mrf.mxu0
        %v1513 = vadd.f32 %v848, %v1512
        %1514 = vmatmul.f32.gmra.mxu0 %v1115
        %v1515 = vpop.f32.mrf.mxu0
        %v1516 = vadd.f32 %v848, %v1515
        %1517 = vmatmul.f32.gmra.mxu0 %v1118
        %v1518 = vpop.f32.mrf.mxu0
        %v1519 = vadd.f32 %v848, %v1518
        %1520 = vmatmul.f32.gmra.mxu0 %v1121
        %v1521 = vpop.f32.mrf.mxu0
        %v1522 = vadd.f32 %v848, %v1521
        %1523 = vmatmul.f32.gmra.mxu0 %v1124
        %v1524 = vpop.f32.mrf.mxu0
        %v1525 = vadd.f32 %v848, %v1524
        %1526 = vmatmul.f32.gmra.mxu0 %v1127
        %v1527 = vpop.f32.mrf.mxu0
        %v1528 = vadd.f32 %v848, %v1527
        %1529 = vmatmul.f32.gmra.mxu0 %v1130
        %v1530 = vpop.f32.mrf.mxu0
        %v1531 = vadd.f32 %v848, %v1530
        %1532 = vmatmul.f32.gmra.mxu0 %v1133
        %v1533 = vpop.f32.mrf.mxu0
        %v1534 = vadd.f32 %v848, %v1533
        %1535 = vmatmul.f32.gmra.mxu0 %v1136
        %v1536 = vpop.f32.mrf.mxu0
        %v1537 = vadd.f32 %v848, %v1536
        %1538 = vmatmul.f32.gmra.mxu0 %v1139
        %v1539 = vpop.f32.mrf.mxu0
        %v1540 = vadd.f32 %v848, %v1539
        %1541 = vmatmul.f32.gmra.mxu0 %v1142
        %v1542 = vpop.f32.mrf.mxu0
        %v1543 = vadd.f32 %v848, %v1542
        %1544 = vmatmul.f32.gmra.mxu0 %v1145
        %v1545 = vpop.f32.mrf.mxu0
        %v1546 = vadd.f32 %v848, %v1545
        %1547 = vmatmul.f32.gmra.mxu0 %v1148
        %v1548 = vpop.f32.mrf.mxu0
        %v1549 = vadd.f32 %v848, %v1548
        %1550 = vmatmul.f32.gmra.mxu0 %v1151
        %v1551 = vpop.f32.mrf.mxu0
        %v1552 = vadd.f32 %v848, %v1551
        %1553 = vmatmul.f32.gmra.mxu0 %v1154
        %v1554 = vpop.f32.mrf.mxu0
        %v1555 = vadd.f32 %v848, %v1554
        %1556 = vmatmul.f32.gmra.mxu0 %v1157
        %v1557 = vpop.f32.mrf.mxu0
        %v1558 = vadd.f32 %v848, %v1557
        %1559 = vmatmul.f32.gmra.mxu0 %v1160
        %v1560 = vpop.f32.mrf.mxu0
        %v1561 = vadd.f32 %v848, %v1560
        %1562 = vmatmul.f32.gmra.mxu0 %v1163
        %v1563 = vpop.f32.mrf.mxu0
        %v1564 = vadd.f32 %v848, %v1563
        %1565 = vmatmul.f32.gmra.mxu0 %v1166
        %v1566 = vpop.f32.mrf.mxu0
        %v1567 = vadd.f32 %v848, %v1566
        %1568 = vmatmul.f32.gmra.mxu0 %v1169
        %v1569 = vpop.f32.mrf.mxu0
        %v1570 = vadd.f32 %v848, %v1569
        %1571 = vmatmul.f32.gmra.mxu0 %v1172
        %v1572 = vpop.f32.mrf.mxu0
        %v1573 = vadd.f32 %v848, %v1572
        %1574 = vmatmul.f32.gmra.mxu0 %v1175
        %v1575 = vpop.f32.mrf.mxu0
        %v1576 = vadd.f32 %v848, %v1575
        %1577 = vmatmul.f32.gmra.mxu0 %v1178
        %v1578 = vpop.f32.mrf.mxu0
        %v1579 = vadd.f32 %v848, %v1578
        %1580 = vmatmul.f32.gmra.mxu0 %v1181
        %v1581 = vpop.f32.mrf.mxu0
        %v1582 = vadd.f32 %v848, %v1581
        %1583 = vmatmul.f32.gmra.mxu0 %v1184
        %v1584 = vpop.f32.mrf.mxu0
        %v1585 = vadd.f32 %v848, %v1584
        %1586 = vmatmul.f32.gmra.mxu0 %v1187
        %v1587 = vpop.f32.mrf.mxu0
        %v1588 = vadd.f32 %v848, %v1587
        %1589 = vmatmul.f32.gmra.mxu0 %v1190
        %v1590 = vpop.f32.mrf.mxu0
        %v1591 = vadd.f32 %v848, %v1590
        %1592 = vmatmul.f32.gmra.mxu0 %v1193
        %v1593 = vpop.f32.mrf.mxu0
        %v1594 = vadd.f32 %v848, %v1593
        %1595 = vmatmul.f32.gmra.mxu0 %v1196
        %v1596 = vpop.f32.mrf.mxu0
        %v1597 = vadd.f32 %v848, %v1596
        %1598 = vmatmul.f32.gmra.mxu0 %v1199
        %v1599 = vpop.f32.mrf.mxu0
        %v1600 = vadd.f32 %v848, %v1599
        %1601 = vmatmul.f32.gmra.mxu0 %v1202
        %v1602 = vpop.f32.mrf.mxu0
        %v1603 = vadd.f32 %v848, %v1602
        %1604 = vmatmul.f32.gmra.mxu0 %v1205
        %v1605 = vpop.f32.mrf.mxu0
        %v1606 = vadd.f32 %v848, %v1605
        %1607 = vmatmul.f32.gmra.mxu0 %v1208
        %v1608 = vpop.f32.mrf.mxu0
        %v1609 = vadd.f32 %v848, %v1608
        %1610 = vmatmul.f32.gmra.mxu0 %v1211
        %v1611 = vpop.f32.mrf.mxu0
        %v1612 = vadd.f32 %v848, %v1611
        %1613 = vmatmul.f32.gmra.mxu0 %v1214
        %v1614 = vpop.f32.mrf.mxu0
        %v1615 = vadd.f32 %v848, %v1614
        %1616 = vmatmul.f32.gmra.mxu0 %v1217
        %v1617 = vpop.f32.mrf.mxu0
        %v1618 = vadd.f32 %v848, %v1617
        %1619 = vmatmul.f32.gmra.mxu0 %v1220
        %v1620 = vpop.f32.mrf.mxu0
        %v1621 = vadd.f32 %v848, %v1620
        %1622 = vmatmul.f32.gmra.mxu0 %v1223
        %v1623 = vpop.f32.mrf.mxu0
        %v1624 = vadd.f32 %v848, %v1623
        %1625 = vmatmul.f32.gmra.mxu0 %v1226
        %v1626 = vpop.f32.mrf.mxu0
        %v1627 = vadd.f32 %v848, %v1626
        %1628 = vmatmul.f32.gmra.mxu0 %v1229
        %v1629 = vpop.f32.mrf.mxu0
        %v1630 = vadd.f32 %v848, %v1629
        %1631 = vmatmul.f32.gmra.mxu0 %v1232
        %v1632 = vpop.f32.mrf.mxu0
        %v1633 = vadd.f32 %v848, %v1632
        %1634 = vdwg.mxu0
        %v1635 = vld [vmem:[%s1 + $0x10] sm:$0xff]
        %v1636 = vld [vmem:[%s1 + $0x18] sm:$0xff]
        %v1637 = vld [vmem:[%s1 + $0x20] sm:$0xff]
        %v1638 = vld [vmem:[%s1 + $0x28] sm:$0xff]
        %v1639 = vld [vmem:[%s1 + $0x30] sm:$0xff]
        %v1640 = vld [vmem:[%s1 + $0x38] sm:$0xff]
        %v1641 = vld [vmem:[%s1 + $0x40] sm:$0xff]
        %v1642 = vld [vmem:[%s1 + $0x48] sm:$0xff]
        %v1643 = vld [vmem:[%s2 + $0x1] sm:$0x1]
        %v1644 = vmax.f32 %v1252, 0.0
        %v1645 = vmax.f32 %v1255, 0.0
        %v1646 = vmax.f32 %v1258, 0.0
        %v1647 = vmax.f32 %v1261, 0.0
        %v1648 = vmax.f32 %v1264, 0.0
        %v1649 = vmax.f32 %v1267, 0.0
        %v1650 = vmax.f32 %v1270, 0.0
        %v1651 = vmax.f32 %v1273, 0.0
        %v1652 = vmax.f32 %v1276, 0.0
        %v1653 = vmax.f32 %v1279, 0.0
        %v1654 = vmax.f32 %v1282, 0.0
        %v1655 = vmax.f32 %v1285, 0.0
        %v1656 = vmax.f32 %v1288, 0.0
        %v1657 = vmax.f32 %v1291, 0.0
        %v1658 = vmax.f32 %v1294, 0.0
        %v1659 = vmax.f32 %v1297, 0.0
        %v1660 = vmax.f32 %v1300, 0.0
        %v1661 = vmax.f32 %v1303, 0.0
        %v1662 = vmax.f32 %v1306, 0.0
        %v1663 = vmax.f32 %v1309, 0.0
        %v1664 = vmax.f32 %v1312, 0.0
        %v1665 = vmax.f32 %v1315, 0.0
        %v1666 = vmax.f32 %v1318, 0.0
        %v1667 = vmax.f32 %v1321, 0.0
        %v1668 = vmax.f32 %v1324, 0.0
        %v1669 = vmax.f32 %v1327, 0.0
        %v1670 = vmax.f32 %v1330, 0.0
        %v1671 = vmax.f32 %v1333, 0.0
        %v1672 = vmax.f32 %v1336, 0.0
        %v1673 = vmax.f32 %v1339, 0.0
        %v1674 = vmax.f32 %v1342, 0.0
        %v1675 = vmax.f32 %v1345, 0.0
        %v1676 = vmax.f32 %v1348, 0.0
        %v1677 = vmax.f32 %v1351, 0.0
        %v1678 = vmax.f32 %v1354, 0.0
        %v1679 = vmax.f32 %v1357, 0.0
        %v1680 = vmax.f32 %v1360, 0.0
        %v1681 = vmax.f32 %v1363, 0.0
        %v1682 = vmax.f32 %v1366, 0.0
        %v1683 = vmax.f32 %v1369, 0.0
        %v1684 = vmax.f32 %v1372, 0.0
        %v1685 = vmax.f32 %v1375, 0.0
        %v1686 = vmax.f32 %v1378, 0.0
        %v1687 = vmax.f32 %v1381, 0.0
        %v1688 = vmax.f32 %v1384, 0.0
        %v1689 = vmax.f32 %v1387, 0.0
        %v1690 = vmax.f32 %v1390, 0.0
        %v1691 = vmax.f32 %v1393, 0.0
        %v1692 = vmax.f32 %v1396, 0.0
        %v1693 = vmax.f32 %v1399, 0.0
        %v1694 = vmax.f32 %v1402, 0.0
        %v1695 = vmax.f32 %v1405, 0.0
        %v1696 = vmax.f32 %v1408, 0.0
        %v1697 = vmax.f32 %v1411, 0.0
        %v1698 = vmax.f32 %v1414, 0.0
        %v1699 = vmax.f32 %v1417, 0.0
        %v1700 = vmax.f32 %v1420, 0.0
        %v1701 = vmax.f32 %v1423, 0.0
        %v1702 = vmax.f32 %v1426, 0.0
        %v1703 = vmax.f32 %v1429, 0.0
        %v1704 = vmax.f32 %v1432, 0.0
        %v1705 = vmax.f32 %v1435, 0.0
        %v1706 = vmax.f32 %v1438, 0.0
        %v1707 = vmax.f32 %v1441, 0.0
        %v1708 = vmax.f32 %v1444, 0.0
        %v1709 = vmax.f32 %v1447, 0.0
        %v1710 = vmax.f32 %v1450, 0.0
        %v1711 = vmax.f32 %v1453, 0.0
        %v1712 = vmax.f32 %v1456, 0.0
        %v1713 = vmax.f32 %v1459, 0.0
        %v1714 = vmax.f32 %v1462, 0.0
        %v1715 = vmax.f32 %v1465, 0.0
        %v1716 = vmax.f32 %v1468, 0.0
        %v1717 = vmax.f32 %v1471, 0.0
        %v1718 = vmax.f32 %v1474, 0.0
        %v1719 = vmax.f32 %v1477, 0.0
        %v1720 = vmax.f32 %v1480, 0.0
        %v1721 = vmax.f32 %v1483, 0.0
        %v1722 = vmax.f32 %v1486, 0.0
        %v1723 = vmax.f32 %v1489, 0.0
        %v1724 = vmax.f32 %v1492, 0.0
        %v1725 = vmax.f32 %v1495, 0.0
        %v1726 = vmax.f32 %v1498, 0.0
        %v1727 = vmax.f32 %v1501, 0.0
        %v1728 = vmax.f32 %v1504, 0.0
        %v1729 = vmax.f32 %v1507, 0.0
        %v1730 = vmax.f32 %v1510, 0.0
        %v1731 = vmax.f32 %v1513, 0.0
        %v1732 = vmax.f32 %v1516, 0.0
        %v1733 = vmax.f32 %v1519, 0.0
        %v1734 = vmax.f32 %v1522, 0.0
        %v1735 = vmax.f32 %v1525, 0.0
        %v1736 = vmax.f32 %v1528, 0.0
        %v1737 = vmax.f32 %v1531, 0.0
        %v1738 = vmax.f32 %v1534, 0.0
        %v1739 = vmax.f32 %v1537, 0.0
        %v1740 = vmax.f32 %v1540, 0.0
        %v1741 = vmax.f32 %v1543, 0.0
        %v1742 = vmax.f32 %v1546, 0.0
        %v1743 = vmax.f32 %v1549, 0.0
        %v1744 = vmax.f32 %v1552, 0.0
        %v1745 = vmax.f32 %v1555, 0.0
        %v1746 = vmax.f32 %v1558, 0.0
        %v1747 = vmax.f32 %v1561, 0.0
        %v1748 = vmax.f32 %v1564, 0.0
        %v1749 = vmax.f32 %v1567, 0.0
        %v1750 = vmax.f32 %v1570, 0.0
        %v1751 = vmax.f32 %v1573, 0.0
        %v1752 = vmax.f32 %v1576, 0.0
        %v1753 = vmax.f32 %v1579, 0.0
        %v1754 = vmax.f32 %v1582, 0.0
        %v1755 = vmax.f32 %v1585, 0.0
        %v1756 = vmax.f32 %v1588, 0.0
        %v1757 = vmax.f32 %v1591, 0.0
        %v1758 = vmax.f32 %v1594, 0.0
        %v1759 = vmax.f32 %v1597, 0.0
        %v1760 = vmax.f32 %v1600, 0.0
        %v1761 = vmax.f32 %v1603, 0.0
        %v1762 = vmax.f32 %v1606, 0.0
        %v1763 = vmax.f32 %v1609, 0.0
        %v1764 = vmax.f32 %v1612, 0.0
        %v1765 = vmax.f32 %v1615, 0.0
        %v1766 = vmax.f32 %v1618, 0.0
        %v1767 = vmax.f32 %v1621, 0.0
        %v1768 = vmax.f32 %v1624, 0.0
        %v1769 = vmax.f32 %v1627, 0.0
        %v1770 = vmax.f32 %v1630, 0.0
        %v1771 = vmax.f32 %v1633, 0.0
        %v1772 = vperm.slane %v1643, 0
        %vm1773 = vcmask 523264
        %v1775 = vsel %vm1773, %v1644, 0
        %v1778 = vsel %vm1773, %v1645, 0
        %v1781 = vsel %vm1773, %v1646, 0
        %v1784 = vsel %vm1773, %v1647, 0
        %v1787 = vsel %vm1773, %v1648, 0
        %v1790 = vsel %vm1773, %v1649, 0
        %v1793 = vsel %vm1773, %v1650, 0
        %v1796 = vsel %vm1773, %v1651, 0
        %v1799 = vsel %vm1773, %v1652, 0
        %v1802 = vsel %vm1773, %v1653, 0
        %v1805 = vsel %vm1773, %v1654, 0
        %v1808 = vsel %vm1773, %v1655, 0
        %v1811 = vsel %vm1773, %v1656, 0
        %v1814 = vsel %vm1773, %v1657, 0
        %v1817 = vsel %vm1773, %v1658, 0
        %v1820 = vsel %vm1773, %v1659, 0
        %v1823 = vsel %vm1773, %v1660, 0
        %v1826 = vsel %vm1773, %v1661, 0
        %v1829 = vsel %vm1773, %v1662, 0
        %v1832 = vsel %vm1773, %v1663, 0
        %v1835 = vsel %vm1773, %v1664, 0
        %v1838 = vsel %vm1773, %v1665, 0
        %v1841 = vsel %vm1773, %v1666, 0
        %v1844 = vsel %vm1773, %v1667, 0
        %v1847 = vsel %vm1773, %v1668, 0
        %v1850 = vsel %vm1773, %v1669, 0
        %v1853 = vsel %vm1773, %v1670, 0
        %v1856 = vsel %vm1773, %v1671, 0
        %v1859 = vsel %vm1773, %v1672, 0
        %v1862 = vsel %vm1773, %v1673, 0
        %v1865 = vsel %vm1773, %v1674, 0
        %v1868 = vsel %vm1773, %v1675, 0
        %v1871 = vsel %vm1773, %v1676, 0
        %v1874 = vsel %vm1773, %v1677, 0
        %v1877 = vsel %vm1773, %v1678, 0
        %v1880 = vsel %vm1773, %v1679, 0
        %v1883 = vsel %vm1773, %v1680, 0
        %v1886 = vsel %vm1773, %v1681, 0
        %v1889 = vsel %vm1773, %v1682, 0
        %v1892 = vsel %vm1773, %v1683, 0
        %v1895 = vsel %vm1773, %v1684, 0
        %v1898 = vsel %vm1773, %v1685, 0
        %v1901 = vsel %vm1773, %v1686, 0
        %v1904 = vsel %vm1773, %v1687, 0
        %v1907 = vsel %vm1773, %v1688, 0
        %v1910 = vsel %vm1773, %v1689, 0
        %v1913 = vsel %vm1773, %v1690, 0
        %v1916 = vsel %vm1773, %v1691, 0
        %v1919 = vsel %vm1773, %v1692, 0
        %v1922 = vsel %vm1773, %v1693, 0
        %v1925 = vsel %vm1773, %v1694, 0
        %v1928 = vsel %vm1773, %v1695, 0
        %v1931 = vsel %vm1773, %v1696, 0
        %v1934 = vsel %vm1773, %v1697, 0
        %v1937 = vsel %vm1773, %v1698, 0
        %v1940 = vsel %vm1773, %v1699, 0
        %v1943 = vsel %vm1773, %v1700, 0
        %v1946 = vsel %vm1773, %v1701, 0
        %v1949 = vsel %vm1773, %v1702, 0
        %v1952 = vsel %vm1773, %v1703, 0
        %v1955 = vsel %vm1773, %v1704, 0
        %v1958 = vsel %vm1773, %v1705, 0
        %v1961 = vsel %vm1773, %v1706, 0
        %v1964 = vsel %vm1773, %v1707, 0
        %v1967 = vsel %vm1773, %v1708, 0
        %v1970 = vsel %vm1773, %v1709, 0
        %v1973 = vsel %vm1773, %v1710, 0
        %v1976 = vsel %vm1773, %v1711, 0
        %v1979 = vsel %vm1773, %v1712, 0
        %v1982 = vsel %vm1773, %v1713, 0
        %v1985 = vsel %vm1773, %v1714, 0
        %v1988 = vsel %vm1773, %v1715, 0
        %v1991 = vsel %vm1773, %v1716, 0
        %v1994 = vsel %vm1773, %v1717, 0
        %v1997 = vsel %vm1773, %v1718, 0
        %v2000 = vsel %vm1773, %v1719, 0
        %v2003 = vsel %vm1773, %v1720, 0
        %v2006 = vsel %vm1773, %v1721, 0
        %v2009 = vsel %vm1773, %v1722, 0
        %v2012 = vsel %vm1773, %v1723, 0
        %v2015 = vsel %vm1773, %v1724, 0
        %v2018 = vsel %vm1773, %v1725, 0
        %v2021 = vsel %vm1773, %v1726, 0
        %v2024 = vsel %vm1773, %v1727, 0
        %v2027 = vsel %vm1773, %v1728, 0
        %v2030 = vsel %vm1773, %v1729, 0
        %v2033 = vsel %vm1773, %v1730, 0
        %v2036 = vsel %vm1773, %v1731, 0
        %v2039 = vsel %vm1773, %v1732, 0
        %v2042 = vsel %vm1773, %v1733, 0
        %v2045 = vsel %vm1773, %v1734, 0
        %v2048 = vsel %vm1773, %v1735, 0
        %v2051 = vsel %vm1773, %v1736, 0
        %v2054 = vsel %vm1773, %v1737, 0
        %v2057 = vsel %vm1773, %v1738, 0
        %v2060 = vsel %vm1773, %v1739, 0
        %v2063 = vsel %vm1773, %v1740, 0
        %v2066 = vsel %vm1773, %v1741, 0
        %v2069 = vsel %vm1773, %v1742, 0
        %v2072 = vsel %vm1773, %v1743, 0
        %v2075 = vsel %vm1773, %v1744, 0
        %v2078 = vsel %vm1773, %v1745, 0
        %v2081 = vsel %vm1773, %v1746, 0
        %v2084 = vsel %vm1773, %v1747, 0
        %v2087 = vsel %vm1773, %v1748, 0
        %v2090 = vsel %vm1773, %v1749, 0
        %v2093 = vsel %vm1773, %v1750, 0
        %v2096 = vsel %vm1773, %v1751, 0
        %v2099 = vsel %vm1773, %v1752, 0
        %v2102 = vsel %vm1773, %v1753, 0
        %v2105 = vsel %vm1773, %v1754, 0
        %v2108 = vsel %vm1773, %v1755, 0
        %v2111 = vsel %vm1773, %v1756, 0
        %v2114 = vsel %vm1773, %v1757, 0
        %v2117 = vsel %vm1773, %v1758, 0
        %v2120 = vsel %vm1773, %v1759, 0
        %v2123 = vsel %vm1773, %v1760, 0
        %v2126 = vsel %vm1773, %v1761, 0
        %v2129 = vsel %vm1773, %v1762, 0
        %v2132 = vsel %vm1773, %v1763, 0
        %v2135 = vsel %vm1773, %v1764, 0
        %v2138 = vsel %vm1773, %v1765, 0
        %v2141 = vsel %vm1773, %v1766, 0
        %v2144 = vsel %vm1773, %v1767, 0
        %v2147 = vsel %vm1773, %v1768, 0
        %v2150 = vsel %vm1773, %v1769, 0
        %v2153 = vsel %vm1773, %v1770, 0
        %v2156 = vsel %vm1773, %v1771, 0
        %2158 = vmatpush.msra.mxu0 0.0
        %2159 = vmatpush.msra.mxu0 0.0
        %2160 = vmatpush.msra.mxu0 0.0
        %2161 = vmatpush.msra.mxu0 0.0
        %2162 = vmatpush.msra.mxu0 0.0
        %2163 = vmatpush.msra.mxu0 0.0
        %2164 = vmatpush.msra.mxu0 0.0
        %2165 = vmatpush.msra.mxu0 0.0
        %2166 = vmatpush.msra.mxu0 %v1642
        %2167 = vmatpush.msra.mxu0 %v1641
        %2168 = vmatpush.msra.mxu0 %v1640
        %2169 = vmatpush.msra.mxu0 %v1639
        %2170 = vmatpush.msra.mxu0 %v1638
        %2171 = vmatpush.msra.mxu0 %v1637
        %2172 = vmatpush.msra.mxu0 %v1636
        %2173 = vmatpush.msra.mxu0 %v1635
        %2174 = vmatmul.f32.gmra.mxu0 %v1775
        %v2175 = vpop.f32.mrf.mxu0
        %v2176 = vadd.f32 %v1772, %v2175
        %2177 = vmatmul.f32.gmra.mxu0 %v1778
        %v2178 = vpop.f32.mrf.mxu0
        %v2179 = vadd.f32 %v1772, %v2178
        %2180 = vmatmul.f32.gmra.mxu0 %v1781
        %v2181 = vpop.f32.mrf.mxu0
        %v2182 = vadd.f32 %v1772, %v2181
        %2183 = vmatmul.f32.gmra.mxu0 %v1784
        %v2184 = vpop.f32.mrf.mxu0
        %v2185 = vadd.f32 %v1772, %v2184
        %2186 = vmatmul.f32.gmra.mxu0 %v1787
        %v2187 = vpop.f32.mrf.mxu0
        %v2188 = vadd.f32 %v1772, %v2187
        %2189 = vmatmul.f32.gmra.mxu0 %v1790
        %v2190 = vpop.f32.mrf.mxu0
        %v2191 = vadd.f32 %v1772, %v2190
        %2192 = vmatmul.f32.gmra.mxu0 %v1793
        %v2193 = vpop.f32.mrf.mxu0
        %v2194 = vadd.f32 %v1772, %v2193
        %2195 = vmatmul.f32.gmra.mxu0 %v1796
        %v2196 = vpop.f32.mrf.mxu0
        %v2197 = vadd.f32 %v1772, %v2196
        %2198 = vmatmul.f32.gmra.mxu0 %v1799
        %v2199 = vpop.f32.mrf.mxu0
        %v2200 = vadd.f32 %v1772, %v2199
        %2201 = vmatmul.f32.gmra.mxu0 %v1802
        %v2202 = vpop.f32.mrf.mxu0
        %v2203 = vadd.f32 %v1772, %v2202
        %2204 = vmatmul.f32.gmra.mxu0 %v1805
        %v2205 = vpop.f32.mrf.mxu0
        %v2206 = vadd.f32 %v1772, %v2205
        %2207 = vmatmul.f32.gmra.mxu0 %v1808
        %v2208 = vpop.f32.mrf.mxu0
        %v2209 = vadd.f32 %v1772, %v2208
        %2210 = vmatmul.f32.gmra.mxu0 %v1811
        %v2211 = vpop.f32.mrf.mxu0
        %v2212 = vadd.f32 %v1772, %v2211
        %2213 = vmatmul.f32.gmra.mxu0 %v1814
        %v2214 = vpop.f32.mrf.mxu0
        %v2215 = vadd.f32 %v1772, %v2214
        %2216 = vmatmul.f32.gmra.mxu0 %v1817
        %v2217 = vpop.f32.mrf.mxu0
        %v2218 = vadd.f32 %v1772, %v2217
        %2219 = vmatmul.f32.gmra.mxu0 %v1820
        %v2220 = vpop.f32.mrf.mxu0
        %v2221 = vadd.f32 %v1772, %v2220
        %2222 = vmatmul.f32.gmra.mxu0 %v1823
        %v2223 = vpop.f32.mrf.mxu0
        %v2224 = vadd.f32 %v1772, %v2223
        %2225 = vmatmul.f32.gmra.mxu0 %v1826
        %v2226 = vpop.f32.mrf.mxu0
        %v2227 = vadd.f32 %v1772, %v2226
        %2228 = vmatmul.f32.gmra.mxu0 %v1829
        %v2229 = vpop.f32.mrf.mxu0
        %v2230 = vadd.f32 %v1772, %v2229
        %2231 = vmatmul.f32.gmra.mxu0 %v1832
        %v2232 = vpop.f32.mrf.mxu0
        %v2233 = vadd.f32 %v1772, %v2232
        %2234 = vmatmul.f32.gmra.mxu0 %v1835
        %v2235 = vpop.f32.mrf.mxu0
        %v2236 = vadd.f32 %v1772, %v2235
        %2237 = vmatmul.f32.gmra.mxu0 %v1838
        %v2238 = vpop.f32.mrf.mxu0
        %v2239 = vadd.f32 %v1772, %v2238
        %2240 = vmatmul.f32.gmra.mxu0 %v1841
        %v2241 = vpop.f32.mrf.mxu0
        %v2242 = vadd.f32 %v1772, %v2241
        %2243 = vmatmul.f32.gmra.mxu0 %v1844
        %v2244 = vpop.f32.mrf.mxu0
        %v2245 = vadd.f32 %v1772, %v2244
        %2246 = vmatmul.f32.gmra.mxu0 %v1847
        %v2247 = vpop.f32.mrf.mxu0
        %v2248 = vadd.f32 %v1772, %v2247
        %2249 = vmatmul.f32.gmra.mxu0 %v1850
        %v2250 = vpop.f32.mrf.mxu0
        %v2251 = vadd.f32 %v1772, %v2250
        %2252 = vmatmul.f32.gmra.mxu0 %v1853
        %v2253 = vpop.f32.mrf.mxu0
        %v2254 = vadd.f32 %v1772, %v2253
        %2255 = vmatmul.f32.gmra.mxu0 %v1856
        %v2256 = vpop.f32.mrf.mxu0
        %v2257 = vadd.f32 %v1772, %v2256
        %2258 = vmatmul.f32.gmra.mxu0 %v1859
        %v2259 = vpop.f32.mrf.mxu0
        %v2260 = vadd.f32 %v1772, %v2259
        %2261 = vmatmul.f32.gmra.mxu0 %v1862
        %v2262 = vpop.f32.mrf.mxu0
        %v2263 = vadd.f32 %v1772, %v2262
        %2264 = vmatmul.f32.gmra.mxu0 %v1865
        %v2265 = vpop.f32.mrf.mxu0
        %v2266 = vadd.f32 %v1772, %v2265
        %2267 = vmatmul.f32.gmra.mxu0 %v1868
        %v2268 = vpop.f32.mrf.mxu0
        %v2269 = vadd.f32 %v1772, %v2268
        %2270 = vmatmul.f32.gmra.mxu0 %v1871
        %v2271 = vpop.f32.mrf.mxu0
        %v2272 = vadd.f32 %v1772, %v2271
        %2273 = vmatmul.f32.gmra.mxu0 %v1874
        %v2274 = vpop.f32.mrf.mxu0
        %v2275 = vadd.f32 %v1772, %v2274
        %2276 = vmatmul.f32.gmra.mxu0 %v1877
        %v2277 = vpop.f32.mrf.mxu0
        %v2278 = vadd.f32 %v1772, %v2277
        %2279 = vmatmul.f32.gmra.mxu0 %v1880
        %v2280 = vpop.f32.mrf.mxu0
        %v2281 = vadd.f32 %v1772, %v2280
        %2282 = vmatmul.f32.gmra.mxu0 %v1883
        %v2283 = vpop.f32.mrf.mxu0
        %v2284 = vadd.f32 %v1772, %v2283
        %2285 = vmatmul.f32.gmra.mxu0 %v1886
        %v2286 = vpop.f32.mrf.mxu0
        %v2287 = vadd.f32 %v1772, %v2286
        %2288 = vmatmul.f32.gmra.mxu0 %v1889
        %v2289 = vpop.f32.mrf.mxu0
        %v2290 = vadd.f32 %v1772, %v2289
        %2291 = vmatmul.f32.gmra.mxu0 %v1892
        %v2292 = vpop.f32.mrf.mxu0
        %v2293 = vadd.f32 %v1772, %v2292
        %2294 = vmatmul.f32.gmra.mxu0 %v1895
        %v2295 = vpop.f32.mrf.mxu0
        %v2296 = vadd.f32 %v1772, %v2295
        %2297 = vmatmul.f32.gmra.mxu0 %v1898
        %v2298 = vpop.f32.mrf.mxu0
        %v2299 = vadd.f32 %v1772, %v2298
        %2300 = vmatmul.f32.gmra.mxu0 %v1901
        %v2301 = vpop.f32.mrf.mxu0
        %v2302 = vadd.f32 %v1772, %v2301
        %2303 = vmatmul.f32.gmra.mxu0 %v1904
        %v2304 = vpop.f32.mrf.mxu0
        %v2305 = vadd.f32 %v1772, %v2304
        %2306 = vmatmul.f32.gmra.mxu0 %v1907
        %v2307 = vpop.f32.mrf.mxu0
        %v2308 = vadd.f32 %v1772, %v2307
        %2309 = vmatmul.f32.gmra.mxu0 %v1910
        %v2310 = vpop.f32.mrf.mxu0
        %v2311 = vadd.f32 %v1772, %v2310
        %2312 = vmatmul.f32.gmra.mxu0 %v1913
        %v2313 = vpop.f32.mrf.mxu0
        %v2314 = vadd.f32 %v1772, %v2313
        %2315 = vmatmul.f32.gmra.mxu0 %v1916
        %v2316 = vpop.f32.mrf.mxu0
        %v2317 = vadd.f32 %v1772, %v2316
        %2318 = vmatmul.f32.gmra.mxu0 %v1919
        %v2319 = vpop.f32.mrf.mxu0
        %v2320 = vadd.f32 %v1772, %v2319
        %2321 = vmatmul.f32.gmra.mxu0 %v1922
        %v2322 = vpop.f32.mrf.mxu0
        %v2323 = vadd.f32 %v1772, %v2322
        %2324 = vmatmul.f32.gmra.mxu0 %v1925
        %v2325 = vpop.f32.mrf.mxu0
        %v2326 = vadd.f32 %v1772, %v2325
        %2327 = vmatmul.f32.gmra.mxu0 %v1928
        %v2328 = vpop.f32.mrf.mxu0
        %v2329 = vadd.f32 %v1772, %v2328
        %2330 = vmatmul.f32.gmra.mxu0 %v1931
        %v2331 = vpop.f32.mrf.mxu0
        %v2332 = vadd.f32 %v1772, %v2331
        %2333 = vmatmul.f32.gmra.mxu0 %v1934
        %v2334 = vpop.f32.mrf.mxu0
        %v2335 = vadd.f32 %v1772, %v2334
        %2336 = vmatmul.f32.gmra.mxu0 %v1937
        %v2337 = vpop.f32.mrf.mxu0
        %v2338 = vadd.f32 %v1772, %v2337
        %2339 = vmatmul.f32.gmra.mxu0 %v1940
        %v2340 = vpop.f32.mrf.mxu0
        %v2341 = vadd.f32 %v1772, %v2340
        %2342 = vmatmul.f32.gmra.mxu0 %v1943
        %v2343 = vpop.f32.mrf.mxu0
        %v2344 = vadd.f32 %v1772, %v2343
        %2345 = vmatmul.f32.gmra.mxu0 %v1946
        %v2346 = vpop.f32.mrf.mxu0
        %v2347 = vadd.f32 %v1772, %v2346
        %2348 = vmatmul.f32.gmra.mxu0 %v1949
        %v2349 = vpop.f32.mrf.mxu0
        %v2350 = vadd.f32 %v1772, %v2349
        %2351 = vmatmul.f32.gmra.mxu0 %v1952
        %v2352 = vpop.f32.mrf.mxu0
        %v2353 = vadd.f32 %v1772, %v2352
        %2354 = vmatmul.f32.gmra.mxu0 %v1955
        %v2355 = vpop.f32.mrf.mxu0
        %v2356 = vadd.f32 %v1772, %v2355
        %2357 = vmatmul.f32.gmra.mxu0 %v1958
        %v2358 = vpop.f32.mrf.mxu0
        %v2359 = vadd.f32 %v1772, %v2358
        %2360 = vmatmul.f32.gmra.mxu0 %v1961
        %v2361 = vpop.f32.mrf.mxu0
        %v2362 = vadd.f32 %v1772, %v2361
        %2363 = vmatmul.f32.gmra.mxu0 %v1964
        %v2364 = vpop.f32.mrf.mxu0
        %v2365 = vadd.f32 %v1772, %v2364
        %2366 = vmatmul.f32.gmra.mxu0 %v1967
        %v2367 = vpop.f32.mrf.mxu0
        %v2368 = vadd.f32 %v1772, %v2367
        %2369 = vmatmul.f32.gmra.mxu0 %v1970
        %v2370 = vpop.f32.mrf.mxu0
        %v2371 = vadd.f32 %v1772, %v2370
        %2372 = vmatmul.f32.gmra.mxu0 %v1973
        %v2373 = vpop.f32.mrf.mxu0
        %v2374 = vadd.f32 %v1772, %v2373
        %2375 = vmatmul.f32.gmra.mxu0 %v1976
        %v2376 = vpop.f32.mrf.mxu0
        %v2377 = vadd.f32 %v1772, %v2376
        %2378 = vmatmul.f32.gmra.mxu0 %v1979
        %v2379 = vpop.f32.mrf.mxu0
        %v2380 = vadd.f32 %v1772, %v2379
        %2381 = vmatmul.f32.gmra.mxu0 %v1982
        %v2382 = vpop.f32.mrf.mxu0
        %v2383 = vadd.f32 %v1772, %v2382
        %2384 = vmatmul.f32.gmra.mxu0 %v1985
        %v2385 = vpop.f32.mrf.mxu0
        %v2386 = vadd.f32 %v1772, %v2385
        %2387 = vmatmul.f32.gmra.mxu0 %v1988
        %v2388 = vpop.f32.mrf.mxu0
        %v2389 = vadd.f32 %v1772, %v2388
        %2390 = vmatmul.f32.gmra.mxu0 %v1991
        %v2391 = vpop.f32.mrf.mxu0
        %v2392 = vadd.f32 %v1772, %v2391
        %2393 = vmatmul.f32.gmra.mxu0 %v1994
        %v2394 = vpop.f32.mrf.mxu0
        %v2395 = vadd.f32 %v1772, %v2394
        %2396 = vmatmul.f32.gmra.mxu0 %v1997
        %v2397 = vpop.f32.mrf.mxu0
        %v2398 = vadd.f32 %v1772, %v2397
        %2399 = vmatmul.f32.gmra.mxu0 %v2000
        %v2400 = vpop.f32.mrf.mxu0
        %v2401 = vadd.f32 %v1772, %v2400
        %2402 = vmatmul.f32.gmra.mxu0 %v2003
        %v2403 = vpop.f32.mrf.mxu0
        %v2404 = vadd.f32 %v1772, %v2403
        %2405 = vmatmul.f32.gmra.mxu0 %v2006
        %v2406 = vpop.f32.mrf.mxu0
        %v2407 = vadd.f32 %v1772, %v2406
        %2408 = vmatmul.f32.gmra.mxu0 %v2009
        %v2409 = vpop.f32.mrf.mxu0
        %v2410 = vadd.f32 %v1772, %v2409
        %2411 = vmatmul.f32.gmra.mxu0 %v2012
        %v2412 = vpop.f32.mrf.mxu0
        %v2413 = vadd.f32 %v1772, %v2412
        %2414 = vmatmul.f32.gmra.mxu0 %v2015
        %v2415 = vpop.f32.mrf.mxu0
        %v2416 = vadd.f32 %v1772, %v2415
        %2417 = vmatmul.f32.gmra.mxu0 %v2018
        %v2418 = vpop.f32.mrf.mxu0
        %v2419 = vadd.f32 %v1772, %v2418
        %2420 = vmatmul.f32.gmra.mxu0 %v2021
        %v2421 = vpop.f32.mrf.mxu0
        %v2422 = vadd.f32 %v1772, %v2421
        %2423 = vmatmul.f32.gmra.mxu0 %v2024
        %v2424 = vpop.f32.mrf.mxu0
        %v2425 = vadd.f32 %v1772, %v2424
        %2426 = vmatmul.f32.gmra.mxu0 %v2027
        %v2427 = vpop.f32.mrf.mxu0
        %v2428 = vadd.f32 %v1772, %v2427
        %2429 = vmatmul.f32.gmra.mxu0 %v2030
        %v2430 = vpop.f32.mrf.mxu0
        %v2431 = vadd.f32 %v1772, %v2430
        %2432 = vmatmul.f32.gmra.mxu0 %v2033
        %v2433 = vpop.f32.mrf.mxu0
        %v2434 = vadd.f32 %v1772, %v2433
        %2435 = vmatmul.f32.gmra.mxu0 %v2036
        %v2436 = vpop.f32.mrf.mxu0
        %v2437 = vadd.f32 %v1772, %v2436
        %2438 = vmatmul.f32.gmra.mxu0 %v2039
        %v2439 = vpop.f32.mrf.mxu0
        %v2440 = vadd.f32 %v1772, %v2439
        %2441 = vmatmul.f32.gmra.mxu0 %v2042
        %v2442 = vpop.f32.mrf.mxu0
        %v2443 = vadd.f32 %v1772, %v2442
        %2444 = vmatmul.f32.gmra.mxu0 %v2045
        %v2445 = vpop.f32.mrf.mxu0
        %v2446 = vadd.f32 %v1772, %v2445
        %2447 = vmatmul.f32.gmra.mxu0 %v2048
        %v2448 = vpop.f32.mrf.mxu0
        %v2449 = vadd.f32 %v1772, %v2448
        %2450 = vmatmul.f32.gmra.mxu0 %v2051
        %v2451 = vpop.f32.mrf.mxu0
        %v2452 = vadd.f32 %v1772, %v2451
        %2453 = vmatmul.f32.gmra.mxu0 %v2054
        %v2454 = vpop.f32.mrf.mxu0
        %v2455 = vadd.f32 %v1772, %v2454
        %2456 = vmatmul.f32.gmra.mxu0 %v2057
        %v2457 = vpop.f32.mrf.mxu0
        %v2458 = vadd.f32 %v1772, %v2457
        %2459 = vmatmul.f32.gmra.mxu0 %v2060
        %v2460 = vpop.f32.mrf.mxu0
        %v2461 = vadd.f32 %v1772, %v2460
        %2462 = vmatmul.f32.gmra.mxu0 %v2063
        %v2463 = vpop.f32.mrf.mxu0
        %v2464 = vadd.f32 %v1772, %v2463
        %2465 = vmatmul.f32.gmra.mxu0 %v2066
        %v2466 = vpop.f32.mrf.mxu0
        %v2467 = vadd.f32 %v1772, %v2466
        %2468 = vmatmul.f32.gmra.mxu0 %v2069
        %v2469 = vpop.f32.mrf.mxu0
        %v2470 = vadd.f32 %v1772, %v2469
        %2471 = vmatmul.f32.gmra.mxu0 %v2072
        %v2472 = vpop.f32.mrf.mxu0
        %v2473 = vadd.f32 %v1772, %v2472
        %2474 = vmatmul.f32.gmra.mxu0 %v2075
        %v2475 = vpop.f32.mrf.mxu0
        %v2476 = vadd.f32 %v1772, %v2475
        %2477 = vmatmul.f32.gmra.mxu0 %v2078
        %v2478 = vpop.f32.mrf.mxu0
        %v2479 = vadd.f32 %v1772, %v2478
        %2480 = vmatmul.f32.gmra.mxu0 %v2081
        %v2481 = vpop.f32.mrf.mxu0
        %v2482 = vadd.f32 %v1772, %v2481
        %2483 = vmatmul.f32.gmra.mxu0 %v2084
        %v2484 = vpop.f32.mrf.mxu0
        %v2485 = vadd.f32 %v1772, %v2484
        %2486 = vmatmul.f32.gmra.mxu0 %v2087
        %v2487 = vpop.f32.mrf.mxu0
        %v2488 = vadd.f32 %v1772, %v2487
        %2489 = vmatmul.f32.gmra.mxu0 %v2090
        %v2490 = vpop.f32.mrf.mxu0
        %v2491 = vadd.f32 %v1772, %v2490
        %2492 = vmatmul.f32.gmra.mxu0 %v2093
        %v2493 = vpop.f32.mrf.mxu0
        %v2494 = vadd.f32 %v1772, %v2493
        %2495 = vmatmul.f32.gmra.mxu0 %v2096
        %v2496 = vpop.f32.mrf.mxu0
        %v2497 = vadd.f32 %v1772, %v2496
        %2498 = vmatmul.f32.gmra.mxu0 %v2099
        %v2499 = vpop.f32.mrf.mxu0
        %v2500 = vadd.f32 %v1772, %v2499
        %2501 = vmatmul.f32.gmra.mxu0 %v2102
        %v2502 = vpop.f32.mrf.mxu0
        %v2503 = vadd.f32 %v1772, %v2502
        %2504 = vmatmul.f32.gmra.mxu0 %v2105
        %v2505 = vpop.f32.mrf.mxu0
        %v2506 = vadd.f32 %v1772, %v2505
        %2507 = vmatmul.f32.gmra.mxu0 %v2108
        %v2508 = vpop.f32.mrf.mxu0
        %v2509 = vadd.f32 %v1772, %v2508
        %2510 = vmatmul.f32.gmra.mxu0 %v2111
        %v2511 = vpop.f32.mrf.mxu0
        %v2512 = vadd.f32 %v1772, %v2511
        %2513 = vmatmul.f32.gmra.mxu0 %v2114
        %v2514 = vpop.f32.mrf.mxu0
        %v2515 = vadd.f32 %v1772, %v2514
        %2516 = vmatmul.f32.gmra.mxu0 %v2117
        %v2517 = vpop.f32.mrf.mxu0
        %v2518 = vadd.f32 %v1772, %v2517
        %2519 = vmatmul.f32.gmra.mxu0 %v2120
        %v2520 = vpop.f32.mrf.mxu0
        %v2521 = vadd.f32 %v1772, %v2520
        %2522 = vmatmul.f32.gmra.mxu0 %v2123
        %v2523 = vpop.f32.mrf.mxu0
        %v2524 = vadd.f32 %v1772, %v2523
        %2525 = vmatmul.f32.gmra.mxu0 %v2126
        %v2526 = vpop.f32.mrf.mxu0
        %v2527 = vadd.f32 %v1772, %v2526
        %2528 = vmatmul.f32.gmra.mxu0 %v2129
        %v2529 = vpop.f32.mrf.mxu0
        %v2530 = vadd.f32 %v1772, %v2529
        %2531 = vmatmul.f32.gmra.mxu0 %v2132
        %v2532 = vpop.f32.mrf.mxu0
        %v2533 = vadd.f32 %v1772, %v2532
        %2534 = vmatmul.f32.gmra.mxu0 %v2135
        %v2535 = vpop.f32.mrf.mxu0
        %v2536 = vadd.f32 %v1772, %v2535
        %2537 = vmatmul.f32.gmra.mxu0 %v2138
        %v2538 = vpop.f32.mrf.mxu0
        %v2539 = vadd.f32 %v1772, %v2538
        %2540 = vmatmul.f32.gmra.mxu0 %v2141
        %v2541 = vpop.f32.mrf.mxu0
        %v2542 = vadd.f32 %v1772, %v2541
        %2543 = vmatmul.f32.gmra.mxu0 %v2144
        %v2544 = vpop.f32.mrf.mxu0
        %v2545 = vadd.f32 %v1772, %v2544
        %2546 = vmatmul.f32.gmra.mxu0 %v2147
        %v2547 = vpop.f32.mrf.mxu0
        %v2548 = vadd.f32 %v1772, %v2547
        %2549 = vmatmul.f32.gmra.mxu0 %v2150
        %v2550 = vpop.f32.mrf.mxu0
        %v2551 = vadd.f32 %v1772, %v2550
        %2552 = vmatmul.f32.gmra.mxu0 %v2153
        %v2553 = vpop.f32.mrf.mxu0
        %v2554 = vadd.f32 %v1772, %v2553
        %2555 = vmatmul.f32.gmra.mxu0 %v2156
        %v2556 = vpop.f32.mrf.mxu0
        %v2557 = vadd.f32 %v1772, %v2556
        %2558 = vdwg.mxu0
        %v2559 = vmax.f32 %v2176, 0.0
        %v2560 = vmax.f32 %v2179, 0.0
        %v2561 = vmax.f32 %v2182, 0.0
        %v2562 = vmax.f32 %v2185, 0.0
        %v2563 = vmax.f32 %v2188, 0.0
        %v2564 = vmax.f32 %v2191, 0.0
        %v2565 = vmax.f32 %v2194, 0.0
        %v2566 = vmax.f32 %v2197, 0.0
        %v2567 = vmax.f32 %v2200, 0.0
        %v2568 = vmax.f32 %v2203, 0.0
        %v2569 = vmax.f32 %v2206, 0.0
        %v2570 = vmax.f32 %v2209, 0.0
        %v2571 = vmax.f32 %v2212, 0.0
        %v2572 = vmax.f32 %v2215, 0.0
        %v2573 = vmax.f32 %v2218, 0.0
        %v2574 = vmax.f32 %v2221, 0.0
        %v2575 = vmax.f32 %v2224, 0.0
        %v2576 = vmax.f32 %v2227, 0.0
        %v2577 = vmax.f32 %v2230, 0.0
        %v2578 = vmax.f32 %v2233, 0.0
        %v2579 = vmax.f32 %v2236, 0.0
        %v2580 = vmax.f32 %v2239, 0.0
        %v2581 = vmax.f32 %v2242, 0.0
        %v2582 = vmax.f32 %v2245, 0.0
        %v2583 = vmax.f32 %v2248, 0.0
        %v2584 = vmax.f32 %v2251, 0.0
        %v2585 = vmax.f32 %v2254, 0.0
        %v2586 = vmax.f32 %v2257, 0.0
        %v2587 = vmax.f32 %v2260, 0.0
        %v2588 = vmax.f32 %v2263, 0.0
        %v2589 = vmax.f32 %v2266, 0.0
        %v2590 = vmax.f32 %v2269, 0.0
        %v2591 = vmax.f32 %v2272, 0.0
        %v2592 = vmax.f32 %v2275, 0.0
        %v2593 = vmax.f32 %v2278, 0.0
        %v2594 = vmax.f32 %v2281, 0.0
        %v2595 = vmax.f32 %v2284, 0.0
        %v2596 = vmax.f32 %v2287, 0.0
        %v2597 = vmax.f32 %v2290, 0.0
        %v2598 = vmax.f32 %v2293, 0.0
        %v2599 = vmax.f32 %v2296, 0.0
        %v2600 = vmax.f32 %v2299, 0.0
        %v2601 = vmax.f32 %v2302, 0.0
        %v2602 = vmax.f32 %v2305, 0.0
        %v2603 = vmax.f32 %v2308, 0.0
        %v2604 = vmax.f32 %v2311, 0.0
        %v2605 = vmax.f32 %v2314, 0.0
        %v2606 = vmax.f32 %v2317, 0.0
        %v2607 = vmax.f32 %v2320, 0.0
        %v2608 = vmax.f32 %v2323, 0.0
        %v2609 = vmax.f32 %v2326, 0.0
        %v2610 = vmax.f32 %v2329, 0.0
        %v2611 = vmax.f32 %v2332, 0.0
        %v2612 = vmax.f32 %v2335, 0.0
        %v2613 = vmax.f32 %v2338, 0.0
        %v2614 = vmax.f32 %v2341, 0.0
        %v2615 = vmax.f32 %v2344, 0.0
        %v2616 = vmax.f32 %v2347, 0.0
        %v2617 = vmax.f32 %v2350, 0.0
        %v2618 = vmax.f32 %v2353, 0.0
        %v2619 = vmax.f32 %v2356, 0.0
        %v2620 = vmax.f32 %v2359, 0.0
        %v2621 = vmax.f32 %v2362, 0.0
        %v2622 = vmax.f32 %v2365, 0.0
        %v2623 = vmax.f32 %v2368, 0.0
        %v2624 = vmax.f32 %v2371, 0.0
        %v2625 = vmax.f32 %v2374, 0.0
        %v2626 = vmax.f32 %v2377, 0.0
        %v2627 = vmax.f32 %v2380, 0.0
        %v2628 = vmax.f32 %v2383, 0.0
        %v2629 = vmax.f32 %v2386, 0.0
        %v2630 = vmax.f32 %v2389, 0.0
        %v2631 = vmax.f32 %v2392, 0.0
        %v2632 = vmax.f32 %v2395, 0.0
        %v2633 = vmax.f32 %v2398, 0.0
        %v2634 = vmax.f32 %v2401, 0.0
        %v2635 = vmax.f32 %v2404, 0.0
        %v2636 = vmax.f32 %v2407, 0.0
        %v2637 = vmax.f32 %v2410, 0.0
        %v2638 = vmax.f32 %v2413, 0.0
        %v2639 = vmax.f32 %v2416, 0.0
        %v2640 = vmax.f32 %v2419, 0.0
        %v2641 = vmax.f32 %v2422, 0.0
        %v2642 = vmax.f32 %v2425, 0.0
        %v2643 = vmax.f32 %v2428, 0.0
        %v2644 = vmax.f32 %v2431, 0.0
        %v2645 = vmax.f32 %v2434, 0.0
        %v2646 = vmax.f32 %v2437, 0.0
        %v2647 = vmax.f32 %v2440, 0.0
        %v2648 = vmax.f32 %v2443, 0.0
        %v2649 = vmax.f32 %v2446, 0.0
        %v2650 = vmax.f32 %v2449, 0.0
        %v2651 = vmax.f32 %v2452, 0.0
        %v2652 = vmax.f32 %v2455, 0.0
        %v2653 = vmax.f32 %v2458, 0.0
        %v2654 = vmax.f32 %v2461, 0.0
        %v2655 = vmax.f32 %v2464, 0.0
        %v2656 = vmax.f32 %v2467, 0.0
        %v2657 = vmax.f32 %v2470, 0.0
        %v2658 = vmax.f32 %v2473, 0.0
        %v2659 = vmax.f32 %v2476, 0.0
        %v2660 = vmax.f32 %v2479, 0.0
        %v2661 = vmax.f32 %v2482, 0.0
        %v2662 = vmax.f32 %v2485, 0.0
        %v2663 = vmax.f32 %v2488, 0.0
        %v2664 = vmax.f32 %v2491, 0.0
        %v2665 = vmax.f32 %v2494, 0.0
        %v2666 = vmax.f32 %v2497, 0.0
        %v2667 = vmax.f32 %v2500, 0.0
        %v2668 = vmax.f32 %v2503, 0.0
        %v2669 = vmax.f32 %v2506, 0.0
        %v2670 = vmax.f32 %v2509, 0.0
        %v2671 = vmax.f32 %v2512, 0.0
        %v2672 = vmax.f32 %v2515, 0.0
        %v2673 = vmax.f32 %v2518, 0.0
        %v2674 = vmax.f32 %v2521, 0.0
        %v2675 = vmax.f32 %v2524, 0.0
        %v2676 = vmax.f32 %v2527, 0.0
        %v2677 = vmax.f32 %v2530, 0.0
        %v2678 = vmax.f32 %v2533, 0.0
        %v2679 = vmax.f32 %v2536, 0.0
        %v2680 = vmax.f32 %v2539, 0.0
        %v2681 = vmax.f32 %v2542, 0.0
        %v2682 = vmax.f32 %v2545, 0.0
        %v2683 = vmax.f32 %v2548, 0.0
        %v2684 = vmax.f32 %v2551, 0.0
        %v2685 = vmax.f32 %v2554, 0.0
        %v2686 = vmax.f32 %v2557, 0.0
        %v2687 = vld [vmem:[%s1 + $0x50] sm:$0xff]
        %v2688 = vld [vmem:[%s1 + $0x58] sm:$0xf]
        %vm2689 = vcmask 64512
        %v2691 = vsel %vm2689, %v2559, 0
        %v2694 = vsel %vm2689, %v2560, 0
        %v2697 = vsel %vm2689, %v2561, 0
        %v2700 = vsel %vm2689, %v2562, 0
        %v2703 = vsel %vm2689, %v2563, 0
        %v2706 = vsel %vm2689, %v2564, 0
        %v2709 = vsel %vm2689, %v2565, 0
        %v2712 = vsel %vm2689, %v2566, 0
        %v2715 = vsel %vm2689, %v2567, 0
        %v2718 = vsel %vm2689, %v2568, 0
        %v2721 = vsel %vm2689, %v2569, 0
        %v2724 = vsel %vm2689, %v2570, 0
        %v2727 = vsel %vm2689, %v2571, 0
        %v2730 = vsel %vm2689, %v2572, 0
        %v2733 = vsel %vm2689, %v2573, 0
        %v2736 = vsel %vm2689, %v2574, 0
        %v2739 = vsel %vm2689, %v2575, 0
        %v2742 = vsel %vm2689, %v2576, 0
        %v2745 = vsel %vm2689, %v2577, 0
        %v2748 = vsel %vm2689, %v2578, 0
        %v2751 = vsel %vm2689, %v2579, 0
        %v2754 = vsel %vm2689, %v2580, 0
        %v2757 = vsel %vm2689, %v2581, 0
        %v2760 = vsel %vm2689, %v2582, 0
        %v2763 = vsel %vm2689, %v2583, 0
        %v2766 = vsel %vm2689, %v2584, 0
        %v2769 = vsel %vm2689, %v2585, 0
        %v2772 = vsel %vm2689, %v2586, 0
        %v2775 = vsel %vm2689, %v2587, 0
        %v2778 = vsel %vm2689, %v2588, 0
        %v2781 = vsel %vm2689, %v2589, 0
        %v2784 = vsel %vm2689, %v2590, 0
        %v2787 = vsel %vm2689, %v2591, 0
        %v2790 = vsel %vm2689, %v2592, 0
        %v2793 = vsel %vm2689, %v2593, 0
        %v2796 = vsel %vm2689, %v2594, 0
        %v2799 = vsel %vm2689, %v2595, 0
        %v2802 = vsel %vm2689, %v2596, 0
        %v2805 = vsel %vm2689, %v2597, 0
        %v2808 = vsel %vm2689, %v2598, 0
        %v2811 = vsel %vm2689, %v2599, 0
        %v2814 = vsel %vm2689, %v2600, 0
        %v2817 = vsel %vm2689, %v2601, 0
        %v2820 = vsel %vm2689, %v2602, 0
        %v2823 = vsel %vm2689, %v2603, 0
        %v2826 = vsel %vm2689, %v2604, 0
        %v2829 = vsel %vm2689, %v2605, 0
        %v2832 = vsel %vm2689, %v2606, 0
        %v2835 = vsel %vm2689, %v2607, 0
        %v2838 = vsel %vm2689, %v2608, 0
        %v2841 = vsel %vm2689, %v2609, 0
        %v2844 = vsel %vm2689, %v2610, 0
        %v2847 = vsel %vm2689, %v2611, 0
        %v2850 = vsel %vm2689, %v2612, 0
        %v2853 = vsel %vm2689, %v2613, 0
        %v2856 = vsel %vm2689, %v2614, 0
        %v2859 = vsel %vm2689, %v2615, 0
        %v2862 = vsel %vm2689, %v2616, 0
        %v2865 = vsel %vm2689, %v2617, 0
        %v2868 = vsel %vm2689, %v2618, 0
        %v2871 = vsel %vm2689, %v2619, 0
        %v2874 = vsel %vm2689, %v2620, 0
        %v2877 = vsel %vm2689, %v2621, 0
        %v2880 = vsel %vm2689, %v2622, 0
        %v2883 = vsel %vm2689, %v2623, 0
        %v2886 = vsel %vm2689, %v2624, 0
        %v2889 = vsel %vm2689, %v2625, 0
        %v2892 = vsel %vm2689, %v2626, 0
        %v2895 = vsel %vm2689, %v2627, 0
        %v2898 = vsel %vm2689, %v2628, 0
        %v2901 = vsel %vm2689, %v2629, 0
        %v2904 = vsel %vm2689, %v2630, 0
        %v2907 = vsel %vm2689, %v2631, 0
        %v2910 = vsel %vm2689, %v2632, 0
        %v2913 = vsel %vm2689, %v2633, 0
        %v2916 = vsel %vm2689, %v2634, 0
        %v2919 = vsel %vm2689, %v2635, 0
        %v2922 = vsel %vm2689, %v2636, 0
        %v2925 = vsel %vm2689, %v2637, 0
        %v2928 = vsel %vm2689, %v2638, 0
        %v2931 = vsel %vm2689, %v2639, 0
        %v2934 = vsel %vm2689, %v2640, 0
        %v2937 = vsel %vm2689, %v2641, 0
        %v2940 = vsel %vm2689, %v2642, 0
        %v2943 = vsel %vm2689, %v2643, 0
        %v2946 = vsel %vm2689, %v2644, 0
        %v2949 = vsel %vm2689, %v2645, 0
        %v2952 = vsel %vm2689, %v2646, 0
        %v2955 = vsel %vm2689, %v2647, 0
        %v2958 = vsel %vm2689, %v2648, 0
        %v2961 = vsel %vm2689, %v2649, 0
        %v2964 = vsel %vm2689, %v2650, 0
        %v2967 = vsel %vm2689, %v2651, 0
        %v2970 = vsel %vm2689, %v2652, 0
        %v2973 = vsel %vm2689, %v2653, 0
        %v2976 = vsel %vm2689, %v2654, 0
        %v2979 = vsel %vm2689, %v2655, 0
        %v2982 = vsel %vm2689, %v2656, 0
        %v2985 = vsel %vm2689, %v2657, 0
        %v2988 = vsel %vm2689, %v2658, 0
        %v2991 = vsel %vm2689, %v2659, 0
        %v2994 = vsel %vm2689, %v2660, 0
        %v2997 = vsel %vm2689, %v2661, 0
        %v3000 = vsel %vm2689, %v2662, 0
        %v3003 = vsel %vm2689, %v2663, 0
        %v3006 = vsel %vm2689, %v2664, 0
        %v3009 = vsel %vm2689, %v2665, 0
        %v3012 = vsel %vm2689, %v2666, 0
        %v3015 = vsel %vm2689, %v2667, 0
        %v3018 = vsel %vm2689, %v2668, 0
        %v3021 = vsel %vm2689, %v2669, 0
        %v3024 = vsel %vm2689, %v2670, 0
        %v3027 = vsel %vm2689, %v2671, 0
        %v3030 = vsel %vm2689, %v2672, 0
        %v3033 = vsel %vm2689, %v2673, 0
        %v3036 = vsel %vm2689, %v2674, 0
        %v3039 = vsel %vm2689, %v2675, 0
        %v3042 = vsel %vm2689, %v2676, 0
        %v3045 = vsel %vm2689, %v2677, 0
        %v3048 = vsel %vm2689, %v2678, 0
        %v3051 = vsel %vm2689, %v2679, 0
        %v3054 = vsel %vm2689, %v2680, 0
        %v3057 = vsel %vm2689, %v2681, 0
        %v3060 = vsel %vm2689, %v2682, 0
        %v3063 = vsel %vm2689, %v2683, 0
        %v3066 = vsel %vm2689, %v2684, 0
        %v3069 = vsel %vm2689, %v2685, 0
        %v3072 = vsel %vm2689, %v2686, 0
        %3074 = vmatpush.msra.mxu0 0.0
        %3075 = vmatpush.msra.mxu0 0.0
        %3076 = vmatpush.msra.mxu0 0.0
        %3077 = vmatpush.msra.mxu0 0.0
        %3078 = vmatpush.msra.mxu0 0.0
        %3079 = vmatpush.msra.mxu0 0.0
        %3080 = vmatpush.msra.mxu0 0.0
        %3081 = vmatpush.msra.mxu0 0.0
        %3082 = vmatpush.msra.mxu0 0.0
        %3083 = vmatpush.msra.mxu0 0.0
        %3084 = vmatpush.msra.mxu0 0.0
        %3085 = vmatpush.msra.mxu0 0.0
        %3086 = vmatpush.msra.mxu0 0.0
        %3087 = vmatpush.msra.mxu0 0.0
        %3088 = vmatpush.msra.mxu0 0.0
        %3089 = vmatpush.msra.mxu0 %v2687
        %3090 = vmatmul.f32.gmra.mxu0 %v2691
        %v3091 = vpop.f32.mrf.mxu0
        %v3092 = vadd.f32 0.0, %v3091
        %3093 = vmatmul.f32.gmra.mxu0 %v2694
        %v3094 = vpop.f32.mrf.mxu0
        %v3095 = vadd.f32 0.0, %v3094
        %3096 = vmatmul.f32.gmra.mxu0 %v2697
        %v3097 = vpop.f32.mrf.mxu0
        %v3098 = vadd.f32 0.0, %v3097
        %3099 = vmatmul.f32.gmra.mxu0 %v2700
        %v3100 = vpop.f32.mrf.mxu0
        %v3101 = vadd.f32 0.0, %v3100
        %3102 = vmatmul.f32.gmra.mxu0 %v2703
        %v3103 = vpop.f32.mrf.mxu0
        %v3104 = vadd.f32 0.0, %v3103
        %3105 = vmatmul.f32.gmra.mxu0 %v2706
        %v3106 = vpop.f32.mrf.mxu0
        %v3107 = vadd.f32 0.0, %v3106
        %3108 = vmatmul.f32.gmra.mxu0 %v2709
        %v3109 = vpop.f32.mrf.mxu0
        %v3110 = vadd.f32 0.0, %v3109
        %3111 = vmatmul.f32.gmra.mxu0 %v2712
        %v3112 = vpop.f32.mrf.mxu0
        %v3113 = vadd.f32 0.0, %v3112
        %3114 = vmatmul.f32.gmra.mxu0 %v2715
        %v3115 = vpop.f32.mrf.mxu0
        %v3116 = vadd.f32 0.0, %v3115
        %3117 = vmatmul.f32.gmra.mxu0 %v2718
        %v3118 = vpop.f32.mrf.mxu0
        %v3119 = vadd.f32 0.0, %v3118
        %3120 = vmatmul.f32.gmra.mxu0 %v2721
        %v3121 = vpop.f32.mrf.mxu0
        %v3122 = vadd.f32 0.0, %v3121
        %3123 = vmatmul.f32.gmra.mxu0 %v2724
        %v3124 = vpop.f32.mrf.mxu0
        %v3125 = vadd.f32 0.0, %v3124
        %3126 = vmatmul.f32.gmra.mxu0 %v2727
        %v3127 = vpop.f32.mrf.mxu0
        %v3128 = vadd.f32 0.0, %v3127
        %3129 = vmatmul.f32.gmra.mxu0 %v2730
        %v3130 = vpop.f32.mrf.mxu0
        %v3131 = vadd.f32 0.0, %v3130
        %3132 = vmatmul.f32.gmra.mxu0 %v2733
        %v3133 = vpop.f32.mrf.mxu0
        %v3134 = vadd.f32 0.0, %v3133
        %3135 = vmatmul.f32.gmra.mxu0 %v2736
        %v3136 = vpop.f32.mrf.mxu0
        %v3137 = vadd.f32 0.0, %v3136
        %3138 = vmatmul.f32.gmra.mxu0 %v2739
        %v3139 = vpop.f32.mrf.mxu0
        %v3140 = vadd.f32 0.0, %v3139
        %3141 = vmatmul.f32.gmra.mxu0 %v2742
        %v3142 = vpop.f32.mrf.mxu0
        %v3143 = vadd.f32 0.0, %v3142
        %3144 = vmatmul.f32.gmra.mxu0 %v2745
        %v3145 = vpop.f32.mrf.mxu0
        %v3146 = vadd.f32 0.0, %v3145
        %3147 = vmatmul.f32.gmra.mxu0 %v2748
        %v3148 = vpop.f32.mrf.mxu0
        %v3149 = vadd.f32 0.0, %v3148
        %3150 = vmatmul.f32.gmra.mxu0 %v2751
        %v3151 = vpop.f32.mrf.mxu0
        %v3152 = vadd.f32 0.0, %v3151
        %3153 = vmatmul.f32.gmra.mxu0 %v2754
        %v3154 = vpop.f32.mrf.mxu0
        %v3155 = vadd.f32 0.0, %v3154
        %3156 = vmatmul.f32.gmra.mxu0 %v2757
        %v3157 = vpop.f32.mrf.mxu0
        %v3158 = vadd.f32 0.0, %v3157
        %3159 = vmatmul.f32.gmra.mxu0 %v2760
        %v3160 = vpop.f32.mrf.mxu0
        %v3161 = vadd.f32 0.0, %v3160
        %3162 = vmatmul.f32.gmra.mxu0 %v2763
        %v3163 = vpop.f32.mrf.mxu0
        %v3164 = vadd.f32 0.0, %v3163
        %3165 = vmatmul.f32.gmra.mxu0 %v2766
        %v3166 = vpop.f32.mrf.mxu0
        %v3167 = vadd.f32 0.0, %v3166
        %3168 = vmatmul.f32.gmra.mxu0 %v2769
        %v3169 = vpop.f32.mrf.mxu0
        %v3170 = vadd.f32 0.0, %v3169
        %3171 = vmatmul.f32.gmra.mxu0 %v2772
        %v3172 = vpop.f32.mrf.mxu0
        %v3173 = vadd.f32 0.0, %v3172
        %3174 = vmatmul.f32.gmra.mxu0 %v2775
        %v3175 = vpop.f32.mrf.mxu0
        %v3176 = vadd.f32 0.0, %v3175
        %3177 = vmatmul.f32.gmra.mxu0 %v2778
        %v3178 = vpop.f32.mrf.mxu0
        %v3179 = vadd.f32 0.0, %v3178
        %3180 = vmatmul.f32.gmra.mxu0 %v2781
        %v3181 = vpop.f32.mrf.mxu0
        %v3182 = vadd.f32 0.0, %v3181
        %3183 = vmatmul.f32.gmra.mxu0 %v2784
        %v3184 = vpop.f32.mrf.mxu0
        %v3185 = vadd.f32 0.0, %v3184
        %3186 = vmatmul.f32.gmra.mxu0 %v2787
        %v3187 = vpop.f32.mrf.mxu0
        %v3188 = vadd.f32 0.0, %v3187
        %3189 = vmatmul.f32.gmra.mxu0 %v2790
        %v3190 = vpop.f32.mrf.mxu0
        %v3191 = vadd.f32 0.0, %v3190
        %3192 = vmatmul.f32.gmra.mxu0 %v2793
        %v3193 = vpop.f32.mrf.mxu0
        %v3194 = vadd.f32 0.0, %v3193
        %3195 = vmatmul.f32.gmra.mxu0 %v2796
        %v3196 = vpop.f32.mrf.mxu0
        %v3197 = vadd.f32 0.0, %v3196
        %3198 = vmatmul.f32.gmra.mxu0 %v2799
        %v3199 = vpop.f32.mrf.mxu0
        %v3200 = vadd.f32 0.0, %v3199
        %3201 = vmatmul.f32.gmra.mxu0 %v2802
        %v3202 = vpop.f32.mrf.mxu0
        %v3203 = vadd.f32 0.0, %v3202
        %3204 = vmatmul.f32.gmra.mxu0 %v2805
        %v3205 = vpop.f32.mrf.mxu0
        %v3206 = vadd.f32 0.0, %v3205
        %3207 = vmatmul.f32.gmra.mxu0 %v2808
        %v3208 = vpop.f32.mrf.mxu0
        %v3209 = vadd.f32 0.0, %v3208
        %3210 = vmatmul.f32.gmra.mxu0 %v2811
        %v3211 = vpop.f32.mrf.mxu0
        %v3212 = vadd.f32 0.0, %v3211
        %3213 = vmatmul.f32.gmra.mxu0 %v2814
        %v3214 = vpop.f32.mrf.mxu0
        %v3215 = vadd.f32 0.0, %v3214
        %3216 = vmatmul.f32.gmra.mxu0 %v2817
        %v3217 = vpop.f32.mrf.mxu0
        %v3218 = vadd.f32 0.0, %v3217
        %3219 = vmatmul.f32.gmra.mxu0 %v2820
        %v3220 = vpop.f32.mrf.mxu0
        %v3221 = vadd.f32 0.0, %v3220
        %3222 = vmatmul.f32.gmra.mxu0 %v2823
        %v3223 = vpop.f32.mrf.mxu0
        %v3224 = vadd.f32 0.0, %v3223
        %3225 = vmatmul.f32.gmra.mxu0 %v2826
        %v3226 = vpop.f32.mrf.mxu0
        %v3227 = vadd.f32 0.0, %v3226
        %3228 = vmatmul.f32.gmra.mxu0 %v2829
        %v3229 = vpop.f32.mrf.mxu0
        %v3230 = vadd.f32 0.0, %v3229
        %3231 = vmatmul.f32.gmra.mxu0 %v2832
        %v3232 = vpop.f32.mrf.mxu0
        %v3233 = vadd.f32 0.0, %v3232
        %3234 = vmatmul.f32.gmra.mxu0 %v2835
        %v3235 = vpop.f32.mrf.mxu0
        %v3236 = vadd.f32 0.0, %v3235
        %3237 = vmatmul.f32.gmra.mxu0 %v2838
        %v3238 = vpop.f32.mrf.mxu0
        %v3239 = vadd.f32 0.0, %v3238
        %3240 = vmatmul.f32.gmra.mxu0 %v2841
        %v3241 = vpop.f32.mrf.mxu0
        %v3242 = vadd.f32 0.0, %v3241
        %3243 = vmatmul.f32.gmra.mxu0 %v2844
        %v3244 = vpop.f32.mrf.mxu0
        %v3245 = vadd.f32 0.0, %v3244
        %3246 = vmatmul.f32.gmra.mxu0 %v2847
        %v3247 = vpop.f32.mrf.mxu0
        %v3248 = vadd.f32 0.0, %v3247
        %3249 = vmatmul.f32.gmra.mxu0 %v2850
        %v3250 = vpop.f32.mrf.mxu0
        %v3251 = vadd.f32 0.0, %v3250
        %3252 = vmatmul.f32.gmra.mxu0 %v2853
        %v3253 = vpop.f32.mrf.mxu0
        %v3254 = vadd.f32 0.0, %v3253
        %3255 = vmatmul.f32.gmra.mxu0 %v2856
        %v3256 = vpop.f32.mrf.mxu0
        %v3257 = vadd.f32 0.0, %v3256
        %3258 = vmatmul.f32.gmra.mxu0 %v2859
        %v3259 = vpop.f32.mrf.mxu0
        %v3260 = vadd.f32 0.0, %v3259
        %3261 = vmatmul.f32.gmra.mxu0 %v2862
        %v3262 = vpop.f32.mrf.mxu0
        %v3263 = vadd.f32 0.0, %v3262
        %3264 = vmatmul.f32.gmra.mxu0 %v2865
        %v3265 = vpop.f32.mrf.mxu0
        %v3266 = vadd.f32 0.0, %v3265
        %3267 = vmatmul.f32.gmra.mxu0 %v2868
        %v3268 = vpop.f32.mrf.mxu0
        %v3269 = vadd.f32 0.0, %v3268
        %3270 = vmatmul.f32.gmra.mxu0 %v2871
        %v3271 = vpop.f32.mrf.mxu0
        %v3272 = vadd.f32 0.0, %v3271
        %3273 = vmatmul.f32.gmra.mxu0 %v2874
        %v3274 = vpop.f32.mrf.mxu0
        %v3275 = vadd.f32 0.0, %v3274
        %3276 = vmatmul.f32.gmra.mxu0 %v2877
        %v3277 = vpop.f32.mrf.mxu0
        %v3278 = vadd.f32 0.0, %v3277
        %3279 = vmatmul.f32.gmra.mxu0 %v2880
        %v3280 = vpop.f32.mrf.mxu0
        %v3281 = vadd.f32 0.0, %v3280
        %3282 = vmatmul.f32.gmra.mxu0 %v2883
        %v3283 = vpop.f32.mrf.mxu0
        %v3284 = vadd.f32 0.0, %v3283
        %3285 = vmatmul.f32.gmra.mxu0 %v2886
        %v3286 = vpop.f32.mrf.mxu0
        %v3287 = vadd.f32 0.0, %v3286
        %3288 = vmatmul.f32.gmra.mxu0 %v2889
        %v3289 = vpop.f32.mrf.mxu0
        %v3290 = vadd.f32 0.0, %v3289
        %3291 = vmatmul.f32.gmra.mxu0 %v2892
        %v3292 = vpop.f32.mrf.mxu0
        %v3293 = vadd.f32 0.0, %v3292
        %3294 = vmatmul.f32.gmra.mxu0 %v2895
        %v3295 = vpop.f32.mrf.mxu0
        %v3296 = vadd.f32 0.0, %v3295
        %3297 = vmatmul.f32.gmra.mxu0 %v2898
        %v3298 = vpop.f32.mrf.mxu0
        %v3299 = vadd.f32 0.0, %v3298
        %3300 = vmatmul.f32.gmra.mxu0 %v2901
        %v3301 = vpop.f32.mrf.mxu0
        %v3302 = vadd.f32 0.0, %v3301
        %3303 = vmatmul.f32.gmra.mxu0 %v2904
        %v3304 = vpop.f32.mrf.mxu0
        %v3305 = vadd.f32 0.0, %v3304
        %3306 = vmatmul.f32.gmra.mxu0 %v2907
        %v3307 = vpop.f32.mrf.mxu0
        %v3308 = vadd.f32 0.0, %v3307
        %3309 = vmatmul.f32.gmra.mxu0 %v2910
        %v3310 = vpop.f32.mrf.mxu0
        %v3311 = vadd.f32 0.0, %v3310
        %3312 = vmatmul.f32.gmra.mxu0 %v2913
        %v3313 = vpop.f32.mrf.mxu0
        %v3314 = vadd.f32 0.0, %v3313
        %3315 = vmatmul.f32.gmra.mxu0 %v2916
        %v3316 = vpop.f32.mrf.mxu0
        %v3317 = vadd.f32 0.0, %v3316
        %3318 = vmatmul.f32.gmra.mxu0 %v2919
        %v3319 = vpop.f32.mrf.mxu0
        %v3320 = vadd.f32 0.0, %v3319
        %3321 = vmatmul.f32.gmra.mxu0 %v2922
        %v3322 = vpop.f32.mrf.mxu0
        %v3323 = vadd.f32 0.0, %v3322
        %3324 = vmatmul.f32.gmra.mxu0 %v2925
        %v3325 = vpop.f32.mrf.mxu0
        %v3326 = vadd.f32 0.0, %v3325
        %3327 = vmatmul.f32.gmra.mxu0 %v2928
        %v3328 = vpop.f32.mrf.mxu0
        %v3329 = vadd.f32 0.0, %v3328
        %3330 = vmatmul.f32.gmra.mxu0 %v2931
        %v3331 = vpop.f32.mrf.mxu0
        %v3332 = vadd.f32 0.0, %v3331
        %3333 = vmatmul.f32.gmra.mxu0 %v2934
        %v3334 = vpop.f32.mrf.mxu0
        %v3335 = vadd.f32 0.0, %v3334
        %3336 = vmatmul.f32.gmra.mxu0 %v2937
        %v3337 = vpop.f32.mrf.mxu0
        %v3338 = vadd.f32 0.0, %v3337
        %3339 = vmatmul.f32.gmra.mxu0 %v2940
        %v3340 = vpop.f32.mrf.mxu0
        %v3341 = vadd.f32 0.0, %v3340
        %3342 = vmatmul.f32.gmra.mxu0 %v2943
        %v3343 = vpop.f32.mrf.mxu0
        %v3344 = vadd.f32 0.0, %v3343
        %3345 = vmatmul.f32.gmra.mxu0 %v2946
        %v3346 = vpop.f32.mrf.mxu0
        %v3347 = vadd.f32 0.0, %v3346
        %3348 = vmatmul.f32.gmra.mxu0 %v2949
        %v3349 = vpop.f32.mrf.mxu0
        %v3350 = vadd.f32 0.0, %v3349
        %3351 = vmatmul.f32.gmra.mxu0 %v2952
        %v3352 = vpop.f32.mrf.mxu0
        %v3353 = vadd.f32 0.0, %v3352
        %3354 = vmatmul.f32.gmra.mxu0 %v2955
        %v3355 = vpop.f32.mrf.mxu0
        %v3356 = vadd.f32 0.0, %v3355
        %3357 = vmatmul.f32.gmra.mxu0 %v2958
        %v3358 = vpop.f32.mrf.mxu0
        %v3359 = vadd.f32 0.0, %v3358
        %3360 = vmatmul.f32.gmra.mxu0 %v2961
        %v3361 = vpop.f32.mrf.mxu0
        %v3362 = vadd.f32 0.0, %v3361
        %3363 = vmatmul.f32.gmra.mxu0 %v2964
        %v3364 = vpop.f32.mrf.mxu0
        %v3365 = vadd.f32 0.0, %v3364
        %3366 = vmatmul.f32.gmra.mxu0 %v2967
        %v3367 = vpop.f32.mrf.mxu0
        %v3368 = vadd.f32 0.0, %v3367
        %3369 = vmatmul.f32.gmra.mxu0 %v2970
        %v3370 = vpop.f32.mrf.mxu0
        %v3371 = vadd.f32 0.0, %v3370
        %3372 = vmatmul.f32.gmra.mxu0 %v2973
        %v3373 = vpop.f32.mrf.mxu0
        %v3374 = vadd.f32 0.0, %v3373
        %3375 = vmatmul.f32.gmra.mxu0 %v2976
        %v3376 = vpop.f32.mrf.mxu0
        %v3377 = vadd.f32 0.0, %v3376
        %3378 = vmatmul.f32.gmra.mxu0 %v2979
        %v3379 = vpop.f32.mrf.mxu0
        %v3380 = vadd.f32 0.0, %v3379
        %3381 = vmatmul.f32.gmra.mxu0 %v2982
        %v3382 = vpop.f32.mrf.mxu0
        %v3383 = vadd.f32 0.0, %v3382
        %3384 = vmatmul.f32.gmra.mxu0 %v2985
        %v3385 = vpop.f32.mrf.mxu0
        %v3386 = vadd.f32 0.0, %v3385
        %3387 = vmatmul.f32.gmra.mxu0 %v2988
        %v3388 = vpop.f32.mrf.mxu0
        %v3389 = vadd.f32 0.0, %v3388
        %3390 = vmatmul.f32.gmra.mxu0 %v2991
        %v3391 = vpop.f32.mrf.mxu0
        %v3392 = vadd.f32 0.0, %v3391
        %3393 = vmatmul.f32.gmra.mxu0 %v2994
        %v3394 = vpop.f32.mrf.mxu0
        %v3395 = vadd.f32 0.0, %v3394
        %3396 = vmatmul.f32.gmra.mxu0 %v2997
        %v3397 = vpop.f32.mrf.mxu0
        %v3398 = vadd.f32 0.0, %v3397
        %3399 = vmatmul.f32.gmra.mxu0 %v3000
        %v3400 = vpop.f32.mrf.mxu0
        %v3401 = vadd.f32 0.0, %v3400
        %3402 = vmatmul.f32.gmra.mxu0 %v3003
        %v3403 = vpop.f32.mrf.mxu0
        %v3404 = vadd.f32 0.0, %v3403
        %3405 = vmatmul.f32.gmra.mxu0 %v3006
        %v3406 = vpop.f32.mrf.mxu0
        %v3407 = vadd.f32 0.0, %v3406
        %3408 = vmatmul.f32.gmra.mxu0 %v3009
        %v3409 = vpop.f32.mrf.mxu0
        %v3410 = vadd.f32 0.0, %v3409
        %3411 = vmatmul.f32.gmra.mxu0 %v3012
        %v3412 = vpop.f32.mrf.mxu0
        %v3413 = vadd.f32 0.0, %v3412
        %3414 = vmatmul.f32.gmra.mxu0 %v3015
        %v3415 = vpop.f32.mrf.mxu0
        %v3416 = vadd.f32 0.0, %v3415
        %3417 = vmatmul.f32.gmra.mxu0 %v3018
        %v3418 = vpop.f32.mrf.mxu0
        %v3419 = vadd.f32 0.0, %v3418
        %3420 = vmatmul.f32.gmra.mxu0 %v3021
        %v3421 = vpop.f32.mrf.mxu0
        %v3422 = vadd.f32 0.0, %v3421
        %3423 = vmatmul.f32.gmra.mxu0 %v3024
        %v3424 = vpop.f32.mrf.mxu0
        %v3425 = vadd.f32 0.0, %v3424
        %3426 = vmatmul.f32.gmra.mxu0 %v3027
        %v3427 = vpop.f32.mrf.mxu0
        %v3428 = vadd.f32 0.0, %v3427
        %3429 = vmatmul.f32.gmra.mxu0 %v3030
        %v3430 = vpop.f32.mrf.mxu0
        %v3431 = vadd.f32 0.0, %v3430
        %3432 = vmatmul.f32.gmra.mxu0 %v3033
        %v3433 = vpop.f32.mrf.mxu0
        %v3434 = vadd.f32 0.0, %v3433
        %3435 = vmatmul.f32.gmra.mxu0 %v3036
        %v3436 = vpop.f32.mrf.mxu0
        %v3437 = vadd.f32 0.0, %v3436
        %3438 = vmatmul.f32.gmra.mxu0 %v3039
        %v3439 = vpop.f32.mrf.mxu0
        %v3440 = vadd.f32 0.0, %v3439
        %3441 = vmatmul.f32.gmra.mxu0 %v3042
        %v3442 = vpop.f32.mrf.mxu0
        %v3443 = vadd.f32 0.0, %v3442
        %3444 = vmatmul.f32.gmra.mxu0 %v3045
        %v3445 = vpop.f32.mrf.mxu0
        %v3446 = vadd.f32 0.0, %v3445
        %3447 = vmatmul.f32.gmra.mxu0 %v3048
        %v3448 = vpop.f32.mrf.mxu0
        %v3449 = vadd.f32 0.0, %v3448
        %3450 = vmatmul.f32.gmra.mxu0 %v3051
        %v3451 = vpop.f32.mrf.mxu0
        %v3452 = vadd.f32 0.0, %v3451
        %3453 = vmatmul.f32.gmra.mxu0 %v3054
        %v3454 = vpop.f32.mrf.mxu0
        %v3455 = vadd.f32 0.0, %v3454
        %3456 = vmatmul.f32.gmra.mxu0 %v3057
        %v3457 = vpop.f32.mrf.mxu0
        %v3458 = vadd.f32 0.0, %v3457
        %3459 = vmatmul.f32.gmra.mxu0 %v3060
        %v3460 = vpop.f32.mrf.mxu0
        %v3461 = vadd.f32 0.0, %v3460
        %3462 = vmatmul.f32.gmra.mxu0 %v3063
        %v3463 = vpop.f32.mrf.mxu0
        %v3464 = vadd.f32 0.0, %v3463
        %3465 = vmatmul.f32.gmra.mxu0 %v3066
        %v3466 = vpop.f32.mrf.mxu0
        %v3467 = vadd.f32 0.0, %v3466
        %3468 = vmatmul.f32.gmra.mxu0 %v3069
        %v3469 = vpop.f32.mrf.mxu0
        %v3470 = vadd.f32 0.0, %v3469
        %3471 = vmatmul.f32.gmra.mxu0 %v3072
        %v3472 = vpop.f32.mrf.mxu0
        %v3473 = vadd.f32 0.0, %v3472
        %3474 = vdwg.mxu0
        %3475 = vrot.lane.b32.xlu0 %v2559, 120
        %v3476 = vpop.permute.xlu0 %3475
        %3477 = vrot.lane.b32.xlu0 %v2560, 120
        %v3478 = vpop.permute.xlu0 %3477
        %3479 = vrot.lane.b32.xlu0 %v2561, 120
        %v3480 = vpop.permute.xlu0 %3479
        %3481 = vrot.lane.b32.xlu0 %v2562, 120
        %v3482 = vpop.permute.xlu0 %3481
        %3483 = vrot.lane.b32.xlu0 %v2563, 120
        %v3484 = vpop.permute.xlu0 %3483
        %3485 = vrot.lane.b32.xlu0 %v2564, 120
        %v3486 = vpop.permute.xlu0 %3485
        %3487 = vrot.lane.b32.xlu0 %v2565, 120
        %v3488 = vpop.permute.xlu0 %3487
        %3489 = vrot.lane.b32.xlu0 %v2566, 120
        %v3490 = vpop.permute.xlu0 %3489
        %3491 = vrot.lane.b32.xlu0 %v2567, 120
        %v3492 = vpop.permute.xlu0 %3491
        %3493 = vrot.lane.b32.xlu0 %v2568, 120
        %v3494 = vpop.permute.xlu0 %3493
        %3495 = vrot.lane.b32.xlu0 %v2569, 120
        %v3496 = vpop.permute.xlu0 %3495
        %3497 = vrot.lane.b32.xlu0 %v2570, 120
        %v3498 = vpop.permute.xlu0 %3497
        %3499 = vrot.lane.b32.xlu0 %v2571, 120
        %v3500 = vpop.permute.xlu0 %3499
        %3501 = vrot.lane.b32.xlu0 %v2572, 120
        %v3502 = vpop.permute.xlu0 %3501
        %3503 = vrot.lane.b32.xlu0 %v2573, 120
        %v3504 = vpop.permute.xlu0 %3503
        %3505 = vrot.lane.b32.xlu0 %v2574, 120
        %v3506 = vpop.permute.xlu0 %3505
        %3507 = vrot.lane.b32.xlu0 %v2575, 120
        %v3508 = vpop.permute.xlu0 %3507
        %3509 = vrot.lane.b32.xlu0 %v2576, 120
        %v3510 = vpop.permute.xlu0 %3509
        %3511 = vrot.lane.b32.xlu0 %v2577, 120
        %v3512 = vpop.permute.xlu0 %3511
        %3513 = vrot.lane.b32.xlu0 %v2578, 120
        %v3514 = vpop.permute.xlu0 %3513
        %3515 = vrot.lane.b32.xlu0 %v2579, 120
        %v3516 = vpop.permute.xlu0 %3515
        %3517 = vrot.lane.b32.xlu0 %v2580, 120
        %v3518 = vpop.permute.xlu0 %3517
        %3519 = vrot.lane.b32.xlu0 %v2581, 120
        %v3520 = vpop.permute.xlu0 %3519
        %3521 = vrot.lane.b32.xlu0 %v2582, 120
        %v3522 = vpop.permute.xlu0 %3521
        %3523 = vrot.lane.b32.xlu0 %v2583, 120
        %v3524 = vpop.permute.xlu0 %3523
        %3525 = vrot.lane.b32.xlu0 %v2584, 120
        %v3526 = vpop.permute.xlu0 %3525
        %3527 = vrot.lane.b32.xlu0 %v2585, 120
        %v3528 = vpop.permute.xlu0 %3527
        %3529 = vrot.lane.b32.xlu0 %v2586, 120
        %v3530 = vpop.permute.xlu0 %3529
        %3531 = vrot.lane.b32.xlu0 %v2587, 120
        %v3532 = vpop.permute.xlu0 %3531
        %3533 = vrot.lane.b32.xlu0 %v2588, 120
        %v3534 = vpop.permute.xlu0 %3533
        %3535 = vrot.lane.b32.xlu0 %v2589, 120
        %v3536 = vpop.permute.xlu0 %3535
        %3537 = vrot.lane.b32.xlu0 %v2590, 120
        %v3538 = vpop.permute.xlu0 %3537
        %3539 = vrot.lane.b32.xlu0 %v2591, 120
        %v3540 = vpop.permute.xlu0 %3539
        %3541 = vrot.lane.b32.xlu0 %v2592, 120
        %v3542 = vpop.permute.xlu0 %3541
        %3543 = vrot.lane.b32.xlu0 %v2593, 120
        %v3544 = vpop.permute.xlu0 %3543
        %3545 = vrot.lane.b32.xlu0 %v2594, 120
        %v3546 = vpop.permute.xlu0 %3545
        %3547 = vrot.lane.b32.xlu0 %v2595, 120
        %v3548 = vpop.permute.xlu0 %3547
        %3549 = vrot.lane.b32.xlu0 %v2596, 120
        %v3550 = vpop.permute.xlu0 %3549
        %3551 = vrot.lane.b32.xlu0 %v2597, 120
        %v3552 = vpop.permute.xlu0 %3551
        %3553 = vrot.lane.b32.xlu0 %v2598, 120
        %v3554 = vpop.permute.xlu0 %3553
        %3555 = vrot.lane.b32.xlu0 %v2599, 120
        %v3556 = vpop.permute.xlu0 %3555
        %3557 = vrot.lane.b32.xlu0 %v2600, 120
        %v3558 = vpop.permute.xlu0 %3557
        %3559 = vrot.lane.b32.xlu0 %v2601, 120
        %v3560 = vpop.permute.xlu0 %3559
        %3561 = vrot.lane.b32.xlu0 %v2602, 120
        %v3562 = vpop.permute.xlu0 %3561
        %3563 = vrot.lane.b32.xlu0 %v2603, 120
        %v3564 = vpop.permute.xlu0 %3563
        %3565 = vrot.lane.b32.xlu0 %v2604, 120
        %v3566 = vpop.permute.xlu0 %3565
        %3567 = vrot.lane.b32.xlu0 %v2605, 120
        %v3568 = vpop.permute.xlu0 %3567
        %3569 = vrot.lane.b32.xlu0 %v2606, 120
        %v3570 = vpop.permute.xlu0 %3569
        %3571 = vrot.lane.b32.xlu0 %v2607, 120
        %v3572 = vpop.permute.xlu0 %3571
        %3573 = vrot.lane.b32.xlu0 %v2608, 120
        %v3574 = vpop.permute.xlu0 %3573
        %3575 = vrot.lane.b32.xlu0 %v2609, 120
        %v3576 = vpop.permute.xlu0 %3575
        %3577 = vrot.lane.b32.xlu0 %v2610, 120
        %v3578 = vpop.permute.xlu0 %3577
        %3579 = vrot.lane.b32.xlu0 %v2611, 120
        %v3580 = vpop.permute.xlu0 %3579
        %3581 = vrot.lane.b32.xlu0 %v2612, 120
        %v3582 = vpop.permute.xlu0 %3581
        %3583 = vrot.lane.b32.xlu0 %v2613, 120
        %v3584 = vpop.permute.xlu0 %3583
        %3585 = vrot.lane.b32.xlu0 %v2614, 120
        %v3586 = vpop.permute.xlu0 %3585
        %3587 = vrot.lane.b32.xlu0 %v2615, 120
        %v3588 = vpop.permute.xlu0 %3587
        %3589 = vrot.lane.b32.xlu0 %v2616, 120
        %v3590 = vpop.permute.xlu0 %3589
        %3591 = vrot.lane.b32.xlu0 %v2617, 120
        %v3592 = vpop.permute.xlu0 %3591
        %3593 = vrot.lane.b32.xlu0 %v2618, 120
        %v3594 = vpop.permute.xlu0 %3593
        %3595 = vrot.lane.b32.xlu0 %v2619, 120
        %v3596 = vpop.permute.xlu0 %3595
        %3597 = vrot.lane.b32.xlu0 %v2620, 120
        %v3598 = vpop.permute.xlu0 %3597
        %3599 = vrot.lane.b32.xlu0 %v2621, 120
        %v3600 = vpop.permute.xlu0 %3599
        %3601 = vrot.lane.b32.xlu0 %v2622, 120
        %v3602 = vpop.permute.xlu0 %3601
        %3603 = vrot.lane.b32.xlu0 %v2623, 120
        %v3604 = vpop.permute.xlu0 %3603
        %3605 = vrot.lane.b32.xlu0 %v2624, 120
        %v3606 = vpop.permute.xlu0 %3605
        %3607 = vrot.lane.b32.xlu0 %v2625, 120
        %v3608 = vpop.permute.xlu0 %3607
        %3609 = vrot.lane.b32.xlu0 %v2626, 120
        %v3610 = vpop.permute.xlu0 %3609
        %3611 = vrot.lane.b32.xlu0 %v2627, 120
        %v3612 = vpop.permute.xlu0 %3611
        %3613 = vrot.lane.b32.xlu0 %v2628, 120
        %v3614 = vpop.permute.xlu0 %3613
        %3615 = vrot.lane.b32.xlu0 %v2629, 120
        %v3616 = vpop.permute.xlu0 %3615
        %3617 = vrot.lane.b32.xlu0 %v2630, 120
        %v3618 = vpop.permute.xlu0 %3617
        %3619 = vrot.lane.b32.xlu0 %v2631, 120
        %v3620 = vpop.permute.xlu0 %3619
        %3621 = vrot.lane.b32.xlu0 %v2632, 120
        %v3622 = vpop.permute.xlu0 %3621
        %3623 = vrot.lane.b32.xlu0 %v2633, 120
        %v3624 = vpop.permute.xlu0 %3623
        %3625 = vrot.lane.b32.xlu0 %v2634, 120
        %v3626 = vpop.permute.xlu0 %3625
        %3627 = vrot.lane.b32.xlu0 %v2635, 120
        %v3628 = vpop.permute.xlu0 %3627
        %3629 = vrot.lane.b32.xlu0 %v2636, 120
        %v3630 = vpop.permute.xlu0 %3629
        %3631 = vrot.lane.b32.xlu0 %v2637, 120
        %v3632 = vpop.permute.xlu0 %3631
        %3633 = vrot.lane.b32.xlu0 %v2638, 120
        %v3634 = vpop.permute.xlu0 %3633
        %3635 = vrot.lane.b32.xlu0 %v2639, 120
        %v3636 = vpop.permute.xlu0 %3635
        %3637 = vrot.lane.b32.xlu0 %v2640, 120
        %v3638 = vpop.permute.xlu0 %3637
        %3639 = vrot.lane.b32.xlu0 %v2641, 120
        %v3640 = vpop.permute.xlu0 %3639
        %3641 = vrot.lane.b32.xlu0 %v2642, 120
        %v3642 = vpop.permute.xlu0 %3641
        %3643 = vrot.lane.b32.xlu0 %v2643, 120
        %v3644 = vpop.permute.xlu0 %3643
        %3645 = vrot.lane.b32.xlu0 %v2644, 120
        %v3646 = vpop.permute.xlu0 %3645
        %3647 = vrot.lane.b32.xlu0 %v2645, 120
        %v3648 = vpop.permute.xlu0 %3647
        %3649 = vrot.lane.b32.xlu0 %v2646, 120
        %v3650 = vpop.permute.xlu0 %3649
        %3651 = vrot.lane.b32.xlu0 %v2647, 120
        %v3652 = vpop.permute.xlu0 %3651
        %3653 = vrot.lane.b32.xlu0 %v2648, 120
        %v3654 = vpop.permute.xlu0 %3653
        %3655 = vrot.lane.b32.xlu0 %v2649, 120
        %v3656 = vpop.permute.xlu0 %3655
        %3657 = vrot.lane.b32.xlu0 %v2650, 120
        %v3658 = vpop.permute.xlu0 %3657
        %3659 = vrot.lane.b32.xlu0 %v2651, 120
        %v3660 = vpop.permute.xlu0 %3659
        %3661 = vrot.lane.b32.xlu0 %v2652, 120
        %v3662 = vpop.permute.xlu0 %3661
        %3663 = vrot.lane.b32.xlu0 %v2653, 120
        %v3664 = vpop.permute.xlu0 %3663
        %3665 = vrot.lane.b32.xlu0 %v2654, 120
        %v3666 = vpop.permute.xlu0 %3665
        %3667 = vrot.lane.b32.xlu0 %v2655, 120
        %v3668 = vpop.permute.xlu0 %3667
        %3669 = vrot.lane.b32.xlu0 %v2656, 120
        %v3670 = vpop.permute.xlu0 %3669
        %3671 = vrot.lane.b32.xlu0 %v2657, 120
        %v3672 = vpop.permute.xlu0 %3671
        %3673 = vrot.lane.b32.xlu0 %v2658, 120
        %v3674 = vpop.permute.xlu0 %3673
        %3675 = vrot.lane.b32.xlu0 %v2659, 120
        %v3676 = vpop.permute.xlu0 %3675
        %3677 = vrot.lane.b32.xlu0 %v2660, 120
        %v3678 = vpop.permute.xlu0 %3677
        %3679 = vrot.lane.b32.xlu0 %v2661, 120
        %v3680 = vpop.permute.xlu0 %3679
        %3681 = vrot.lane.b32.xlu0 %v2662, 120
        %v3682 = vpop.permute.xlu0 %3681
        %3683 = vrot.lane.b32.xlu0 %v2663, 120
        %v3684 = vpop.permute.xlu0 %3683
        %3685 = vrot.lane.b32.xlu0 %v2664, 120
        %v3686 = vpop.permute.xlu0 %3685
        %3687 = vrot.lane.b32.xlu0 %v2665, 120
        %v3688 = vpop.permute.xlu0 %3687
        %3689 = vrot.lane.b32.xlu0 %v2666, 120
        %v3690 = vpop.permute.xlu0 %3689
        %3691 = vrot.lane.b32.xlu0 %v2667, 120
        %v3692 = vpop.permute.xlu0 %3691
        %3693 = vrot.lane.b32.xlu0 %v2668, 120
        %v3694 = vpop.permute.xlu0 %3693
        %3695 = vrot.lane.b32.xlu0 %v2669, 120
        %v3696 = vpop.permute.xlu0 %3695
        %3697 = vrot.lane.b32.xlu0 %v2670, 120
        %v3698 = vpop.permute.xlu0 %3697
        %3699 = vrot.lane.b32.xlu0 %v2671, 120
        %v3700 = vpop.permute.xlu0 %3699
        %3701 = vrot.lane.b32.xlu0 %v2672, 120
        %v3702 = vpop.permute.xlu0 %3701
        %3703 = vrot.lane.b32.xlu0 %v2673, 120
        %v3704 = vpop.permute.xlu0 %3703
        %3705 = vrot.lane.b32.xlu0 %v2674, 120
        %v3706 = vpop.permute.xlu0 %3705
        %3707 = vrot.lane.b32.xlu0 %v2675, 120
        %v3708 = vpop.permute.xlu0 %3707
        %3709 = vrot.lane.b32.xlu0 %v2676, 120
        %v3710 = vpop.permute.xlu0 %3709
        %3711 = vrot.lane.b32.xlu0 %v2677, 120
        %v3712 = vpop.permute.xlu0 %3711
        %3713 = vrot.lane.b32.xlu0 %v2678, 120
        %v3714 = vpop.permute.xlu0 %3713
        %3715 = vrot.lane.b32.xlu0 %v2679, 120
        %v3716 = vpop.permute.xlu0 %3715
        %3717 = vrot.lane.b32.xlu0 %v2680, 120
        %v3718 = vpop.permute.xlu0 %3717
        %3719 = vrot.lane.b32.xlu0 %v2681, 120
        %v3720 = vpop.permute.xlu0 %3719
        %3721 = vrot.lane.b32.xlu0 %v2682, 120
        %v3722 = vpop.permute.xlu0 %3721
        %3723 = vrot.lane.b32.xlu0 %v2683, 120
        %v3724 = vpop.permute.xlu0 %3723
        %3725 = vrot.lane.b32.xlu0 %v2684, 120
        %v3726 = vpop.permute.xlu0 %3725
        %3727 = vrot.lane.b32.xlu0 %v2685, 120
        %v3728 = vpop.permute.xlu0 %3727
        %3729 = vrot.lane.b32.xlu0 %v2686, 120
        %v3730 = vpop.permute.xlu0 %3729
        %vm3731 = vcmask 31744
        %v3732 = vsel %vm3731, %v3476, 0
        %v3734 = vsel %vm3731, %v3478, 0
        %v3736 = vsel %vm3731, %v3480, 0
        %v3738 = vsel %vm3731, %v3482, 0
        %v3740 = vsel %vm3731, %v3484, 0
        %v3742 = vsel %vm3731, %v3486, 0
        %v3744 = vsel %vm3731, %v3488, 0
        %v3746 = vsel %vm3731, %v3490, 0
        %v3748 = vsel %vm3731, %v3492, 0
        %v3750 = vsel %vm3731, %v3494, 0
        %v3752 = vsel %vm3731, %v3496, 0
        %v3754 = vsel %vm3731, %v3498, 0
        %v3756 = vsel %vm3731, %v3500, 0
        %v3758 = vsel %vm3731, %v3502, 0
        %v3760 = vsel %vm3731, %v3504, 0
        %v3762 = vsel %vm3731, %v3506, 0
        %v3764 = vsel %vm3731, %v3508, 0
        %v3766 = vsel %vm3731, %v3510, 0
        %v3768 = vsel %vm3731, %v3512, 0
        %v3770 = vsel %vm3731, %v3514, 0
        %v3772 = vsel %vm3731, %v3516, 0
        %v3774 = vsel %vm3731, %v3518, 0
        %v3776 = vsel %vm3731, %v3520, 0
        %v3778 = vsel %vm3731, %v3522, 0
        %v3780 = vsel %vm3731, %v3524, 0
        %v3782 = vsel %vm3731, %v3526, 0
        %v3784 = vsel %vm3731, %v3528, 0
        %v3786 = vsel %vm3731, %v3530, 0
        %v3788 = vsel %vm3731, %v3532, 0
        %v3790 = vsel %vm3731, %v3534, 0
        %v3792 = vsel %vm3731, %v3536, 0
        %v3794 = vsel %vm3731, %v3538, 0
        %v3796 = vsel %vm3731, %v3540, 0
        %v3798 = vsel %vm3731, %v3542, 0
        %v3800 = vsel %vm3731, %v3544, 0
        %v3802 = vsel %vm3731, %v3546, 0
        %v3804 = vsel %vm3731, %v3548, 0
        %v3806 = vsel %vm3731, %v3550, 0
        %v3808 = vsel %vm3731, %v3552, 0
        %v3810 = vsel %vm3731, %v3554, 0
        %v3812 = vsel %vm3731, %v3556, 0
        %v3814 = vsel %vm3731, %v3558, 0
        %v3816 = vsel %vm3731, %v3560, 0
        %v3818 = vsel %vm3731, %v3562, 0
        %v3820 = vsel %vm3731, %v3564, 0
        %v3822 = vsel %vm3731, %v3566, 0
        %v3824 = vsel %vm3731, %v3568, 0
        %v3826 = vsel %vm3731, %v3570, 0
        %v3828 = vsel %vm3731, %v3572, 0
        %v3830 = vsel %vm3731, %v3574, 0
        %v3832 = vsel %vm3731, %v3576, 0
        %v3834 = vsel %vm3731, %v3578, 0
        %v3836 = vsel %vm3731, %v3580, 0
        %v3838 = vsel %vm3731, %v3582, 0
        %v3840 = vsel %vm3731, %v3584, 0
        %v3842 = vsel %vm3731, %v3586, 0
        %v3844 = vsel %vm3731, %v3588, 0
        %v3846 = vsel %vm3731, %v3590, 0
        %v3848 = vsel %vm3731, %v3592, 0
        %v3850 = vsel %vm3731, %v3594, 0
        %v3852 = vsel %vm3731, %v3596, 0
        %v3854 = vsel %vm3731, %v3598, 0
        %v3856 = vsel %vm3731, %v3600, 0
        %v3858 = vsel %vm3731, %v3602, 0
        %v3860 = vsel %vm3731, %v3604, 0
        %v3862 = vsel %vm3731, %v3606, 0
        %v3864 = vsel %vm3731, %v3608, 0
        %v3866 = vsel %vm3731, %v3610, 0
        %v3868 = vsel %vm3731, %v3612, 0
        %v3870 = vsel %vm3731, %v3614, 0
        %v3872 = vsel %vm3731, %v3616, 0
        %v3874 = vsel %vm3731, %v3618, 0
        %v3876 = vsel %vm3731, %v3620, 0
        %v3878 = vsel %vm3731, %v3622, 0
        %v3880 = vsel %vm3731, %v3624, 0
        %v3882 = vsel %vm3731, %v3626, 0
        %v3884 = vsel %vm3731, %v3628, 0
        %v3886 = vsel %vm3731, %v3630, 0
        %v3888 = vsel %vm3731, %v3632, 0
        %v3890 = vsel %vm3731, %v3634, 0
        %v3892 = vsel %vm3731, %v3636, 0
        %v3894 = vsel %vm3731, %v3638, 0
        %v3896 = vsel %vm3731, %v3640, 0
        %v3898 = vsel %vm3731, %v3642, 0
        %v3900 = vsel %vm3731, %v3644, 0
        %v3902 = vsel %vm3731, %v3646, 0
        %v3904 = vsel %vm3731, %v3648, 0
        %v3906 = vsel %vm3731, %v3650, 0
        %v3908 = vsel %vm3731, %v3652, 0
        %v3910 = vsel %vm3731, %v3654, 0
        %v3912 = vsel %vm3731, %v3656, 0
        %v3914 = vsel %vm3731, %v3658, 0
        %v3916 = vsel %vm3731, %v3660, 0
        %v3918 = vsel %vm3731, %v3662, 0
        %v3920 = vsel %vm3731, %v3664, 0
        %v3922 = vsel %vm3731, %v3666, 0
        %v3924 = vsel %vm3731, %v3668, 0
        %v3926 = vsel %vm3731, %v3670, 0
        %v3928 = vsel %vm3731, %v3672, 0
        %v3930 = vsel %vm3731, %v3674, 0
        %v3932 = vsel %vm3731, %v3676, 0
        %v3934 = vsel %vm3731, %v3678, 0
        %v3936 = vsel %vm3731, %v3680, 0
        %v3938 = vsel %vm3731, %v3682, 0
        %v3940 = vsel %vm3731, %v3684, 0
        %v3942 = vsel %vm3731, %v3686, 0
        %v3944 = vsel %vm3731, %v3688, 0
        %v3946 = vsel %vm3731, %v3690, 0
        %v3948 = vsel %vm3731, %v3692, 0
        %v3950 = vsel %vm3731, %v3694, 0
        %v3952 = vsel %vm3731, %v3696, 0
        %v3954 = vsel %vm3731, %v3698, 0
        %v3956 = vsel %vm3731, %v3700, 0
        %v3958 = vsel %vm3731, %v3702, 0
        %v3960 = vsel %vm3731, %v3704, 0
        %v3962 = vsel %vm3731, %v3706, 0
        %v3964 = vsel %vm3731, %v3708, 0
        %v3966 = vsel %vm3731, %v3710, 0
        %v3968 = vsel %vm3731, %v3712, 0
        %v3970 = vsel %vm3731, %v3714, 0
        %v3972 = vsel %vm3731, %v3716, 0
        %v3974 = vsel %vm3731, %v3718, 0
        %v3976 = vsel %vm3731, %v3720, 0
        %v3978 = vsel %vm3731, %v3722, 0
        %v3980 = vsel %vm3731, %v3724, 0
        %v3982 = vsel %vm3731, %v3726, 0
        %v3984 = vsel %vm3731, %v3728, 0
        %v3986 = vsel %vm3731, %v3730, 0
        %vm3988 = vcmask 1043456
        %v3990 = vsel %vm3988, %v2688, 0
        %3992 = vmatpush.msra.mxu0 0.0
        %3993 = vmatpush.msra.mxu0 0.0
        %3994 = vmatpush.msra.mxu0 0.0
        %3995 = vmatpush.msra.mxu0 0.0
        %3996 = vmatpush.msra.mxu0 0.0
        %3997 = vmatpush.msra.mxu0 0.0
        %3998 = vmatpush.msra.mxu0 0.0
        %3999 = vmatpush.msra.mxu0 0.0
        %4000 = vmatpush.msra.mxu0 0.0
        %4001 = vmatpush.msra.mxu0 0.0
        %4002 = vmatpush.msra.mxu0 0.0
        %4003 = vmatpush.msra.mxu0 0.0
        %4004 = vmatpush.msra.mxu0 0.0
        %4005 = vmatpush.msra.mxu0 0.0
        %4006 = vmatpush.msra.mxu0 0.0
        %4007 = vmatpush.msra.mxu0 %v3990
        %4008 = vmatmul.f32.gmra.mxu0 %v3732
        %v4009 = vpop.f32.mrf.mxu0
        %v4010 = vadd.f32 0.0, %v4009
        %4011 = vmatmul.f32.gmra.mxu0 %v3734
        %v4012 = vpop.f32.mrf.mxu0
        %v4013 = vadd.f32 0.0, %v4012
        %4014 = vmatmul.f32.gmra.mxu0 %v3736
        %v4015 = vpop.f32.mrf.mxu0
        %v4016 = vadd.f32 0.0, %v4015
        %4017 = vmatmul.f32.gmra.mxu0 %v3738
        %v4018 = vpop.f32.mrf.mxu0
        %v4019 = vadd.f32 0.0, %v4018
        %4020 = vmatmul.f32.gmra.mxu0 %v3740
        %v4021 = vpop.f32.mrf.mxu0
        %v4022 = vadd.f32 0.0, %v4021
        %4023 = vmatmul.f32.gmra.mxu0 %v3742
        %v4024 = vpop.f32.mrf.mxu0
        %v4025 = vadd.f32 0.0, %v4024
        %4026 = vmatmul.f32.gmra.mxu0 %v3744
        %v4027 = vpop.f32.mrf.mxu0
        %v4028 = vadd.f32 0.0, %v4027
        %4029 = vmatmul.f32.gmra.mxu0 %v3746
        %v4030 = vpop.f32.mrf.mxu0
        %v4031 = vadd.f32 0.0, %v4030
        %4032 = vmatmul.f32.gmra.mxu0 %v3748
        %v4033 = vpop.f32.mrf.mxu0
        %v4034 = vadd.f32 0.0, %v4033
        %4035 = vmatmul.f32.gmra.mxu0 %v3750
        %v4036 = vpop.f32.mrf.mxu0
        %v4037 = vadd.f32 0.0, %v4036
        %4038 = vmatmul.f32.gmra.mxu0 %v3752
        %v4039 = vpop.f32.mrf.mxu0
        %v4040 = vadd.f32 0.0, %v4039
        %4041 = vmatmul.f32.gmra.mxu0 %v3754
        %v4042 = vpop.f32.mrf.mxu0
        %v4043 = vadd.f32 0.0, %v4042
        %4044 = vmatmul.f32.gmra.mxu0 %v3756
        %v4045 = vpop.f32.mrf.mxu0
        %v4046 = vadd.f32 0.0, %v4045
        %4047 = vmatmul.f32.gmra.mxu0 %v3758
        %v4048 = vpop.f32.mrf.mxu0
        %v4049 = vadd.f32 0.0, %v4048
        %4050 = vmatmul.f32.gmra.mxu0 %v3760
        %v4051 = vpop.f32.mrf.mxu0
        %v4052 = vadd.f32 0.0, %v4051
        %4053 = vmatmul.f32.gmra.mxu0 %v3762
        %v4054 = vpop.f32.mrf.mxu0
        %v4055 = vadd.f32 0.0, %v4054
        %4056 = vmatmul.f32.gmra.mxu0 %v3764
        %v4057 = vpop.f32.mrf.mxu0
        %v4058 = vadd.f32 0.0, %v4057
        %4059 = vmatmul.f32.gmra.mxu0 %v3766
        %v4060 = vpop.f32.mrf.mxu0
        %v4061 = vadd.f32 0.0, %v4060
        %4062 = vmatmul.f32.gmra.mxu0 %v3768
        %v4063 = vpop.f32.mrf.mxu0
        %v4064 = vadd.f32 0.0, %v4063
        %4065 = vmatmul.f32.gmra.mxu0 %v3770
        %v4066 = vpop.f32.mrf.mxu0
        %v4067 = vadd.f32 0.0, %v4066
        %4068 = vmatmul.f32.gmra.mxu0 %v3772
        %v4069 = vpop.f32.mrf.mxu0
        %v4070 = vadd.f32 0.0, %v4069
        %4071 = vmatmul.f32.gmra.mxu0 %v3774
        %v4072 = vpop.f32.mrf.mxu0
        %v4073 = vadd.f32 0.0, %v4072
        %4074 = vmatmul.f32.gmra.mxu0 %v3776
        %v4075 = vpop.f32.mrf.mxu0
        %v4076 = vadd.f32 0.0, %v4075
        %4077 = vmatmul.f32.gmra.mxu0 %v3778
        %v4078 = vpop.f32.mrf.mxu0
        %v4079 = vadd.f32 0.0, %v4078
        %4080 = vmatmul.f32.gmra.mxu0 %v3780
        %v4081 = vpop.f32.mrf.mxu0
        %v4082 = vadd.f32 0.0, %v4081
        %4083 = vmatmul.f32.gmra.mxu0 %v3782
        %v4084 = vpop.f32.mrf.mxu0
        %v4085 = vadd.f32 0.0, %v4084
        %4086 = vmatmul.f32.gmra.mxu0 %v3784
        %v4087 = vpop.f32.mrf.mxu0
        %v4088 = vadd.f32 0.0, %v4087
        %4089 = vmatmul.f32.gmra.mxu0 %v3786
        %v4090 = vpop.f32.mrf.mxu0
        %v4091 = vadd.f32 0.0, %v4090
        %4092 = vmatmul.f32.gmra.mxu0 %v3788
        %v4093 = vpop.f32.mrf.mxu0
        %v4094 = vadd.f32 0.0, %v4093
        %4095 = vmatmul.f32.gmra.mxu0 %v3790
        %v4096 = vpop.f32.mrf.mxu0
        %v4097 = vadd.f32 0.0, %v4096
        %4098 = vmatmul.f32.gmra.mxu0 %v3792
        %v4099 = vpop.f32.mrf.mxu0
        %v4100 = vadd.f32 0.0, %v4099
        %4101 = vmatmul.f32.gmra.mxu0 %v3794
        %v4102 = vpop.f32.mrf.mxu0
        %v4103 = vadd.f32 0.0, %v4102
        %4104 = vmatmul.f32.gmra.mxu0 %v3796
        %v4105 = vpop.f32.mrf.mxu0
        %v4106 = vadd.f32 0.0, %v4105
        %4107 = vmatmul.f32.gmra.mxu0 %v3798
        %v4108 = vpop.f32.mrf.mxu0
        %v4109 = vadd.f32 0.0, %v4108
        %4110 = vmatmul.f32.gmra.mxu0 %v3800
        %v4111 = vpop.f32.mrf.mxu0
        %v4112 = vadd.f32 0.0, %v4111
        %4113 = vmatmul.f32.gmra.mxu0 %v3802
        %v4114 = vpop.f32.mrf.mxu0
        %v4115 = vadd.f32 0.0, %v4114
        %4116 = vmatmul.f32.gmra.mxu0 %v3804
        %v4117 = vpop.f32.mrf.mxu0
        %v4118 = vadd.f32 0.0, %v4117
        %4119 = vmatmul.f32.gmra.mxu0 %v3806
        %v4120 = vpop.f32.mrf.mxu0
        %v4121 = vadd.f32 0.0, %v4120
        %4122 = vmatmul.f32.gmra.mxu0 %v3808
        %v4123 = vpop.f32.mrf.mxu0
        %v4124 = vadd.f32 0.0, %v4123
        %4125 = vmatmul.f32.gmra.mxu0 %v3810
        %v4126 = vpop.f32.mrf.mxu0
        %v4127 = vadd.f32 0.0, %v4126
        %4128 = vmatmul.f32.gmra.mxu0 %v3812
        %v4129 = vpop.f32.mrf.mxu0
        %v4130 = vadd.f32 0.0, %v4129
        %4131 = vmatmul.f32.gmra.mxu0 %v3814
        %v4132 = vpop.f32.mrf.mxu0
        %v4133 = vadd.f32 0.0, %v4132
        %4134 = vmatmul.f32.gmra.mxu0 %v3816
        %v4135 = vpop.f32.mrf.mxu0
        %v4136 = vadd.f32 0.0, %v4135
        %4137 = vmatmul.f32.gmra.mxu0 %v3818
        %v4138 = vpop.f32.mrf.mxu0
        %v4139 = vadd.f32 0.0, %v4138
        %4140 = vmatmul.f32.gmra.mxu0 %v3820
        %v4141 = vpop.f32.mrf.mxu0
        %v4142 = vadd.f32 0.0, %v4141
        %4143 = vmatmul.f32.gmra.mxu0 %v3822
        %v4144 = vpop.f32.mrf.mxu0
        %v4145 = vadd.f32 0.0, %v4144
        %4146 = vmatmul.f32.gmra.mxu0 %v3824
        %v4147 = vpop.f32.mrf.mxu0
        %v4148 = vadd.f32 0.0, %v4147
        %4149 = vmatmul.f32.gmra.mxu0 %v3826
        %v4150 = vpop.f32.mrf.mxu0
        %v4151 = vadd.f32 0.0, %v4150
        %4152 = vmatmul.f32.gmra.mxu0 %v3828
        %v4153 = vpop.f32.mrf.mxu0
        %v4154 = vadd.f32 0.0, %v4153
        %4155 = vmatmul.f32.gmra.mxu0 %v3830
        %v4156 = vpop.f32.mrf.mxu0
        %v4157 = vadd.f32 0.0, %v4156
        %4158 = vmatmul.f32.gmra.mxu0 %v3832
        %v4159 = vpop.f32.mrf.mxu0
        %v4160 = vadd.f32 0.0, %v4159
        %4161 = vmatmul.f32.gmra.mxu0 %v3834
        %v4162 = vpop.f32.mrf.mxu0
        %v4163 = vadd.f32 0.0, %v4162
        %4164 = vmatmul.f32.gmra.mxu0 %v3836
        %v4165 = vpop.f32.mrf.mxu0
        %v4166 = vadd.f32 0.0, %v4165
        %4167 = vmatmul.f32.gmra.mxu0 %v3838
        %v4168 = vpop.f32.mrf.mxu0
        %v4169 = vadd.f32 0.0, %v4168
        %4170 = vmatmul.f32.gmra.mxu0 %v3840
        %v4171 = vpop.f32.mrf.mxu0
        %v4172 = vadd.f32 0.0, %v4171
        %4173 = vmatmul.f32.gmra.mxu0 %v3842
        %v4174 = vpop.f32.mrf.mxu0
        %v4175 = vadd.f32 0.0, %v4174
        %4176 = vmatmul.f32.gmra.mxu0 %v3844
        %v4177 = vpop.f32.mrf.mxu0
        %v4178 = vadd.f32 0.0, %v4177
        %4179 = vmatmul.f32.gmra.mxu0 %v3846
        %v4180 = vpop.f32.mrf.mxu0
        %v4181 = vadd.f32 0.0, %v4180
        %4182 = vmatmul.f32.gmra.mxu0 %v3848
        %v4183 = vpop.f32.mrf.mxu0
        %v4184 = vadd.f32 0.0, %v4183
        %4185 = vmatmul.f32.gmra.mxu0 %v3850
        %v4186 = vpop.f32.mrf.mxu0
        %v4187 = vadd.f32 0.0, %v4186
        %4188 = vmatmul.f32.gmra.mxu0 %v3852
        %v4189 = vpop.f32.mrf.mxu0
        %v4190 = vadd.f32 0.0, %v4189
        %4191 = vmatmul.f32.gmra.mxu0 %v3854
        %v4192 = vpop.f32.mrf.mxu0
        %v4193 = vadd.f32 0.0, %v4192
        %4194 = vmatmul.f32.gmra.mxu0 %v3856
        %v4195 = vpop.f32.mrf.mxu0
        %v4196 = vadd.f32 0.0, %v4195
        %4197 = vmatmul.f32.gmra.mxu0 %v3858
        %v4198 = vpop.f32.mrf.mxu0
        %v4199 = vadd.f32 0.0, %v4198
        %4200 = vmatmul.f32.gmra.mxu0 %v3860
        %v4201 = vpop.f32.mrf.mxu0
        %v4202 = vadd.f32 0.0, %v4201
        %4203 = vmatmul.f32.gmra.mxu0 %v3862
        %v4204 = vpop.f32.mrf.mxu0
        %v4205 = vadd.f32 0.0, %v4204
        %4206 = vmatmul.f32.gmra.mxu0 %v3864
        %v4207 = vpop.f32.mrf.mxu0
        %v4208 = vadd.f32 0.0, %v4207
        %4209 = vmatmul.f32.gmra.mxu0 %v3866
        %v4210 = vpop.f32.mrf.mxu0
        %v4211 = vadd.f32 0.0, %v4210
        %4212 = vmatmul.f32.gmra.mxu0 %v3868
        %v4213 = vpop.f32.mrf.mxu0
        %v4214 = vadd.f32 0.0, %v4213
        %4215 = vmatmul.f32.gmra.mxu0 %v3870
        %v4216 = vpop.f32.mrf.mxu0
        %v4217 = vadd.f32 0.0, %v4216
        %4218 = vmatmul.f32.gmra.mxu0 %v3872
        %v4219 = vpop.f32.mrf.mxu0
        %v4220 = vadd.f32 0.0, %v4219
        %4221 = vmatmul.f32.gmra.mxu0 %v3874
        %v4222 = vpop.f32.mrf.mxu0
        %v4223 = vadd.f32 0.0, %v4222
        %4224 = vmatmul.f32.gmra.mxu0 %v3876
        %v4225 = vpop.f32.mrf.mxu0
        %v4226 = vadd.f32 0.0, %v4225
        %4227 = vmatmul.f32.gmra.mxu0 %v3878
        %v4228 = vpop.f32.mrf.mxu0
        %v4229 = vadd.f32 0.0, %v4228
        %4230 = vmatmul.f32.gmra.mxu0 %v3880
        %v4231 = vpop.f32.mrf.mxu0
        %v4232 = vadd.f32 0.0, %v4231
        %4233 = vmatmul.f32.gmra.mxu0 %v3882
        %v4234 = vpop.f32.mrf.mxu0
        %v4235 = vadd.f32 0.0, %v4234
        %4236 = vmatmul.f32.gmra.mxu0 %v3884
        %v4237 = vpop.f32.mrf.mxu0
        %v4238 = vadd.f32 0.0, %v4237
        %4239 = vmatmul.f32.gmra.mxu0 %v3886
        %v4240 = vpop.f32.mrf.mxu0
        %v4241 = vadd.f32 0.0, %v4240
        %4242 = vmatmul.f32.gmra.mxu0 %v3888
        %v4243 = vpop.f32.mrf.mxu0
        %v4244 = vadd.f32 0.0, %v4243
        %4245 = vmatmul.f32.gmra.mxu0 %v3890
        %v4246 = vpop.f32.mrf.mxu0
        %v4247 = vadd.f32 0.0, %v4246
        %4248 = vmatmul.f32.gmra.mxu0 %v3892
        %v4249 = vpop.f32.mrf.mxu0
        %v4250 = vadd.f32 0.0, %v4249
        %4251 = vmatmul.f32.gmra.mxu0 %v3894
        %v4252 = vpop.f32.mrf.mxu0
        %v4253 = vadd.f32 0.0, %v4252
        %4254 = vmatmul.f32.gmra.mxu0 %v3896
        %v4255 = vpop.f32.mrf.mxu0
        %v4256 = vadd.f32 0.0, %v4255
        %4257 = vmatmul.f32.gmra.mxu0 %v3898
        %v4258 = vpop.f32.mrf.mxu0
        %v4259 = vadd.f32 0.0, %v4258
        %4260 = vmatmul.f32.gmra.mxu0 %v3900
        %v4261 = vpop.f32.mrf.mxu0
        %v4262 = vadd.f32 0.0, %v4261
        %4263 = vmatmul.f32.gmra.mxu0 %v3902
        %v4264 = vpop.f32.mrf.mxu0
        %v4265 = vadd.f32 0.0, %v4264
        %4266 = vmatmul.f32.gmra.mxu0 %v3904
        %v4267 = vpop.f32.mrf.mxu0
        %v4268 = vadd.f32 0.0, %v4267
        %4269 = vmatmul.f32.gmra.mxu0 %v3906
        %v4270 = vpop.f32.mrf.mxu0
        %v4271 = vadd.f32 0.0, %v4270
        %4272 = vmatmul.f32.gmra.mxu0 %v3908
        %v4273 = vpop.f32.mrf.mxu0
        %v4274 = vadd.f32 0.0, %v4273
        %4275 = vmatmul.f32.gmra.mxu0 %v3910
        %v4276 = vpop.f32.mrf.mxu0
        %v4277 = vadd.f32 0.0, %v4276
        %4278 = vmatmul.f32.gmra.mxu0 %v3912
        %v4279 = vpop.f32.mrf.mxu0
        %v4280 = vadd.f32 0.0, %v4279
        %4281 = vmatmul.f32.gmra.mxu0 %v3914
        %v4282 = vpop.f32.mrf.mxu0
        %v4283 = vadd.f32 0.0, %v4282
        %4284 = vmatmul.f32.gmra.mxu0 %v3916
        %v4285 = vpop.f32.mrf.mxu0
        %v4286 = vadd.f32 0.0, %v4285
        %4287 = vmatmul.f32.gmra.mxu0 %v3918
        %v4288 = vpop.f32.mrf.mxu0
        %v4289 = vadd.f32 0.0, %v4288
        %4290 = vmatmul.f32.gmra.mxu0 %v3920
        %v4291 = vpop.f32.mrf.mxu0
        %v4292 = vadd.f32 0.0, %v4291
        %4293 = vmatmul.f32.gmra.mxu0 %v3922
        %v4294 = vpop.f32.mrf.mxu0
        %v4295 = vadd.f32 0.0, %v4294
        %4296 = vmatmul.f32.gmra.mxu0 %v3924
        %v4297 = vpop.f32.mrf.mxu0
        %v4298 = vadd.f32 0.0, %v4297
        %4299 = vmatmul.f32.gmra.mxu0 %v3926
        %v4300 = vpop.f32.mrf.mxu0
        %v4301 = vadd.f32 0.0, %v4300
        %4302 = vmatmul.f32.gmra.mxu0 %v3928
        %v4303 = vpop.f32.mrf.mxu0
        %v4304 = vadd.f32 0.0, %v4303
        %4305 = vmatmul.f32.gmra.mxu0 %v3930
        %v4306 = vpop.f32.mrf.mxu0
        %v4307 = vadd.f32 0.0, %v4306
        %4308 = vmatmul.f32.gmra.mxu0 %v3932
        %v4309 = vpop.f32.mrf.mxu0
        %v4310 = vadd.f32 0.0, %v4309
        %4311 = vmatmul.f32.gmra.mxu0 %v3934
        %v4312 = vpop.f32.mrf.mxu0
        %v4313 = vadd.f32 0.0, %v4312
        %4314 = vmatmul.f32.gmra.mxu0 %v3936
        %v4315 = vpop.f32.mrf.mxu0
        %v4316 = vadd.f32 0.0, %v4315
        %4317 = vmatmul.f32.gmra.mxu0 %v3938
        %v4318 = vpop.f32.mrf.mxu0
        %v4319 = vadd.f32 0.0, %v4318
        %4320 = vmatmul.f32.gmra.mxu0 %v3940
        %v4321 = vpop.f32.mrf.mxu0
        %v4322 = vadd.f32 0.0, %v4321
        %4323 = vmatmul.f32.gmra.mxu0 %v3942
        %v4324 = vpop.f32.mrf.mxu0
        %v4325 = vadd.f32 0.0, %v4324
        %4326 = vmatmul.f32.gmra.mxu0 %v3944
        %v4327 = vpop.f32.mrf.mxu0
        %v4328 = vadd.f32 0.0, %v4327
        %4329 = vmatmul.f32.gmra.mxu0 %v3946
        %v4330 = vpop.f32.mrf.mxu0
        %v4331 = vadd.f32 0.0, %v4330
        %4332 = vmatmul.f32.gmra.mxu0 %v3948
        %v4333 = vpop.f32.mrf.mxu0
        %v4334 = vadd.f32 0.0, %v4333
        %4335 = vmatmul.f32.gmra.mxu0 %v3950
        %v4336 = vpop.f32.mrf.mxu0
        %v4337 = vadd.f32 0.0, %v4336
        %4338 = vmatmul.f32.gmra.mxu0 %v3952
        %v4339 = vpop.f32.mrf.mxu0
        %v4340 = vadd.f32 0.0, %v4339
        %4341 = vmatmul.f32.gmra.mxu0 %v3954
        %v4342 = vpop.f32.mrf.mxu0
        %v4343 = vadd.f32 0.0, %v4342
        %4344 = vmatmul.f32.gmra.mxu0 %v3956
        %v4345 = vpop.f32.mrf.mxu0
        %v4346 = vadd.f32 0.0, %v4345
        %4347 = vmatmul.f32.gmra.mxu0 %v3958
        %v4348 = vpop.f32.mrf.mxu0
        %v4349 = vadd.f32 0.0, %v4348
        %4350 = vmatmul.f32.gmra.mxu0 %v3960
        %v4351 = vpop.f32.mrf.mxu0
        %v4352 = vadd.f32 0.0, %v4351
        %4353 = vmatmul.f32.gmra.mxu0 %v3962
        %v4354 = vpop.f32.mrf.mxu0
        %v4355 = vadd.f32 0.0, %v4354
        %4356 = vmatmul.f32.gmra.mxu0 %v3964
        %v4357 = vpop.f32.mrf.mxu0
        %v4358 = vadd.f32 0.0, %v4357
        %4359 = vmatmul.f32.gmra.mxu0 %v3966
        %v4360 = vpop.f32.mrf.mxu0
        %v4361 = vadd.f32 0.0, %v4360
        %4362 = vmatmul.f32.gmra.mxu0 %v3968
        %v4363 = vpop.f32.mrf.mxu0
        %v4364 = vadd.f32 0.0, %v4363
        %4365 = vmatmul.f32.gmra.mxu0 %v3970
        %v4366 = vpop.f32.mrf.mxu0
        %v4367 = vadd.f32 0.0, %v4366
        %4368 = vmatmul.f32.gmra.mxu0 %v3972
        %v4369 = vpop.f32.mrf.mxu0
        %v4370 = vadd.f32 0.0, %v4369
        %4371 = vmatmul.f32.gmra.mxu0 %v3974
        %v4372 = vpop.f32.mrf.mxu0
        %v4373 = vadd.f32 0.0, %v4372
        %4374 = vmatmul.f32.gmra.mxu0 %v3976
        %v4375 = vpop.f32.mrf.mxu0
        %v4376 = vadd.f32 0.0, %v4375
        %4377 = vmatmul.f32.gmra.mxu0 %v3978
        %v4378 = vpop.f32.mrf.mxu0
        %v4379 = vadd.f32 0.0, %v4378
        %4380 = vmatmul.f32.gmra.mxu0 %v3980
        %v4381 = vpop.f32.mrf.mxu0
        %v4382 = vadd.f32 0.0, %v4381
        %4383 = vmatmul.f32.gmra.mxu0 %v3982
        %v4384 = vpop.f32.mrf.mxu0
        %v4385 = vadd.f32 0.0, %v4384
        %4386 = vmatmul.f32.gmra.mxu0 %v3984
        %v4387 = vpop.f32.mrf.mxu0
        %v4388 = vadd.f32 0.0, %v4387
        %4389 = vmatmul.f32.gmra.mxu0 %v3986
        %v4390 = vpop.f32.mrf.mxu0
        %v4391 = vadd.f32 0.0, %v4390
        %4392 = vdwg.mxu0
        %v4393 = vmul.f32 %v3092, %v4010
        %v4394 = vmul.f32 %v3095, %v4013
        %v4395 = vmul.f32 %v3098, %v4016
        %v4396 = vmul.f32 %v3101, %v4019
        %v4397 = vmul.f32 %v3104, %v4022
        %v4398 = vmul.f32 %v3107, %v4025
        %v4399 = vmul.f32 %v3110, %v4028
        %v4400 = vmul.f32 %v3113, %v4031
        %v4401 = vmul.f32 %v3116, %v4034
        %v4402 = vmul.f32 %v3119, %v4037
        %v4403 = vmul.f32 %v3122, %v4040
        %v4404 = vmul.f32 %v3125, %v4043
        %v4405 = vmul.f32 %v3128, %v4046
        %v4406 = vmul.f32 %v3131, %v4049
        %v4407 = vmul.f32 %v3134, %v4052
        %v4408 = vmul.f32 %v3137, %v4055
        %v4409 = vmul.f32 %v3140, %v4058
        %v4410 = vmul.f32 %v3143, %v4061
        %v4411 = vmul.f32 %v3146, %v4064
        %v4412 = vmul.f32 %v3149, %v4067
        %v4413 = vmul.f32 %v3152, %v4070
        %v4414 = vmul.f32 %v3155, %v4073
        %v4415 = vmul.f32 %v3158, %v4076
        %v4416 = vmul.f32 %v3161, %v4079
        %v4417 = vmul.f32 %v3164, %v4082
        %v4418 = vmul.f32 %v3167, %v4085
        %v4419 = vmul.f32 %v3170, %v4088
        %v4420 = vmul.f32 %v3173, %v4091
        %v4421 = vmul.f32 %v3176, %v4094
        %v4422 = vmul.f32 %v3179, %v4097
        %v4423 = vmul.f32 %v3182, %v4100
        %v4424 = vmul.f32 %v3185, %v4103
        %v4425 = vmul.f32 %v3188, %v4106
        %v4426 = vmul.f32 %v3191, %v4109
        %v4427 = vmul.f32 %v3194, %v4112
        %v4428 = vmul.f32 %v3197, %v4115
        %v4429 = vmul.f32 %v3200, %v4118
        %v4430 = vmul.f32 %v3203, %v4121
        %v4431 = vmul.f32 %v3206, %v4124
        %v4432 = vmul.f32 %v3209, %v4127
        %v4433 = vmul.f32 %v3212, %v4130
        %v4434 = vmul.f32 %v3215, %v4133
        %v4435 = vmul.f32 %v3218, %v4136
        %v4436 = vmul.f32 %v3221, %v4139
        %v4437 = vmul.f32 %v3224, %v4142
        %v4438 = vmul.f32 %v3227, %v4145
        %v4439 = vmul.f32 %v3230, %v4148
        %v4440 = vmul.f32 %v3233, %v4151
        %v4441 = vmul.f32 %v3236, %v4154
        %v4442 = vmul.f32 %v3239, %v4157
        %v4443 = vmul.f32 %v3242, %v4160
        %v4444 = vmul.f32 %v3245, %v4163
        %v4445 = vmul.f32 %v3248, %v4166
        %v4446 = vmul.f32 %v3251, %v4169
        %v4447 = vmul.f32 %v3254, %v4172
        %v4448 = vmul.f32 %v3257, %v4175
        %v4449 = vmul.f32 %v3260, %v4178
        %v4450 = vmul.f32 %v3263, %v4181
        %v4451 = vmul.f32 %v3266, %v4184
        %v4452 = vmul.f32 %v3269, %v4187
        %v4453 = vmul.f32 %v3272, %v4190
        %v4454 = vmul.f32 %v3275, %v4193
        %v4455 = vmul.f32 %v3278, %v4196
        %v4456 = vmul.f32 %v3281, %v4199
        %v4457 = vmul.f32 %v3284, %v4202
        %v4458 = vmul.f32 %v3287, %v4205
        %v4459 = vmul.f32 %v3290, %v4208
        %v4460 = vmul.f32 %v3293, %v4211
        %v4461 = vmul.f32 %v3296, %v4214
        %v4462 = vmul.f32 %v3299, %v4217
        %v4463 = vmul.f32 %v3302, %v4220
        %v4464 = vmul.f32 %v3305, %v4223
        %v4465 = vmul.f32 %v3308, %v4226
        %v4466 = vmul.f32 %v3311, %v4229
        %v4467 = vmul.f32 %v3314, %v4232
        %v4468 = vmul.f32 %v3317, %v4235
        %v4469 = vmul.f32 %v3320, %v4238
        %v4470 = vmul.f32 %v3323, %v4241
        %v4471 = vmul.f32 %v3326, %v4244
        %v4472 = vmul.f32 %v3329, %v4247
        %v4473 = vmul.f32 %v3332, %v4250
        %v4474 = vmul.f32 %v3335, %v4253
        %v4475 = vmul.f32 %v3338, %v4256
        %v4476 = vmul.f32 %v3341, %v4259
        %v4477 = vmul.f32 %v3344, %v4262
        %v4478 = vmul.f32 %v3347, %v4265
        %v4479 = vmul.f32 %v3350, %v4268
        %v4480 = vmul.f32 %v3353, %v4271
        %v4481 = vmul.f32 %v3356, %v4274
        %v4482 = vmul.f32 %v3359, %v4277
        %v4483 = vmul.f32 %v3362, %v4280
        %v4484 = vmul.f32 %v3365, %v4283
        %v4485 = vmul.f32 %v3368, %v4286
        %v4486 = vmul.f32 %v3371, %v4289
        %v4487 = vmul.f32 %v3374, %v4292
        %v4488 = vmul.f32 %v3377, %v4295
        %v4489 = vmul.f32 %v3380, %v4298
        %v4490 = vmul.f32 %v3383, %v4301
        %v4491 = vmul.f32 %v3386, %v4304
        %v4492 = vmul.f32 %v3389, %v4307
        %v4493 = vmul.f32 %v3392, %v4310
        %v4494 = vmul.f32 %v3395, %v4313
        %v4495 = vmul.f32 %v3398, %v4316
        %v4496 = vmul.f32 %v3401, %v4319
        %v4497 = vmul.f32 %v3404, %v4322
        %v4498 = vmul.f32 %v3407, %v4325
        %v4499 = vmul.f32 %v3410, %v4328
        %v4500 = vmul.f32 %v3413, %v4331
        %v4501 = vmul.f32 %v3416, %v4334
        %v4502 = vmul.f32 %v3419, %v4337
        %v4503 = vmul.f32 %v3422, %v4340
        %v4504 = vmul.f32 %v3425, %v4343
        %v4505 = vmul.f32 %v3428, %v4346
        %v4506 = vmul.f32 %v3431, %v4349
        %v4507 = vmul.f32 %v3434, %v4352
        %v4508 = vmul.f32 %v3437, %v4355
        %v4509 = vmul.f32 %v3440, %v4358
        %v4510 = vmul.f32 %v3443, %v4361
        %v4511 = vmul.f32 %v3446, %v4364
        %v4512 = vmul.f32 %v3449, %v4367
        %v4513 = vmul.f32 %v3452, %v4370
        %v4514 = vmul.f32 %v3455, %v4373
        %v4515 = vmul.f32 %v3458, %v4376
        %v4516 = vmul.f32 %v3461, %v4379
        %v4517 = vmul.f32 %v3464, %v4382
        %v4518 = vmul.f32 %v3467, %v4385
        %v4519 = vmul.f32 %v3470, %v4388
        %v4520 = vmul.f32 %v3473, %v4391
        %v4521 = vadd.f32 %v4393, %v4409
        %v4522 = vadd.f32 %v4394, %v4410
        %v4523 = vadd.f32 %v4395, %v4411
        %v4524 = vadd.f32 %v4396, %v4412
        %v4525 = vadd.f32 %v4397, %v4413
        %v4526 = vadd.f32 %v4398, %v4414
        %v4527 = vadd.f32 %v4399, %v4415
        %v4528 = vadd.f32 %v4400, %v4416
        %v4529 = vadd.f32 %v4401, %v4417
        %v4530 = vadd.f32 %v4402, %v4418
        %v4531 = vadd.f32 %v4403, %v4419
        %v4532 = vadd.f32 %v4404, %v4420
        %v4533 = vadd.f32 %v4405, %v4421
        %v4534 = vadd.f32 %v4406, %v4422
        %v4535 = vadd.f32 %v4407, %v4423
        %v4536 = vadd.f32 %v4408, %v4424
        %v4537 = vadd.f32 %v4521, %v4425
        %v4538 = vadd.f32 %v4522, %v4426
        %v4539 = vadd.f32 %v4523, %v4427
        %v4540 = vadd.f32 %v4524, %v4428
        %v4541 = vadd.f32 %v4525, %v4429
        %v4542 = vadd.f32 %v4526, %v4430
        %v4543 = vadd.f32 %v4527, %v4431
        %v4544 = vadd.f32 %v4528, %v4432
        %v4545 = vadd.f32 %v4529, %v4433
        %v4546 = vadd.f32 %v4530, %v4434
        %v4547 = vadd.f32 %v4531, %v4435
        %v4548 = vadd.f32 %v4532, %v4436
        %v4549 = vadd.f32 %v4533, %v4437
        %v4550 = vadd.f32 %v4534, %v4438
        %v4551 = vadd.f32 %v4535, %v4439
        %v4552 = vadd.f32 %v4536, %v4440
        %v4553 = vadd.f32 %v4537, %v4441
        %v4554 = vadd.f32 %v4538, %v4442
        %v4555 = vadd.f32 %v4539, %v4443
        %v4556 = vadd.f32 %v4540, %v4444
        %v4557 = vadd.f32 %v4541, %v4445
        %v4558 = vadd.f32 %v4542, %v4446
        %v4559 = vadd.f32 %v4543, %v4447
        %v4560 = vadd.f32 %v4544, %v4448
        %v4561 = vadd.f32 %v4545, %v4449
        %v4562 = vadd.f32 %v4546, %v4450
        %v4563 = vadd.f32 %v4547, %v4451
        %v4564 = vadd.f32 %v4548, %v4452
        %v4565 = vadd.f32 %v4549, %v4453
        %v4566 = vadd.f32 %v4550, %v4454
        %v4567 = vadd.f32 %v4551, %v4455
        %v4568 = vadd.f32 %v4552, %v4456
        %v4569 = vadd.f32 %v4553, %v4457
        %v4570 = vadd.f32 %v4554, %v4458
        %v4571 = vadd.f32 %v4555, %v4459
        %v4572 = vadd.f32 %v4556, %v4460
        %v4573 = vadd.f32 %v4557, %v4461
        %v4574 = vadd.f32 %v4558, %v4462
        %v4575 = vadd.f32 %v4559, %v4463
        %v4576 = vadd.f32 %v4560, %v4464
        %v4577 = vadd.f32 %v4561, %v4465
        %v4578 = vadd.f32 %v4562, %v4466
        %v4579 = vadd.f32 %v4563, %v4467
        %v4580 = vadd.f32 %v4564, %v4468
        %v4581 = vadd.f32 %v4565, %v4469
        %v4582 = vadd.f32 %v4566, %v4470
        %v4583 = vadd.f32 %v4567, %v4471
        %v4584 = vadd.f32 %v4568, %v4472
        %v4585 = vadd.f32 %v4569, %v4473
        %v4586 = vadd.f32 %v4570, %v4474
        %v4587 = vadd.f32 %v4571, %v4475
        %v4588 = vadd.f32 %v4572, %v4476
        %v4589 = vadd.f32 %v4573, %v4477
        %v4590 = vadd.f32 %v4574, %v4478
        %v4591 = vadd.f32 %v4575, %v4479
        %v4592 = vadd.f32 %v4576, %v4480
        %v4593 = vadd.f32 %v4577, %v4481
        %v4594 = vadd.f32 %v4578, %v4482
        %v4595 = vadd.f32 %v4579, %v4483
        %v4596 = vadd.f32 %v4580, %v4484
        %v4597 = vadd.f32 %v4581, %v4485
        %v4598 = vadd.f32 %v4582, %v4486
        %v4599 = vadd.f32 %v4583, %v4487
        %v4600 = vadd.f32 %v4584, %v4488
        %v4601 = vadd.f32 %v4585, %v4489
        %v4602 = vadd.f32 %v4586, %v4490
        %v4603 = vadd.f32 %v4587, %v4491
        %v4604 = vadd.f32 %v4588, %v4492
        %v4605 = vadd.f32 %v4589, %v4493
        %v4606 = vadd.f32 %v4590, %v4494
        %v4607 = vadd.f32 %v4591, %v4495
        %v4608 = vadd.f32 %v4592, %v4496
        %v4609 = vadd.f32 %v4593, %v4497
        %v4610 = vadd.f32 %v4594, %v4498
        %v4611 = vadd.f32 %v4595, %v4499
        %v4612 = vadd.f32 %v4596, %v4500
        %v4613 = vadd.f32 %v4597, %v4501
        %v4614 = vadd.f32 %v4598, %v4502
        %v4615 = vadd.f32 %v4599, %v4503
        %v4616 = vadd.f32 %v4600, %v4504
        %v4617 = vadd.f32 %v4601, %v4505
        %v4618 = vadd.f32 %v4602, %v4506
        %v4619 = vadd.f32 %v4603, %v4507
        %v4620 = vadd.f32 %v4604, %v4508
        %v4621 = vadd.f32 %v4605, %v4509
        %v4622 = vadd.f32 %v4606, %v4510
        %v4623 = vadd.f32 %v4607, %v4511
        %v4624 = vadd.f32 %v4608, %v4512
        %v4625 = vadd.f32 %v4609, %v4513
        %v4626 = vadd.f32 %v4610, %v4514
        %v4627 = vadd.f32 %v4611, %v4515
        %v4628 = vadd.f32 %v4612, %v4516
        %v4629 = vadd.f32 %v4613, %v4517
        %v4630 = vadd.f32 %v4614, %v4518
        %v4631 = vadd.f32 %v4615, %v4519
        %v4632 = vadd.f32 %v4616, %v4520
        %vm4633 = vcmask 261120
        %4634 = vst.msk [vmem:[%s715] sm:$0xff] %vm4633, %v4617
        %4635 = vst.msk [vmem:[%s715 + $0x8] sm:$0xff] %vm4633, %v4618
        %4636 = vst.msk [vmem:[%s715 + $0x10] sm:$0xff] %vm4633, %v4619
        %4637 = vst.msk [vmem:[%s715 + $0x18] sm:$0xff] %vm4633, %v4620
        %4638 = vst.msk [vmem:[%s715 + $0x20] sm:$0xff] %vm4633, %v4621
        %4639 = vst.msk [vmem:[%s715 + $0x28] sm:$0xff] %vm4633, %v4622
        %4640 = vst.msk [vmem:[%s715 + $0x30] sm:$0xff] %vm4633, %v4623
        %4641 = vst.msk [vmem:[%s715 + $0x38] sm:$0xff] %vm4633, %v4624
        %4642 = vst.msk [vmem:[%s715 + $0x40] sm:$0xff] %vm4633, %v4625
        %4643 = vst.msk [vmem:[%s715 + $0x48] sm:$0xff] %vm4633, %v4626
        %4644 = vst.msk [vmem:[%s715 + $0x50] sm:$0xff] %vm4633, %v4627
        %4645 = vst.msk [vmem:[%s715 + $0x58] sm:$0xff] %vm4633, %v4628
        %4646 = vst.msk [vmem:[%s715 + $0x60] sm:$0xff] %vm4633, %v4629
        %4647 = vst.msk [vmem:[%s715 + $0x68] sm:$0xff] %vm4633, %v4630
        %4648 = vst.msk [vmem:[%s715 + $0x70] sm:$0xff] %vm4633, %v4631
        %4649 = vst.msk [vmem:[%s715 + $0x78] sm:$0xff] %vm4633, %v4632
        %s4650 = smul.u32 16, %s14
        %p4651 = scmp.lt.s32.totalorder %s4650, 31
        %s4652 = scalar_select %p4651, %s4650, 31
        %s4653 = smul.addr %s4652, 8
        %s4654 = scalar_lea.vmem %s3, %s4653
        // Predicated region
        $region71: #{tpu_custom_call.1} parent=65 // pred_check
          %p4655 = pneg %p100
        $region72: #{tpu_custom_call.1} parent=65 // pred_check_branch
          %4657 = sbr.rel (%p4655) target = $region74
        $region73: #{tpu_custom_call.1} parent=65 // pred_region
          %s4658 = smul.u32 16, %s14
        $region74: #{tpu_custom_call.1} parent=65 // pred_fallthru
          _
      $region66: #{tpu_custom_call.1} parent=5 // pred_fallthru
        _
      %p4659 = scmp.le.s32.totalorder 2, %s9
      // Predicated region
      $region75: #{tpu_custom_call.1} parent=5 // pred_check
        %p4660 = pneg %p4659
      $region76: #{tpu_custom_call.1} parent=5 // pred_check_branch
        %4662 = sbr.rel (%p4660) target = $region78
      $region77: #{tpu_custom_call.1} parent=5 // pred_region
        %s4663 = ssub.s32 %s9, 2
        // Predicated region
        $region79: #{tpu_custom_call.1} parent=77 // pred_check
          %p4664 = pneg %p106
        $region80: #{tpu_custom_call.1} parent=77 // pred_check_branch
          %4666 = sbr.rel (%p4664) target = $region82
        $region81: #{tpu_custom_call.1} parent=77 // pred_region
          %s4667 = smul.u32 16, %s15
          %p4668 = scmp.lt.s32.totalorder %s4667, 31
          %s4669 = scalar_select %p4668, %s4667, 31
          %s4670 = smul.addr %s4669, 8
          %s4671 = scalar_lea.vmem %s3, %s4670
        $region82: #{tpu_custom_call.1} parent=77 // pred_fallthru
          _
      $region78: #{tpu_custom_call.1} parent=5 // pred_fallthru
        _
    $region6: #{tpu_custom_call.1} parent=1 // loop_footer
      %s13 = sadd.s32 1, %s9
    $region7: #{tpu_custom_call.1} parent=1 // loop_footer_branch
      %8 = sbr.rel target = $region3
    $region8: #{tpu_custom_call.1} parent=1 // loop_exit
      _

</llo_original>
